<compile_context>
chip_gen: v5e
topology: v5e:2x2
jax: 0.10.0
libtpu: 0.0.40
codegen_flags: <defaults>
</compile_context>

<pallas_src>
import jax
import jax.numpy as jnp
from jax.experimental import pallas as pl
from jax.experimental.pallas import tpu as pltpu


# ---------------------------------------------------------------------------
# Fused Pallas kernel
# ---------------------------------------------------------------------------
def _net_kernel(x_ref, c1m_ref, c1b_ref, c2m_ref, c2b_ref,
                fg_ref, fb1_ref, w2t_ref, fb2_ref, o_ref):
    tb = x_ref.shape[1]                       # batch tile (multiple of 8)
    xv = x_ref[...]                           # (28, TB, 28) = (H, b, W), f32

    # --- conv1 as 5 banded matmuls (one per kernel row) + bias --------------
    # rows  : oh * TB + b,   oh in [0, 24)
    # lanes : ow * 10 + oc,  ow in [0, 24), oc in [0, 10)     (lane-dense 240)
    y1 = c1b_ref[...]                                            # (1, 240)
    for ki in range(5):
        lhs = xv[ki:ki + 24].reshape(24 * tb, 28).astype(jnp.bfloat16)
        y1 = y1 + jnp.dot(lhs, c1m_ref[ki],
                          preferred_element_type=jnp.float32)    # (24*TB, 240)

    # --- 2x2 max-pool + ReLU -------------------------------------------------
    # W: pair ow = {2*pw, 2*pw+1} -> pooled value lands at lane 20*pw + oc;
    #    the interleaved stale lanes are ignored (zero rows) by conv2's band
    #    matrix, so no compaction is required.
    y1 = jnp.maximum(y1[:, :230], y1[:, 10:])                    # (24*TB, 230)
    # H: pair oh = {2*ph, 2*ph+1} via layout-trivial reshapes (TB % 8 == 0).
    y1 = y1.reshape(24, tb, 230).reshape(12, 2, tb, 230)
    h1 = jnp.maximum(jnp.maximum(y1[:, 0], y1[:, 1]), 0.0)       # (12, TB, 230)

    # --- conv2 as 5 banded matmuls + bias ------------------------------------
    # lanes : ow2 * 20 + oc2,  ow2 in [0, 8), oc2 in [0, 20)   (lane-dense 160)
    y2 = c2b_ref[...]                                            # (1, 160)
    for ki in range(5):
        lhs = h1[ki:ki + 8].reshape(8 * tb, 230).astype(jnp.bfloat16)
        y2 = y2 + jnp.dot(lhs, c2m_ref[ki],
                          preferred_element_type=jnp.float32)    # (8*TB, 160)

    # --- 2x2 max-pool + ReLU -------------------------------------------------
    y2 = jnp.maximum(y2[:, :140], y2[:, 20:])                    # (8*TB, 140)
    y2 = y2.reshape(8, tb, 140).reshape(4, 2, tb, 140)
    h2 = jnp.maximum(jnp.maximum(y2[:, 0], y2[:, 1]), 0.0)       # (4, TB, 140)

    # --- fc1 + ReLU (PyTorch's NCHW view(-1, 320) is folded into fg_ref) -----
    z1 = fb1_ref[...]                                            # (1, 50)
    for h in range(4):
        z1 = z1 + jnp.dot(h2[h], fg_ref[h],
                          preferred_element_type=jnp.float32)    # (TB, 50)
    z1 = jnp.maximum(z1, 0.0)
    # TODO(synk): Dropout2d / F.dropout(training=True) not applied (inference).

    # --- fc2 + log_softmax ----------------------------------------------------
    z2 = jnp.dot(z1, w2t_ref[...],
                 preferred_element_type=jnp.float32) + fb2_ref[...]  # (TB, 10)
    m = jnp.max(z2, axis=1, keepdims=True)
    lse = jnp.log(jnp.sum(jnp.exp(z2 - m), axis=1, keepdims=True)) + m
    o_ref[...] = z2 - lse


# ---------------------------------------------------------------------------
# Weight re-packing (runs once per call in the wrapper, pure XLA, tiny)
# ---------------------------------------------------------------------------
def _pack_conv1(w, b):
    """(10,1,5,5),(10,) -> band matrices (5,28,240) bf16 + lane bias (1,240)."""
    wcol = jnp.arange(28)
    ow = jnp.arange(24)
    m = jnp.zeros((5, 28, 24, 10), jnp.float32)
    for kj in range(5):
        sel = (wcol[:, None] == ow[None, :] + kj).astype(jnp.float32)   # (28,24)
        m = m + jnp.einsum("vw,ko->kvwo", sel,
                           w[:, 0, :, kj].T.astype(jnp.float32))        # (ki,oc)
    return (m.reshape(5, 28, 240).astype(jnp.bfloat16),
            jnp.tile(b.astype(jnp.float32), 24).reshape(1, 240))


def _pack_conv2(w, b):
    """(20,10,5,5),(20,) -> band matrices (5,230,160) bf16 + lane bias (1,160)."""
    pw = jnp.arange(12)
    ow2 = jnp.arange(8)
    m = jnp.zeros((5, 12, 20, 8, 20), jnp.float32)
    for kj in range(5):
        sel = (pw[:, None] == ow2[None, :] + kj).astype(jnp.float32)    # (12,8)
        wp = jnp.transpose(w[:, :, :, kj], (2, 1, 0)).astype(jnp.float32)  # (ki,c,oc)
        wp = jnp.pad(wp, ((0, 0), (0, 10), (0, 0)))   # zero rows at stale lane slots
        m = m + jnp.einsum("pw,kco->kpcwo", sel, wp)
    m = m.reshape(5, 240, 160)[:, :230, :]
    return (m.astype(jnp.bfloat16),
            jnp.tile(b.astype(jnp.float32), 8).reshape(1, 160))


def _pack_fc1(w, b):
    """(50,320),(50,) -> per-pooled-row matrices (4,140,50) matching h2 lanes."""
    g = jnp.transpose(w.astype(jnp.float32).reshape(50, 20, 4, 4),
                      (2, 3, 1, 0))                               # (h, w, c, j)
    g = jnp.pad(g, ((0, 0), (0, 0), (0, 20), (0, 0)))  # zero rows at stale slots
    g = g.reshape(4, 160, 50)[:, :140, :]
    return g, b.astype(jnp.float32).reshape(1, 50)


def _round_up(n, m):
    return ((n + m - 1) // m) * m


# ---------------------------------------------------------------------------
# Forward pass wrapper
# ---------------------------------------------------------------------------
def net_forward(x_nchw, params):
    bsz = x_nchw.shape[0]
    assert x_nchw.shape[1:] == (1, 28, 28), "Net expects 1x28x28 inputs (fc1 is 320 wide)"

    # (B,1,28,28) NCHW -> (28, B, 28) = (H, batch, W): batch lives in the
    # sublane dim so every in-kernel H operation is a cheap leading-dim op.
    x = jnp.transpose(x_nchw.astype(jnp.float32).reshape(bsz, 28, 28), (1, 0, 2))

    tile_b = min(32, _round_up(bsz, 8))
    bp = _round_up(bsz, tile_b)
    if bp != bsz:
        x = jnp.pad(x, ((0, 0), (0, bp - bsz), (0, 0)))

    c1m, c1b = _pack_conv1(params["conv1_w"], params["conv1_b"])
    c2m, c2b = _pack_conv2(params["conv2_w"], params["conv2_b"])
    fg, fb1 = _pack_fc1(params["fc1_w"], params["fc1_b"])
    w2t = params["fc2_w"].T.astype(jnp.float32)                   # (50, 10)
    fb2 = params["fc2_b"].astype(jnp.float32).reshape(1, 10)

    def _resident(shape):                     # weights: same block every step
        zero = (0,) * len(shape)
        return pl.BlockSpec(shape, lambda i, _z=zero: _z)

    out = pl.pallas_call(
        _net_kernel,
        out_shape=jax.ShapeDtypeStruct((bp, 10), jnp.float32),
        grid=(bp // tile_b,),
        in_specs=[
            pl.BlockSpec((28, tile_b, 28), lambda i: (0, i, 0)),  # image tile
            _resident((5, 28, 240)),     # conv1 band matrices (bf16)
            _resident((1, 240)),         # conv1 bias tiled over ow
            _resident((5, 230, 160)),    # conv2 band matrices (bf16)
            _resident((1, 160)),         # conv2 bias tiled over ow2
            _resident((4, 140, 50)),     # fc1 weight, re-laid-out per pooled row
            _resident((1, 50)),          # fc1 bias
            _resident((50, 10)),         # fc2 weight (transposed)
            _resident((1, 10)),          # fc2 bias
        ],
        out_specs=pl.BlockSpec((tile_b, 10), lambda i: (i, 0)),
        compiler_params=pltpu.CompilerParams(
            dimension_semantics=("parallel",)),
    )(x, c1m, c1b, c2m, c2b, fg, fb1, w2t, fb2)

    return out[:bsz]                          # (B, 10) log-probabilities


# ---------------------------------------------------------------------------
# Pure-JAX reference (only used for the self-check in __main__)
# ---------------------------------------------------------------------------
def _reference_forward(x_nchw, params):
    def conv(x, w, b):
        y = jax.lax.conv_general_dilated(
            x, w, window_strides=(1, 1), padding="VALID",
            dimension_numbers=("NCHW", "OIHW", "NCHW"))
        return y + b[None, :, None, None]

    def pool(x):
        return jax.lax.reduce_window(x, -jnp.inf, jax.lax.max,
                                     (1, 1, 2, 2), (1, 1, 2, 2), "VALID")

    x = x_nchw.astype(jnp.float32)
    h = jax.nn.relu(pool(conv(x, params["conv1_w"], params["conv1_b"])))
    h = jax.nn.relu(pool(conv(h, params["conv2_w"], params["conv2_b"])))
    h = h.reshape(h.shape[0], -1)                                 # NCHW flatten
    h = jax.nn.relu(h @ params["fc1_w"].T + params["fc1_b"])
    z = h @ params["fc2_w"].T + params["fc2_b"]
    return jax.nn.log_softmax(z, axis=1)


def init_params(key):
    ks = jax.random.split(key, 8)
    scale = 0.1
    return {
        "conv1_w": scale * jax.random.normal(ks[0], (10, 1, 5, 5), jnp.float32),
        "conv1_b": scale * jax.random.normal(ks[1], (10,), jnp.float32),
        "conv2_w": scale * jax.random.normal(ks[2], (20, 10, 5, 5), jnp.float32),
        "conv2_b": scale * jax.random.normal(ks[3], (20,), jnp.float32),
        "fc1_w": scale * jax.random.normal(ks[4], (50, 320), jnp.float32),
        "fc1_b": scale * jax.random.normal(ks[5], (50,), jnp.float32),
        "fc2_w": scale * jax.random.normal(ks[6], (10, 50), jnp.float32),
        "fc2_b": scale * jax.random.normal(ks[7], (10,), jnp.float32),
    }


if __name__ == "__main__":
    key = jax.random.PRNGKey(0)
    k_param, k_x = jax.random.split(key)
    params = init_params(k_param)

    # MNIST-shaped input (required so the flattened conv output is 320 wide).
    x = jax.random.normal(k_x, (2, 1, 28, 28), jnp.float32)

    fwd = jax.jit(net_forward)
    log_probs = fwd(x, params)
    jax.block_until_ready(log_probs)

    assert log_probs.shape == (2, 10)
    assert log_probs.dtype == jnp.float32
    # log_softmax rows must sum to 1 in probability space.
    assert jnp.allclose(jnp.sum(jnp.exp(log_probs), axis=1), 1.0, atol=1e-4)
    # Self-check against a pure-XLA reference (loose atol: bf16 conv operands).
    ref = _reference_forward(x, params)
    assert jnp.allclose(log_probs, ref, atol=5e-2), float(
        jnp.max(jnp.abs(log_probs - ref)))

    print("KERNEL_OK")
</pallas_src>

<mosaic_0001>
module attributes {stable_mosaic.version = 11 : i64} {
  func.func @_net_kernel(%arg0: i32, %arg1: memref<28x8x28xf32, #tpu.memory_space<vmem>>, %arg2: memref<5x28x240xbf16, #tpu.memory_space<vmem>>, %arg3: memref<1x240xf32, #tpu.memory_space<vmem>>, %arg4: memref<5x230x160xbf16, #tpu.memory_space<vmem>>, %arg5: memref<1x160xf32, #tpu.memory_space<vmem>>, %arg6: memref<4x140x50xf32, #tpu.memory_space<vmem>>, %arg7: memref<1x50xf32, #tpu.memory_space<vmem>>, %arg8: memref<50x10xf32, #tpu.memory_space<vmem>>, %arg9: memref<1x10xf32, #tpu.memory_space<vmem>>, %arg10: memref<8x10xf32, #tpu.memory_space<vmem>>) attributes {dimension_semantics = [#tpu.dimension_semantics<parallel>], iteration_bounds = array<i64: 1>, scalar_prefetch = 0 : i64, scratch_operands = 0 : i64, tpu.core_type = #tpu.core_type<tc>, window_params = [{transform_indices = @transform_0, window_bounds = array<i64: 28, 8, 28>}, {pipeline_mode = #tpu.pipeline_mode<synchronous>, transform_indices = @transform_1, window_bounds = array<i64: 5, 28, 240>}, {pipeline_mode = #tpu.pipeline_mode<synchronous>, transform_indices = @transform_2, window_bounds = array<i64: 1, 240>}, {pipeline_mode = #tpu.pipeline_mode<synchronous>, transform_indices = @transform_3, window_bounds = array<i64: 5, 230, 160>}, {pipeline_mode = #tpu.pipeline_mode<synchronous>, transform_indices = @transform_4, window_bounds = array<i64: 1, 160>}, {pipeline_mode = #tpu.pipeline_mode<synchronous>, transform_indices = @transform_5, window_bounds = array<i64: 4, 140, 50>}, {pipeline_mode = #tpu.pipeline_mode<synchronous>, transform_indices = @transform_6, window_bounds = array<i64: 1, 50>}, {pipeline_mode = #tpu.pipeline_mode<synchronous>, transform_indices = @transform_7, window_bounds = array<i64: 50, 10>}, {pipeline_mode = #tpu.pipeline_mode<synchronous>, transform_indices = @transform_8, window_bounds = array<i64: 1, 10>}, {transform_indices = @transform_9, window_bounds = array<i64: 8, 10>}]} {
    %c0 = arith.constant 0 : index
    %c0_0 = arith.constant 0 : index
    %c0_1 = arith.constant 0 : index
    %0 = vector.load %arg1[%c0, %c0_0, %c0_1] : memref<28x8x28xf32, #tpu.memory_space<vmem>>, vector<28x8x28xf32>
    %c0_2 = arith.constant 0 : index
    %c0_3 = arith.constant 0 : index
    %1 = vector.load %arg3[%c0_2, %c0_3] : memref<1x240xf32, #tpu.memory_space<vmem>>, vector<1x240xf32>
    %2 = vector.extract_strided_slice %0 {offsets = [0, 0, 0], sizes = [24, 8, 28], strides = [1, 1, 1]} : vector<28x8x28xf32> to vector<24x8x28xf32>
    %3 = vector.shape_cast %2 : vector<24x8x28xf32> to vector<192x28xf32>
    %4 = arith.truncf %3 : vector<192x28xf32> to vector<192x28xbf16>
    %c0_4 = arith.constant 0 : index
    %c0_5 = arith.constant 0 : index
    %c0_6 = arith.constant 0 : index
    %5 = vector.load %arg2[%c0_4, %c0_5, %c0_6] : memref<5x28x240xbf16, #tpu.memory_space<vmem>>, vector<1x28x240xbf16>
    %6 = vector.shape_cast %5 : vector<1x28x240xbf16> to vector<28x240xbf16>
    %cst = arith.constant dense<0.000000e+00> : vector<192x240xf32>
    %7 = tpu.matmul %4, %6, %cst {dimension_numbers = #tpu.dot_dimension_numbers<[1], [0], [0], [1], [0, 0, 1, 1], [], []>} : vector<192x28xbf16>, vector<28x240xbf16>, vector<192x240xf32> -> vector<192x240xf32>
    %8 = vector.broadcast %1 : vector<1x240xf32> to vector<192x240xf32>
    %9 = arith.addf %8, %7 : vector<192x240xf32>
    %10 = vector.extract_strided_slice %0 {offsets = [1, 0, 0], sizes = [24, 8, 28], strides = [1, 1, 1]} : vector<28x8x28xf32> to vector<24x8x28xf32>
    %11 = vector.shape_cast %10 : vector<24x8x28xf32> to vector<192x28xf32>
    %12 = arith.truncf %11 : vector<192x28xf32> to vector<192x28xbf16>
    %c1 = arith.constant 1 : index
    %c0_7 = arith.constant 0 : index
    %c0_8 = arith.constant 0 : index
    %13 = vector.load %arg2[%c1, %c0_7, %c0_8] : memref<5x28x240xbf16, #tpu.memory_space<vmem>>, vector<1x28x240xbf16>
    %14 = vector.shape_cast %13 : vector<1x28x240xbf16> to vector<28x240xbf16>
    %cst_9 = arith.constant dense<0.000000e+00> : vector<192x240xf32>
    %15 = tpu.matmul %12, %14, %cst_9 {dimension_numbers = #tpu.dot_dimension_numbers<[1], [0], [0], [1], [0, 0, 1, 1], [], []>} : vector<192x28xbf16>, vector<28x240xbf16>, vector<192x240xf32> -> vector<192x240xf32>
    %16 = arith.addf %9, %15 : vector<192x240xf32>
    %17 = vector.extract_strided_slice %0 {offsets = [2, 0, 0], sizes = [24, 8, 28], strides = [1, 1, 1]} : vector<28x8x28xf32> to vector<24x8x28xf32>
    %18 = vector.shape_cast %17 : vector<24x8x28xf32> to vector<192x28xf32>
    %19 = arith.truncf %18 : vector<192x28xf32> to vector<192x28xbf16>
    %c2 = arith.constant 2 : index
    %c0_10 = arith.constant 0 : index
    %c0_11 = arith.constant 0 : index
    %20 = vector.load %arg2[%c2, %c0_10, %c0_11] : memref<5x28x240xbf16, #tpu.memory_space<vmem>>, vector<1x28x240xbf16>
    %21 = vector.shape_cast %20 : vector<1x28x240xbf16> to vector<28x240xbf16>
    %cst_12 = arith.constant dense<0.000000e+00> : vector<192x240xf32>
    %22 = tpu.matmul %19, %21, %cst_12 {dimension_numbers = #tpu.dot_dimension_numbers<[1], [0], [0], [1], [0, 0, 1, 1], [], []>} : vector<192x28xbf16>, vector<28x240xbf16>, vector<192x240xf32> -> vector<192x240xf32>
    %23 = arith.addf %16, %22 : vector<192x240xf32>
    %24 = vector.extract_strided_slice %0 {offsets = [3, 0, 0], sizes = [24, 8, 28], strides = [1, 1, 1]} : vector<28x8x28xf32> to vector<24x8x28xf32>
    %25 = vector.shape_cast %24 : vector<24x8x28xf32> to vector<192x28xf32>
    %26 = arith.truncf %25 : vector<192x28xf32> to vector<192x28xbf16>
    %c3 = arith.constant 3 : index
    %c0_13 = arith.constant 0 : index
    %c0_14 = arith.constant 0 : index
    %27 = vector.load %arg2[%c3, %c0_13, %c0_14] : memref<5x28x240xbf16, #tpu.memory_space<vmem>>, vector<1x28x240xbf16>
    %28 = vector.shape_cast %27 : vector<1x28x240xbf16> to vector<28x240xbf16>
    %cst_15 = arith.constant dense<0.000000e+00> : vector<192x240xf32>
    %29 = tpu.matmul %26, %28, %cst_15 {dimension_numbers = #tpu.dot_dimension_numbers<[1], [0], [0], [1], [0, 0, 1, 1], [], []>} : vector<192x28xbf16>, vector<28x240xbf16>, vector<192x240xf32> -> vector<192x240xf32>
    %30 = arith.addf %23, %29 : vector<192x240xf32>
    %31 = vector.extract_strided_slice %0 {offsets = [4, 0, 0], sizes = [24, 8, 28], strides = [1, 1, 1]} : vector<28x8x28xf32> to vector<24x8x28xf32>
    %32 = vector.shape_cast %31 : vector<24x8x28xf32> to vector<192x28xf32>
    %33 = arith.truncf %32 : vector<192x28xf32> to vector<192x28xbf16>
    %c4 = arith.constant 4 : index
    %c0_16 = arith.constant 0 : index
    %c0_17 = arith.constant 0 : index
    %34 = vector.load %arg2[%c4, %c0_16, %c0_17] : memref<5x28x240xbf16, #tpu.memory_space<vmem>>, vector<1x28x240xbf16>
    %35 = vector.shape_cast %34 : vector<1x28x240xbf16> to vector<28x240xbf16>
    %cst_18 = arith.constant dense<0.000000e+00> : vector<192x240xf32>
    %36 = tpu.matmul %33, %35, %cst_18 {dimension_numbers = #tpu.dot_dimension_numbers<[1], [0], [0], [1], [0, 0, 1, 1], [], []>} : vector<192x28xbf16>, vector<28x240xbf16>, vector<192x240xf32> -> vector<192x240xf32>
    %37 = arith.addf %30, %36 : vector<192x240xf32>
    %38 = vector.extract_strided_slice %37 {offsets = [0, 0], sizes = [192, 230], strides = [1, 1]} : vector<192x240xf32> to vector<192x230xf32>
    %39 = vector.extract_strided_slice %37 {offsets = [0, 10], sizes = [192, 230], strides = [1, 1]} : vector<192x240xf32> to vector<192x230xf32>
    %40 = arith.maximumf %38, %39 : vector<192x230xf32>
    %41 = vector.shape_cast %40 : vector<192x230xf32> to vector<24x8x230xf32>
    %42 = vector.shape_cast %41 : vector<24x8x230xf32> to vector<12x2x8x230xf32>
    %43 = vector.extract_strided_slice %42 {offsets = [0, 0, 0, 0], sizes = [12, 1, 8, 230], strides = [1, 1, 1, 1]} : vector<12x2x8x230xf32> to vector<12x1x8x230xf32>
    %44 = vector.shape_cast %43 : vector<12x1x8x230xf32> to vector<12x8x230xf32>
    %45 = vector.extract_strided_slice %42 {offsets = [0, 1, 0, 0], sizes = [12, 1, 8, 230], strides = [1, 1, 1, 1]} : vector<12x2x8x230xf32> to vector<12x1x8x230xf32>
    %46 = vector.shape_cast %45 : vector<12x1x8x230xf32> to vector<12x8x230xf32>
    %47 = arith.maximumf %44, %46 : vector<12x8x230xf32>
    %cst_19 = arith.constant 0.000000e+00 : f32
    %48 = vector.broadcast %cst_19 : f32 to vector<12x8x230xf32>
    %49 = arith.maximumf %47, %48 : vector<12x8x230xf32>
    %c0_20 = arith.constant 0 : index
    %c0_21 = arith.constant 0 : index
    %50 = vector.load %arg5[%c0_20, %c0_21] : memref<1x160xf32, #tpu.memory_space<vmem>>, vector<1x160xf32>
    %51 = vector.extract_strided_slice %49 {offsets = [0, 0, 0], sizes = [8, 8, 230], strides = [1, 1, 1]} : vector<12x8x230xf32> to vector<8x8x230xf32>
    %52 = vector.shape_cast %51 : vector<8x8x230xf32> to vector<64x230xf32>
    %53 = arith.truncf %52 : vector<64x230xf32> to vector<64x230xbf16>
    %c0_22 = arith.constant 0 : index
    %c0_23 = arith.constant 0 : index
    %c0_24 = arith.constant 0 : index
    %54 = vector.load %arg4[%c0_22, %c0_23, %c0_24] : memref<5x230x160xbf16, #tpu.memory_space<vmem>>, vector<1x230x160xbf16>
    %55 = vector.shape_cast %54 : vector<1x230x160xbf16> to vector<230x160xbf16>
    %cst_25 = arith.constant dense<0.000000e+00> : vector<64x160xf32>
    %56 = tpu.matmul %53, %55, %cst_25 {dimension_numbers = #tpu.dot_dimension_numbers<[1], [0], [0], [1], [0, 0, 1, 1], [], []>} : vector<64x230xbf16>, vector<230x160xbf16>, vector<64x160xf32> -> vector<64x160xf32>
    %57 = vector.broadcast %50 : vector<1x160xf32> to vector<64x160xf32>
    %58 = arith.addf %57, %56 : vector<64x160xf32>
    %59 = vector.extract_strided_slice %49 {offsets = [1, 0, 0], sizes = [8, 8, 230], strides = [1, 1, 1]} : vector<12x8x230xf32> to vector<8x8x230xf32>
    %60 = vector.shape_cast %59 : vector<8x8x230xf32> to vector<64x230xf32>
    %61 = arith.truncf %60 : vector<64x230xf32> to vector<64x230xbf16>
    %c1_26 = arith.constant 1 : index
    %c0_27 = arith.constant 0 : index
    %c0_28 = arith.constant 0 : index
    %62 = vector.load %arg4[%c1_26, %c0_27, %c0_28] : memref<5x230x160xbf16, #tpu.memory_space<vmem>>, vector<1x230x160xbf16>
    %63 = vector.shape_cast %62 : vector<1x230x160xbf16> to vector<230x160xbf16>
    %cst_29 = arith.constant dense<0.000000e+00> : vector<64x160xf32>
    %64 = tpu.matmul %61, %63, %cst_29 {dimension_numbers = #tpu.dot_dimension_numbers<[1], [0], [0], [1], [0, 0, 1, 1], [], []>} : vector<64x230xbf16>, vector<230x160xbf16>, vector<64x160xf32> -> vector<64x160xf32>
    %65 = arith.addf %58, %64 : vector<64x160xf32>
    %66 = vector.extract_strided_slice %49 {offsets = [2, 0, 0], sizes = [8, 8, 230], strides = [1, 1, 1]} : vector<12x8x230xf32> to vector<8x8x230xf32>
    %67 = vector.shape_cast %66 : vector<8x8x230xf32> to vector<64x230xf32>
    %68 = arith.truncf %67 : vector<64x230xf32> to vector<64x230xbf16>
    %c2_30 = arith.constant 2 : index
    %c0_31 = arith.constant 0 : index
    %c0_32 = arith.constant 0 : index
    %69 = vector.load %arg4[%c2_30, %c0_31, %c0_32] : memref<5x230x160xbf16, #tpu.memory_space<vmem>>, vector<1x230x160xbf16>
    %70 = vector.shape_cast %69 : vector<1x230x160xbf16> to vector<230x160xbf16>
    %cst_33 = arith.constant dense<0.000000e+00> : vector<64x160xf32>
    %71 = tpu.matmul %68, %70, %cst_33 {dimension_numbers = #tpu.dot_dimension_numbers<[1], [0], [0], [1], [0, 0, 1, 1], [], []>} : vector<64x230xbf16>, vector<230x160xbf16>, vector<64x160xf32> -> vector<64x160xf32>
    %72 = arith.addf %65, %71 : vector<64x160xf32>
    %73 = vector.extract_strided_slice %49 {offsets = [3, 0, 0], sizes = [8, 8, 230], strides = [1, 1, 1]} : vector<12x8x230xf32> to vector<8x8x230xf32>
    %74 = vector.shape_cast %73 : vector<8x8x230xf32> to vector<64x230xf32>
    %75 = arith.truncf %74 : vector<64x230xf32> to vector<64x230xbf16>
    %c3_34 = arith.constant 3 : index
    %c0_35 = arith.constant 0 : index
    %c0_36 = arith.constant 0 : index
    %76 = vector.load %arg4[%c3_34, %c0_35, %c0_36] : memref<5x230x160xbf16, #tpu.memory_space<vmem>>, vector<1x230x160xbf16>
    %77 = vector.shape_cast %76 : vector<1x230x160xbf16> to vector<230x160xbf16>
    %cst_37 = arith.constant dense<0.000000e+00> : vector<64x160xf32>
    %78 = tpu.matmul %75, %77, %cst_37 {dimension_numbers = #tpu.dot_dimension_numbers<[1], [0], [0], [1], [0, 0, 1, 1], [], []>} : vector<64x230xbf16>, vector<230x160xbf16>, vector<64x160xf32> -> vector<64x160xf32>
    %79 = arith.addf %72, %78 : vector<64x160xf32>
    %80 = vector.extract_strided_slice %49 {offsets = [4, 0, 0], sizes = [8, 8, 230], strides = [1, 1, 1]} : vector<12x8x230xf32> to vector<8x8x230xf32>
    %81 = vector.shape_cast %80 : vector<8x8x230xf32> to vector<64x230xf32>
    %82 = arith.truncf %81 : vector<64x230xf32> to vector<64x230xbf16>
    %c4_38 = arith.constant 4 : index
    %c0_39 = arith.constant 0 : index
    %c0_40 = arith.constant 0 : index
    %83 = vector.load %arg4[%c4_38, %c0_39, %c0_40] : memref<5x230x160xbf16, #tpu.memory_space<vmem>>, vector<1x230x160xbf16>
    %84 = vector.shape_cast %83 : vector<1x230x160xbf16> to vector<230x160xbf16>
    %cst_41 = arith.constant dense<0.000000e+00> : vector<64x160xf32>
    %85 = tpu.matmul %82, %84, %cst_41 {dimension_numbers = #tpu.dot_dimension_numbers<[1], [0], [0], [1], [0, 0, 1, 1], [], []>} : vector<64x230xbf16>, vector<230x160xbf16>, vector<64x160xf32> -> vector<64x160xf32>
    %86 = arith.addf %79, %85 : vector<64x160xf32>
    %87 = vector.extract_strided_slice %86 {offsets = [0, 0], sizes = [64, 140], strides = [1, 1]} : vector<64x160xf32> to vector<64x140xf32>
    %88 = vector.extract_strided_slice %86 {offsets = [0, 20], sizes = [64, 140], strides = [1, 1]} : vector<64x160xf32> to vector<64x140xf32>
    %89 = arith.maximumf %87, %88 : vector<64x140xf32>
    %90 = vector.shape_cast %89 : vector<64x140xf32> to vector<8x8x140xf32>
    %91 = vector.shape_cast %90 : vector<8x8x140xf32> to vector<4x2x8x140xf32>
    %92 = vector.extract_strided_slice %91 {offsets = [0, 0, 0, 0], sizes = [4, 1, 8, 140], strides = [1, 1, 1, 1]} : vector<4x2x8x140xf32> to vector<4x1x8x140xf32>
    %93 = vector.shape_cast %92 : vector<4x1x8x140xf32> to vector<4x8x140xf32>
    %94 = vector.extract_strided_slice %91 {offsets = [0, 1, 0, 0], sizes = [4, 1, 8, 140], strides = [1, 1, 1, 1]} : vector<4x2x8x140xf32> to vector<4x1x8x140xf32>
    %95 = vector.shape_cast %94 : vector<4x1x8x140xf32> to vector<4x8x140xf32>
    %96 = arith.maximumf %93, %95 : vector<4x8x140xf32>
    %cst_42 = arith.constant 0.000000e+00 : f32
    %97 = vector.broadcast %cst_42 : f32 to vector<4x8x140xf32>
    %98 = arith.maximumf %96, %97 : vector<4x8x140xf32>
    %c0_43 = arith.constant 0 : index
    %c0_44 = arith.constant 0 : index
    %99 = vector.load %arg7[%c0_43, %c0_44] : memref<1x50xf32, #tpu.memory_space<vmem>>, vector<1x50xf32>
    %100 = vector.extract_strided_slice %98 {offsets = [0, 0, 0], sizes = [1, 8, 140], strides = [1, 1, 1]} : vector<4x8x140xf32> to vector<1x8x140xf32>
    %101 = vector.shape_cast %100 : vector<1x8x140xf32> to vector<8x140xf32>
    %c0_45 = arith.constant 0 : index
    %c0_46 = arith.constant 0 : index
    %c0_47 = arith.constant 0 : index
    %102 = vector.load %arg6[%c0_45, %c0_46, %c0_47] : memref<4x140x50xf32, #tpu.memory_space<vmem>>, vector<1x140x50xf32>
    %103 = vector.shape_cast %102 : vector<1x140x50xf32> to vector<140x50xf32>
    %cst_48 = arith.constant dense<0.000000e+00> : vector<8x50xf32>
    %104 = tpu.matmul %101, %103, %cst_48 {dimension_numbers = #tpu.dot_dimension_numbers<[1], [0], [0], [1], [0, 0, 1, 1], [], []>} : vector<8x140xf32>, vector<140x50xf32>, vector<8x50xf32> -> vector<8x50xf32>
    %105 = vector.broadcast %99 : vector<1x50xf32> to vector<8x50xf32>
    %106 = arith.addf %105, %104 : vector<8x50xf32>
    %107 = vector.extract_strided_slice %98 {offsets = [1, 0, 0], sizes = [1, 8, 140], strides = [1, 1, 1]} : vector<4x8x140xf32> to vector<1x8x140xf32>
    %108 = vector.shape_cast %107 : vector<1x8x140xf32> to vector<8x140xf32>
    %c1_49 = arith.constant 1 : index
    %c0_50 = arith.constant 0 : index
    %c0_51 = arith.constant 0 : index
    %109 = vector.load %arg6[%c1_49, %c0_50, %c0_51] : memref<4x140x50xf32, #tpu.memory_space<vmem>>, vector<1x140x50xf32>
    %110 = vector.shape_cast %109 : vector<1x140x50xf32> to vector<140x50xf32>
    %cst_52 = arith.constant dense<0.000000e+00> : vector<8x50xf32>
    %111 = tpu.matmul %108, %110, %cst_52 {dimension_numbers = #tpu.dot_dimension_numbers<[1], [0], [0], [1], [0, 0, 1, 1], [], []>} : vector<8x140xf32>, vector<140x50xf32>, vector<8x50xf32> -> vector<8x50xf32>
    %112 = arith.addf %106, %111 : vector<8x50xf32>
    %113 = vector.extract_strided_slice %98 {offsets = [2, 0, 0], sizes = [1, 8, 140], strides = [1, 1, 1]} : vector<4x8x140xf32> to vector<1x8x140xf32>
    %114 = vector.shape_cast %113 : vector<1x8x140xf32> to vector<8x140xf32>
    %c2_53 = arith.constant 2 : index
    %c0_54 = arith.constant 0 : index
    %c0_55 = arith.constant 0 : index
    %115 = vector.load %arg6[%c2_53, %c0_54, %c0_55] : memref<4x140x50xf32, #tpu.memory_space<vmem>>, vector<1x140x50xf32>
    %116 = vector.shape_cast %115 : vector<1x140x50xf32> to vector<140x50xf32>
    %cst_56 = arith.constant dense<0.000000e+00> : vector<8x50xf32>
    %117 = tpu.matmul %114, %116, %cst_56 {dimension_numbers = #tpu.dot_dimension_numbers<[1], [0], [0], [1], [0, 0, 1, 1], [], []>} : vector<8x140xf32>, vector<140x50xf32>, vector<8x50xf32> -> vector<8x50xf32>
    %118 = arith.addf %112, %117 : vector<8x50xf32>
    %119 = vector.extract_strided_slice %98 {offsets = [3, 0, 0], sizes = [1, 8, 140], strides = [1, 1, 1]} : vector<4x8x140xf32> to vector<1x8x140xf32>
    %120 = vector.shape_cast %119 : vector<1x8x140xf32> to vector<8x140xf32>
    %c3_57 = arith.constant 3 : index
    %c0_58 = arith.constant 0 : index
    %c0_59 = arith.constant 0 : index
    %121 = vector.load %arg6[%c3_57, %c0_58, %c0_59] : memref<4x140x50xf32, #tpu.memory_space<vmem>>, vector<1x140x50xf32>
    %122 = vector.shape_cast %121 : vector<1x140x50xf32> to vector<140x50xf32>
    %cst_60 = arith.constant dense<0.000000e+00> : vector<8x50xf32>
    %123 = tpu.matmul %120, %122, %cst_60 {dimension_numbers = #tpu.dot_dimension_numbers<[1], [0], [0], [1], [0, 0, 1, 1], [], []>} : vector<8x140xf32>, vector<140x50xf32>, vector<8x50xf32> -> vector<8x50xf32>
    %124 = arith.addf %118, %123 : vector<8x50xf32>
    %cst_61 = arith.constant 0.000000e+00 : f32
    %125 = vector.broadcast %cst_61 : f32 to vector<8x50xf32>
    %126 = arith.maximumf %124, %125 : vector<8x50xf32>
    %c0_62 = arith.constant 0 : index
    %c0_63 = arith.constant 0 : index
    %127 = vector.load %arg8[%c0_62, %c0_63] : memref<50x10xf32, #tpu.memory_space<vmem>>, vector<50x10xf32>
    %cst_64 = arith.constant dense<0.000000e+00> : vector<8x10xf32>
    %128 = tpu.matmul %126, %127, %cst_64 {dimension_numbers = #tpu.dot_dimension_numbers<[1], [0], [0], [1], [0, 0, 1, 1], [], []>} : vector<8x50xf32>, vector<50x10xf32>, vector<8x10xf32> -> vector<8x10xf32>
    %c0_65 = arith.constant 0 : index
    %c0_66 = arith.constant 0 : index
    %129 = vector.load %arg9[%c0_65, %c0_66] : memref<1x10xf32, #tpu.memory_space<vmem>>, vector<1x10xf32>
    %130 = vector.broadcast %129 : vector<1x10xf32> to vector<8x10xf32>
    %131 = arith.addf %128, %130 : vector<8x10xf32>
    %cst_67 = arith.constant dense<0xFF800000> : vector<8xf32>
    %132 = vector.multi_reduction <maximumf>, %131, %cst_67 [1] : vector<8x10xf32> to vector<8xf32>
    %133 = vector.shape_cast %132 : vector<8xf32> to vector<8x1xf32>
    %134 = vector.broadcast %133 : vector<8x1xf32> to vector<8x10xf32>
    %135 = arith.subf %131, %134 : vector<8x10xf32>
    %136 = math.exp %135 : vector<8x10xf32>
    %cst_68 = arith.constant dense<0.000000e+00> : vector<8xf32>
    %137 = vector.multi_reduction <add>, %136, %cst_68 [1] : vector<8x10xf32> to vector<8xf32>
    %138 = vector.shape_cast %137 : vector<8xf32> to vector<8x1xf32>
    %139 = math.log %138 : vector<8x1xf32>
    %140 = arith.addf %139, %133 : vector<8x1xf32>
    %141 = vector.broadcast %140 : vector<8x1xf32> to vector<8x10xf32>
    %142 = arith.subf %131, %141 : vector<8x10xf32>
    %c0_69 = arith.constant 0 : index
    %c0_70 = arith.constant 0 : index
    %143 = vector.load %arg10[%c0_69, %c0_70] : memref<8x10xf32, #tpu.memory_space<vmem>>, vector<8x10xf32>
    tpu.vector_store %arg10[%c0_69, %c0_70], %142 {strides = array<i32>} : memref<8x10xf32, #tpu.memory_space<vmem>>, vector<8x10xf32>,
    return
  }
  func.func @transform_0(%arg0: i32) -> (i32, i32, i32) {
    %c0_i32 = arith.constant 0 : i32
    %c0_i32_0 = arith.constant 0 : i32
    %c0_i32_1 = arith.constant 0 : i32
    return %c0_i32, %arg0, %c0_i32_0 : i32, i32, i32
  }
  func.func @transform_1(%arg0: i32) -> (i32, i32, i32) {
    %c0_i32 = arith.constant 0 : i32
    %c0_i32_0 = arith.constant 0 : i32
    %c0_i32_1 = arith.constant 0 : i32
    %c0_i32_2 = arith.constant 0 : i32
    return %c0_i32, %c0_i32_0, %c0_i32_1 : i32, i32, i32
  }
  func.func @transform_2(%arg0: i32) -> (i32, i32) {
    %c0_i32 = arith.constant 0 : i32
    %c0_i32_0 = arith.constant 0 : i32
    %c0_i32_1 = arith.constant 0 : i32
    return %c0_i32, %c0_i32_0 : i32, i32
  }
  func.func @transform_3(%arg0: i32) -> (i32, i32, i32) {
    %c0_i32 = arith.constant 0 : i32
    %c0_i32_0 = arith.constant 0 : i32
    %c0_i32_1 = arith.constant 0 : i32
    %c0_i32_2 = arith.constant 0 : i32
    return %c0_i32, %c0_i32_0, %c0_i32_1 : i32, i32, i32
  }
  func.func @transform_4(%arg0: i32) -> (i32, i32) {
    %c0_i32 = arith.constant 0 : i32
    %c0_i32_0 = arith.constant 0 : i32
    %c0_i32_1 = arith.constant 0 : i32
    return %c0_i32, %c0_i32_0 : i32, i32
  }
  func.func @transform_5(%arg0: i32) -> (i32, i32, i32) {
    %c0_i32 = arith.constant 0 : i32
    %c0_i32_0 = arith.constant 0 : i32
    %c0_i32_1 = arith.constant 0 : i32
    %c0_i32_2 = arith.constant 0 : i32
    return %c0_i32, %c0_i32_0, %c0_i32_1 : i32, i32, i32
  }
  func.func @transform_6(%arg0: i32) -> (i32, i32) {
    %c0_i32 = arith.constant 0 : i32
    %c0_i32_0 = arith.constant 0 : i32
    %c0_i32_1 = arith.constant 0 : i32
    return %c0_i32, %c0_i32_0 : i32, i32
  }
  func.func @transform_7(%arg0: i32) -> (i32, i32) {
    %c0_i32 = arith.constant 0 : i32
    %c0_i32_0 = arith.constant 0 : i32
    %c0_i32_1 = arith.constant 0 : i32
    return %c0_i32, %c0_i32_0 : i32, i32
  }
  func.func @transform_8(%arg0: i32) -> (i32, i32) {
    %c0_i32 = arith.constant 0 : i32
    %c0_i32_0 = arith.constant 0 : i32
    %c0_i32_1 = arith.constant 0 : i32
    return %c0_i32, %c0_i32_0 : i32, i32
  }
  func.func @transform_9(%arg0: i32) -> (i32, i32) {
    %c0_i32 = arith.constant 0 : i32
    %c0_i32_0 = arith.constant 0 : i32
    return %arg0, %c0_i32 : i32, i32
  }
}

</mosaic_0001>

<llo_original>
// kernel: tile.13
$region0: #{tile.13}
  #allocation0 [shape = 's32[1]{0}', space=sflag, size = 0x4, scoped, tag = 'scoped memory for tile.13']
  %s0 = inlined_call_operand.vmem [shape: f32[10], index: 0, kind: input, shape index: {}]
  %s1 = inlined_call_operand.vmem [shape: f32[24,10], index: 1, kind: output, shape index: {}]
  // Predicated region
  $region2: #{tile.13} parent=0 // pred_check
    _
  $region3: #{tile.13} parent=0 // pred_check_branch
    %3 = sbr.rel (0) target = $region5
  $region4: #{tile.13} parent=0 // pred_region
    _
  $region5: #{tile.13} parent=0 // pred_fallthru
    _
  %v4 = vld [vmem:[%s0] ss:$0 sm:$0xff]
  %5 = vst [vmem:[%s1] sm:$0xff] %v4
  %s6 = scalar_lea.vmem %s1, 8
  %7 = vst [vmem:[%s6] sm:$0xff] %v4
  %s8 = scalar_lea.vmem %s1, 16
  %9 = vst [vmem:[%s8] sm:$0xff] %v4

// kernel: tile.14
$region0: #{tile.14}
  %s0 = inlined_call_operand.vmem [shape: f32[24,10], index: 0, kind: input, shape index: {}]
  %s1 = inlined_call_operand.vmem [shape: f32[1,240], index: 1, kind: output, shape index: {}]
  $region1: #{tile.14} parent=0
    #allocation0 [shape = 'u8[8192]{0}', space=vmem, size = 0x2000, scoped, tag = 'scoped mem for output reshape']
    %v2 = vld [vmem:[%s0] sm:$0x1]
    %vm3 = vcmask 80896
    %4 = vst.msk [vmem:[#allocation0] sm:$0x1] %vm3, %v2
    %s5 = scalar_lea.vmem %s0, 12
    %v6 = vld [vmem:[%s5] sm:$0x1]
    %s7 = scalar_lea.vmem %s0, 12
    %v8 = vld [vmem:[%s7] sm:$0x1]
    %vm9 = vcmask 64512
    %v10 = vsel %vm9, %v8, %v6
    %11 = vrot.lane.b32.xlu0 %v10, 120
    %v12 = vpop.permute.xlu0 %11
    %vm13 = vcmask 15360
    %s14 = scalar_lea.vmem [#allocation0], 8
    %15 = vst.msk [vmem:[%s14] sm:$0x1] %vm13, %v12
    %vm16 = vcmask 1048512
    %17 = vst.msk [vmem:[#allocation0] sm:$0x1] %vm16, %v12
    %s18 = scalar_lea.vmem %s0, 11
    %v19 = vld [vmem:[%s18] sm:$0x1]
    %20 = vrot.lane.b32.xlu0 %v19, 110
    %v21 = vpop.permute.xlu0 %20
    %vm22 = vcmask 982896
    %23 = vst.msk [vmem:[#allocation0] sm:$0x1] %vm22, %v21
    %s24 = scalar_lea.vmem %s0, 23
    %v25 = vld [vmem:[%s24] sm:$0x1]
    %26 = vrot.lane.b32.xlu0 %v25, 102
    %v27 = vpop.permute.xlu0 %26
    %vm28 = vcmask 917296
    %s29 = scalar_lea.vmem [#allocation0], 8
    %30 = vst.msk [vmem:[%s29] sm:$0x1] %vm28, %v27
    %s31 = scalar_lea.vmem %s0, 10
    %v32 = vld [vmem:[%s31] sm:$0x1]
    %33 = vrot.lane.b32.xlu0 %v32, 100
    %v34 = vpop.permute.xlu0 %33
    %vm35 = vcmask 900896
    %36 = vst.msk [vmem:[#allocation0] sm:$0x1] %vm35, %v34
    %s37 = scalar_lea.vmem %s0, 22
    %v38 = vld [vmem:[%s37] sm:$0x1]
    %39 = vrot.lane.b32.xlu0 %v38, 92
    %v40 = vpop.permute.xlu0 %39
    %vm41 = vcmask 835296
    %s42 = scalar_lea.vmem [#allocation0], 8
    %43 = vst.msk [vmem:[%s42] sm:$0x1] %vm41, %v40
    %s44 = scalar_lea.vmem %s0, 9
    %v45 = vld [vmem:[%s44] sm:$0x1]
    %46 = vrot.lane.b32.xlu0 %v45, 90
    %v47 = vpop.permute.xlu0 %46
    %vm48 = vcmask 818896
    %49 = vst.msk [vmem:[#allocation0] sm:$0x1] %vm48, %v47
    %s50 = scalar_lea.vmem %s0, 21
    %v51 = vld [vmem:[%s50] sm:$0x1]
    %52 = vrot.lane.b32.xlu0 %v51, 82
    %v53 = vpop.permute.xlu0 %52
    %vm54 = vcmask 753296
    %s55 = scalar_lea.vmem [#allocation0], 8
    %56 = vst.msk [vmem:[%s55] sm:$0x1] %vm54, %v53
    %s57 = scalar_lea.vmem %s0, 8
    %v58 = vld [vmem:[%s57] sm:$0x1]
    %59 = vrot.lane.b32.xlu0 %v58, 80
    %v60 = vpop.permute.xlu0 %59
    %vm61 = vcmask 736896
    %62 = vst.msk [vmem:[#allocation0] sm:$0x1] %vm61, %v60
    %s63 = scalar_lea.vmem %s0, 20
    %v64 = vld [vmem:[%s63] sm:$0x1]
    %65 = vrot.lane.b32.xlu0 %v64, 72
    %v66 = vpop.permute.xlu0 %65
    %vm67 = vcmask 671296
    %s68 = scalar_lea.vmem [#allocation0], 8
    %69 = vst.msk [vmem:[%s68] sm:$0x1] %vm67, %v66
    %s70 = scalar_lea.vmem %s0, 7
    %v71 = vld [vmem:[%s70] sm:$0x1]
    %72 = vrot.lane.b32.xlu0 %v71, 70
    %v73 = vpop.permute.xlu0 %72
    %vm74 = vcmask 654896
    %75 = vst.msk [vmem:[#allocation0] sm:$0x1] %vm74, %v73
    %s76 = scalar_lea.vmem %s0, 19
    %v77 = vld [vmem:[%s76] sm:$0x1]
    %78 = vrot.lane.b32.xlu0 %v77, 62
    %v79 = vpop.permute.xlu0 %78
    %vm80 = vcmask 589296
    %s81 = scalar_lea.vmem [#allocation0], 8
    %82 = vst.msk [vmem:[%s81] sm:$0x1] %vm80, %v79
    %s83 = scalar_lea.vmem %s0, 6
    %v84 = vld [vmem:[%s83] sm:$0x1]
    %85 = vrot.lane.b32.xlu0 %v84, 60
    %v86 = vpop.permute.xlu0 %85
    %vm87 = vcmask 572896
    %88 = vst.msk [vmem:[#allocation0] sm:$0x1] %vm87, %v86
    %s89 = scalar_lea.vmem %s0, 18
    %v90 = vld [vmem:[%s89] sm:$0x1]
    %91 = vrot.lane.b32.xlu0 %v90, 52
    %v92 = vpop.permute.xlu0 %91
    %vm93 = vcmask 507296
    %s94 = scalar_lea.vmem [#allocation0], 8
    %95 = vst.msk [vmem:[%s94] sm:$0x1] %vm93, %v92
    %s96 = scalar_lea.vmem %s0, 5
    %v97 = vld [vmem:[%s96] sm:$0x1]
    %98 = vrot.lane.b32.xlu0 %v97, 50
    %v99 = vpop.permute.xlu0 %98
    %vm100 = vcmask 490896
    %101 = vst.msk [vmem:[#allocation0] sm:$0x1] %vm100, %v99
    %s102 = scalar_lea.vmem %s0, 17
    %v103 = vld [vmem:[%s102] sm:$0x1]
    %104 = vrot.lane.b32.xlu0 %v103, 42
    %v105 = vpop.permute.xlu0 %104
    %vm106 = vcmask 425296
    %s107 = scalar_lea.vmem [#allocation0], 8
    %108 = vst.msk [vmem:[%s107] sm:$0x1] %vm106, %v105
    %s109 = scalar_lea.vmem %s0, 4
    %v110 = vld [vmem:[%s109] sm:$0x1]
    %111 = vrot.lane.b32.xlu0 %v110, 40
    %v112 = vpop.permute.xlu0 %111
    %vm113 = vcmask 408896
    %114 = vst.msk [vmem:[#allocation0] sm:$0x1] %vm113, %v112
    %s115 = scalar_lea.vmem %s0, 16
    %v116 = vld [vmem:[%s115] sm:$0x1]
    %117 = vrot.lane.b32.xlu0 %v116, 32
    %v118 = vpop.permute.xlu0 %117
    %vm119 = vcmask 343296
    %s120 = scalar_lea.vmem [#allocation0], 8
    %121 = vst.msk [vmem:[%s120] sm:$0x1] %vm119, %v118
    %s122 = scalar_lea.vmem %s0, 3
    %v123 = vld [vmem:[%s122] sm:$0x1]
    %124 = vrot.lane.b32.xlu0 %v123, 30
    %v125 = vpop.permute.xlu0 %124
    %vm126 = vcmask 326896
    %127 = vst.msk [vmem:[#allocation0] sm:$0x1] %vm126, %v125
    %s128 = scalar_lea.vmem %s0, 15
    %v129 = vld [vmem:[%s128] sm:$0x1]
    %130 = vrot.lane.b32.xlu0 %v129, 22
    %v131 = vpop.permute.xlu0 %130
    %vm132 = vcmask 261296
    %s133 = scalar_lea.vmem [#allocation0], 8
    %134 = vst.msk [vmem:[%s133] sm:$0x1] %vm132, %v131
    %s135 = scalar_lea.vmem %s0, 2
    %v136 = vld [vmem:[%s135] sm:$0x1]
    %137 = vrot.lane.b32.xlu0 %v136, 20
    %v138 = vpop.permute.xlu0 %137
    %vm139 = vcmask 244896
    %140 = vst.msk [vmem:[#allocation0] sm:$0x1] %vm139, %v138
    %s141 = scalar_lea.vmem %s0, 14
    %v142 = vld [vmem:[%s141] sm:$0x1]
    %143 = vrot.lane.b32.xlu0 %v142, 12
    %v144 = vpop.permute.xlu0 %143
    %vm145 = vcmask 179296
    %s146 = scalar_lea.vmem [#allocation0], 8
    %147 = vst.msk [vmem:[%s146] sm:$0x1] %vm145, %v144
    %s148 = scalar_lea.vmem %s0, 1
    %v149 = vld [vmem:[%s148] sm:$0x1]
    %150 = vrot.lane.b32.xlu0 %v149, 10
    %v151 = vpop.permute.xlu0 %150
    %vm152 = vcmask 162896
    %153 = vst.msk [vmem:[#allocation0] sm:$0x1] %vm152, %v151
    %s154 = scalar_lea.vmem %s0, 13
    %v155 = vld [vmem:[%s154] sm:$0x1]
    %156 = vrot.lane.b32.xlu0 %v155, 2
    %v157 = vpop.permute.xlu0 %156
    %vm158 = vcmask 97296
    %s159 = scalar_lea.vmem [#allocation0], 8
    %160 = vst.msk [vmem:[%s159] sm:$0x1] %vm158, %v157
    %s162 = ssub.s32 2, 1
    %v163 = vld [vmem:[#allocation0] sm:%s162]
    %s165 = ssub.s32 2, 1
    %166 = vst [vmem:[%s1] sm:%s165] %v163
    %s167 = scalar_lea.vmem [#allocation0], 8
    %v168 = vld [vmem:[%s167] sm:%s162]
    %s170 = ssub.s32 2, 1
    %s171 = scalar_lea.vmem %s1, 1
    %172 = vst [vmem:[%s171] sm:%s170] %v168

// kernel: tile.18
$region0: #{tile.18}
  #allocation0 [shape = 's32[1]{0}', space=sflag, size = 0x4, scoped, tag = 'scoped memory for tile.18']
  %s0 = inlined_call_operand.vmem [shape: f32[20], index: 0, kind: input, shape index: {}]
  %s1 = inlined_call_operand.vmem [shape: f32[8,20], index: 1, kind: output, shape index: {}]
  // Predicated region
  $region2: #{tile.18} parent=0 // pred_check
    _
  $region3: #{tile.18} parent=0 // pred_check_branch
    %3 = sbr.rel (0) target = $region5
  $region4: #{tile.18} parent=0 // pred_region
    _
  $region5: #{tile.18} parent=0 // pred_fallthru
    _
  %v4 = vld [vmem:[%s0] ss:$0 sm:$0xff]
  %5 = vst [vmem:[%s1] sm:$0xff] %v4

// kernel: tile.19
$region0: #{tile.19}
  %s0 = inlined_call_operand.vmem [shape: f32[8,20], index: 0, kind: input, shape index: {}]
  %s1 = inlined_call_operand.vmem [shape: f32[1,160], index: 1, kind: output, shape index: {}]
  $region1: #{tile.19} parent=0
    #allocation0 [shape = 'u8[8192]{0}', space=vmem, size = 0x2000, scoped, tag = 'scoped mem for output reshape']
    %v2 = vld [vmem:[%s0] sm:$0x1]
    %vm3 = vcmask 162816
    %4 = vst.msk [vmem:[#allocation0] sm:$0x1] %vm3, %v2
    %s5 = scalar_lea.vmem %s0, 6
    %v6 = vld [vmem:[%s5] sm:$0x1]
    %s7 = scalar_lea.vmem %s0, 6
    %v8 = vld [vmem:[%s7] sm:$0x1]
    %vm9 = vcmask 64512
    %v10 = vsel %vm9, %v8, %v6
    %11 = vrot.lane.b32.xlu0 %v10, 120
    %v12 = vpop.permute.xlu0 %11
    %vm13 = vcmask 97280
    %s14 = scalar_lea.vmem [#allocation0], 8
    %15 = vst.msk [vmem:[%s14] sm:$0x1] %vm13, %v12
    %vm16 = vcmask 1048512
    %17 = vst.msk [vmem:[#allocation0] sm:$0x1] %vm16, %v12
    %s18 = scalar_lea.vmem %s0, 5
    %v19 = vld [vmem:[%s18] sm:$0x1]
    %20 = vrot.lane.b32.xlu0 %v19, 100
    %v21 = vpop.permute.xlu0 %20
    %vm22 = vcmask 982816
    %23 = vst.msk [vmem:[#allocation0] sm:$0x1] %vm22, %v21
    %s24 = scalar_lea.vmem %s0, 4
    %v25 = vld [vmem:[%s24] sm:$0x1]
    %26 = vrot.lane.b32.xlu0 %v25, 80
    %v27 = vpop.permute.xlu0 %26
    %vm28 = vcmask 818816
    %29 = vst.msk [vmem:[#allocation0] sm:$0x1] %vm28, %v27
    %s30 = scalar_lea.vmem %s0, 3
    %v31 = vld [vmem:[%s30] sm:$0x1]
    %32 = vrot.lane.b32.xlu0 %v31, 60
    %v33 = vpop.permute.xlu0 %32
    %vm34 = vcmask 654816
    %35 = vst.msk [vmem:[#allocation0] sm:$0x1] %vm34, %v33
    %s36 = scalar_lea.vmem %s0, 2
    %v37 = vld [vmem:[%s36] sm:$0x1]
    %38 = vrot.lane.b32.xlu0 %v37, 40
    %v39 = vpop.permute.xlu0 %38
    %vm40 = vcmask 490816
    %41 = vst.msk [vmem:[#allocation0] sm:$0x1] %vm40, %v39
    %s42 = scalar_lea.vmem %s0, 1
    %v43 = vld [vmem:[%s42] sm:$0x1]
    %44 = vrot.lane.b32.xlu0 %v43, 20
    %v45 = vpop.permute.xlu0 %44
    %vm46 = vcmask 326816
    %47 = vst.msk [vmem:[#allocation0] sm:$0x1] %vm46, %v45
    %s48 = scalar_lea.vmem %s0, 7
    %v49 = vld [vmem:[%s48] sm:$0x1]
    %50 = vrot.lane.b32.xlu0 %v49, 12
    %v51 = vpop.permute.xlu0 %50
    %vm52 = vcmask 261216
    %s53 = scalar_lea.vmem [#allocation0], 8
    %54 = vst.msk [vmem:[%s53] sm:$0x1] %vm52, %v51
    %s56 = ssub.s32 2, 1
    %v57 = vld [vmem:[#allocation0] sm:%s56]
    %s59 = ssub.s32 2, 1
    %60 = vst [vmem:[%s1] sm:%s59] %v57
    %s61 = scalar_lea.vmem [#allocation0], 8
    %v62 = vld [vmem:[%s61] sm:%s56]
    %s64 = ssub.s32 2, 1
    %s65 = scalar_lea.vmem %s1, 1
    %66 = vst [vmem:[%s65] sm:%s64] %v62

// kernel: net_forward.1
$region0: #{net_forward.1}
  #allocation0 [shape = 'u32[]', space=smem, size = 0x4, offset = 0x4, fixed_abs, tag = 'smem constant byte address 0x4 - core index']
  #allocation1 [shape = 'u32[72,128]{1,0:T(1,128)}', space=vmem, size = 0x9000, scoped, tag = 'internal scratch']
  %s0 = inlined_call_operand.vmem [shape: f32[28,8,28], index: 0, kind: input, shape index: {}]
  %s1 = inlined_call_operand.vmem [shape: bf16[5,28,240], index: 1, kind: input, shape index: {}]
  %s2 = inlined_call_operand.vmem [shape: f32[1,240], index: 2, kind: input, shape index: {}]
  %s3 = inlined_call_operand.vmem [shape: bf16[5,230,160], index: 3, kind: input, shape index: {}]
  %s4 = inlined_call_operand.vmem [shape: f32[1,160], index: 4, kind: input, shape index: {}]
  %s5 = inlined_call_operand.vmem [shape: f32[4,140,50], index: 5, kind: input, shape index: {}]
  %s6 = inlined_call_operand.vmem [shape: f32[1,50], index: 6, kind: input, shape index: {}]
  %s7 = inlined_call_operand.vmem [shape: f32[50,10], index: 7, kind: input, shape index: {}]
  %s8 = inlined_call_operand.vmem [shape: f32[1,10], index: 8, kind: input, shape index: {}]
  %s9 = inlined_call_operand.vmem [shape: f32[8,10], index: 9, kind: output, shape index: {}]
  %s10 = sld [smem:[#allocation0]]
  $region46: #{net_forward.1} parent=0
    _
  %s12 = ssub.s32 1, %s10
  %s13 = scalar_select 0, %s12, %s10
  // Predicated region
  $region2: #{net_forward.1} parent=0 // pred_check
    _
  $region3: #{net_forward.1} parent=0 // pred_check_branch
    %15 = sbr.rel (0) target = $region5
  $region4: #{net_forward.1} parent=0 // pred_region
    _
  $region5: #{net_forward.1} parent=0 // pred_fallthru
    _
  // Predicated region
  $region6: #{net_forward.1} parent=0 // pred_check
    _
  $region7: #{net_forward.1} parent=0 // pred_check_branch
    %17 = sbr.rel (0) target = $region9
  $region8: #{net_forward.1} parent=0 // pred_region
    _
  $region9: #{net_forward.1} parent=0 // pred_fallthru
    _
  // Predicated region
  $region10: #{net_forward.1} parent=0 // pred_check
    _
  $region11: #{net_forward.1} parent=0 // pred_check_branch
    %19 = sbr.rel (0) target = $region13
  $region12: #{net_forward.1} parent=0 // pred_region
    _
  $region13: #{net_forward.1} parent=0 // pred_fallthru
    _
  // Predicated region
  $region14: #{net_forward.1} parent=0 // pred_check
    _
  $region15: #{net_forward.1} parent=0 // pred_check_branch
    %21 = sbr.rel (0) target = $region17
  $region16: #{net_forward.1} parent=0 // pred_region
    _
  $region17: #{net_forward.1} parent=0 // pred_fallthru
    _
  // Predicated region
  $region18: #{net_forward.1} parent=0 // pred_check
    _
  $region19: #{net_forward.1} parent=0 // pred_check_branch
    %23 = sbr.rel (0) target = $region21
  $region20: #{net_forward.1} parent=0 // pred_region
    _
  $region21: #{net_forward.1} parent=0 // pred_fallthru
    _
  // Predicated region
  $region22: #{net_forward.1} parent=0 // pred_check
    _
  $region23: #{net_forward.1} parent=0 // pred_check_branch
    %25 = sbr.rel (0) target = $region25
  $region24: #{net_forward.1} parent=0 // pred_region
    _
  $region25: #{net_forward.1} parent=0 // pred_fallthru
    _
  // Predicated region
  $region26: #{net_forward.1} parent=0 // pred_check
    _
  $region27: #{net_forward.1} parent=0 // pred_check_branch
    %27 = sbr.rel (0) target = $region29
  $region28: #{net_forward.1} parent=0 // pred_region
    _
  $region29: #{net_forward.1} parent=0 // pred_fallthru
    _
  // Predicated region
  $region30: #{net_forward.1} parent=0 // pred_check
    _
  $region31: #{net_forward.1} parent=0 // pred_check_branch
    %29 = sbr.rel (0) target = $region33
  $region32: #{net_forward.1} parent=0 // pred_region
    _
  $region33: #{net_forward.1} parent=0 // pred_fallthru
    _
  // Predicated region
  $region34: #{net_forward.1} parent=0 // pred_check
    _
  $region35: #{net_forward.1} parent=0 // pred_check_branch
    %31 = sbr.rel (0) target = $region37
  $region36: #{net_forward.1} parent=0 // pred_region
    _
  $region37: #{net_forward.1} parent=0 // pred_fallthru
    _
  %v33 = vld [vmem:[%s0] sm:$0xff]
  %v34 = vld [vmem:[%s0 + $0x8] sm:$0xff]
  %v35 = vld [vmem:[%s0 + $0x10] sm:$0xff]
  %v36 = vld [vmem:[%s0 + $0x18] sm:$0xff]
  %v37 = vld [vmem:[%s0 + $0x20] sm:$0xff]
  %v38 = vld [vmem:[%s0 + $0x28] sm:$0xff]
  %v39 = vld [vmem:[%s0 + $0x30] sm:$0xff]
  %v40 = vld [vmem:[%s0 + $0x38] sm:$0xff]
  %v41 = vld [vmem:[%s0 + $0x40] sm:$0xff]
  %v42 = vld [vmem:[%s0 + $0x48] sm:$0xff]
  %v43 = vld [vmem:[%s0 + $0x50] sm:$0xff]
  %v44 = vld [vmem:[%s0 + $0x58] sm:$0xff]
  %v45 = vld [vmem:[%s0 + $0x60] sm:$0xff]
  %v46 = vld [vmem:[%s0 + $0x68] sm:$0xff]
  %v47 = vld [vmem:[%s0 + $0x70] sm:$0xff]
  %v48 = vld [vmem:[%s0 + $0x78] sm:$0xff]
  %v49 = vld [vmem:[%s0 + $0x80] sm:$0xff]
  %v50 = vld [vmem:[%s0 + $0x88] sm:$0xff]
  %v51 = vld [vmem:[%s0 + $0x90] sm:$0xff]
  %v52 = vld [vmem:[%s0 + $0x98] sm:$0xff]
  %v53 = vld [vmem:[%s0 + $0xa0] sm:$0xff]
  %v54 = vld [vmem:[%s0 + $0xa8] sm:$0xff]
  %v55 = vld [vmem:[%s0 + $0xb0] sm:$0xff]
  %v56 = vld [vmem:[%s0 + $0xb8] sm:$0xff]
  %v57 = vld [vmem:[%s0 + $0xc0] sm:$0xff]
  %v58 = vld [vmem:[%s0 + $0xc8] sm:$0xff]
  %v59 = vld [vmem:[%s0 + $0xd0] sm:$0xff]
  %v60 = vld [vmem:[%s0 + $0xd8] sm:$0xff]
  %v61 = vld [vmem:[%s2] sm:$0x3]
  %v62 = vpack.c.bf16 %v34, %v33
  %v63 = vpack.c.bf16 %v36, %v35
  %v64 = vpack.c.bf16 %v38, %v37
  %v65 = vpack.c.bf16 %v40, %v39
  %v66 = vpack.c.bf16 %v42, %v41
  %v67 = vpack.c.bf16 %v44, %v43
  %v68 = vpack.c.bf16 %v46, %v45
  %v69 = vpack.c.bf16 %v48, %v47
  %v70 = vpack.c.bf16 %v50, %v49
  %v71 = vpack.c.bf16 %v52, %v51
  %v72 = vpack.c.bf16 %v54, %v53
  %v73 = vpack.c.bf16 %v56, %v55
  %v74 = vld [vmem:[%s1] sm:$0xff]
  %v75 = vld [vmem:[%s1 + $0x8] sm:$0xff]
  %v76 = vld [vmem:[%s1 + $0x10] sm:$0xff]
  %v77 = vld [vmem:[%s1 + $0x18] sm:$0x33]
  %v82 = vunpack.c.l.b16 %v74
  %v83 = vunpack.c.h.b16 %v74
  %v84 = vunpack.c.l.b16 %v75
  %v85 = vunpack.c.h.b16 %v75
  %v86 = vunpack.c.l.b16 %v76
  %v87 = vunpack.c.h.b16 %v76
  %v88 = vunpack.c.l.b16 %v77
  %v89 = vunpack.c.h.b16 %v77
  %v90 = vpack.c.b16 %v84, %v82
  %v91 = vpack.c.b16 %v85, %v83
  %v92 = vpack.c.b16 %v88, %v86
  %v93 = vpack.c.b16 %v89, %v87
  %vm96 = vcmask 228352
  %v98 = vsel %vm96, %v62, 0
  %v101 = vsel %vm96, %v63, 0
  %v104 = vsel %vm96, %v64, 0
  %v107 = vsel %vm96, %v65, 0
  %v110 = vsel %vm96, %v66, 0
  %v113 = vsel %vm96, %v67, 0
  %v116 = vsel %vm96, %v68, 0
  %v119 = vsel %vm96, %v69, 0
  %v122 = vsel %vm96, %v70, 0
  %v125 = vsel %vm96, %v71, 0
  %v128 = vsel %vm96, %v72, 0
  %v131 = vsel %vm96, %v73, 0
  %vm133 = vcmask 1045504
  %v135 = vsel %vm133, %v92, 0
  %v138 = vsel %vm133, %v93, 0
  %140 = vmatpush.bf16.msra.mxu0 0
  %141 = vmatpush.bf16.msra.mxu0 0
  %142 = vmatpush.bf16.msra.mxu0 0
  %143 = vmatpush.bf16.msra.mxu0 0
  %144 = vmatpush.bf16.msra.mxu0 0
  %145 = vmatpush.bf16.msra.mxu0 0
  %146 = vmatpush.bf16.msra.mxu0 %v135
  %147 = vmatpush.bf16.msra.mxu0 %v90
  %148 = vmatmul.bf16.gmra.mxu0 %v98
  %v149 = vpop.f32.mrf.mxu0
  %v150 = vadd.f32 0.0, %v149
  %v151 = vpop.f32.mrf.mxu0
  %v152 = vadd.f32 0.0, %v151
  %153 = vmatmul.bf16.gmra.mxu0 %v101
  %v154 = vpop.f32.mrf.mxu0
  %v155 = vadd.f32 0.0, %v154
  %v156 = vpop.f32.mrf.mxu0
  %v157 = vadd.f32 0.0, %v156
  %158 = vmatmul.bf16.gmra.mxu0 %v104
  %v159 = vpop.f32.mrf.mxu0
  %v160 = vadd.f32 0.0, %v159
  %v161 = vpop.f32.mrf.mxu0
  %v162 = vadd.f32 0.0, %v161
  %163 = vmatmul.bf16.gmra.mxu0 %v107
  %v164 = vpop.f32.mrf.mxu0
  %v165 = vadd.f32 0.0, %v164
  %v166 = vpop.f32.mrf.mxu0
  %v167 = vadd.f32 0.0, %v166
  %168 = vmatmul.bf16.gmra.mxu0 %v110
  %v169 = vpop.f32.mrf.mxu0
  %v170 = vadd.f32 0.0, %v169
  %v171 = vpop.f32.mrf.mxu0
  %v172 = vadd.f32 0.0, %v171
  %173 = vmatmul.bf16.gmra.mxu0 %v113
  %v174 = vpop.f32.mrf.mxu0
  %v175 = vadd.f32 0.0, %v174
  %v176 = vpop.f32.mrf.mxu0
  %v177 = vadd.f32 0.0, %v176
  %178 = vmatmul.bf16.gmra.mxu0 %v116
  %v179 = vpop.f32.mrf.mxu0
  %v180 = vadd.f32 0.0, %v179
  %v181 = vpop.f32.mrf.mxu0
  %v182 = vadd.f32 0.0, %v181
  %183 = vmatmul.bf16.gmra.mxu0 %v119
  %v184 = vpop.f32.mrf.mxu0
  %v185 = vadd.f32 0.0, %v184
  %v186 = vpop.f32.mrf.mxu0
  %v187 = vadd.f32 0.0, %v186
  %188 = vmatmul.bf16.gmra.mxu0 %v122
  %v189 = vpop.f32.mrf.mxu0
  %v190 = vadd.f32 0.0, %v189
  %v191 = vpop.f32.mrf.mxu0
  %v192 = vadd.f32 0.0, %v191
  %193 = vmatmul.bf16.gmra.mxu0 %v125
  %v194 = vpop.f32.mrf.mxu0
  %v195 = vadd.f32 0.0, %v194
  %v196 = vpop.f32.mrf.mxu0
  %v197 = vadd.f32 0.0, %v196
  %198 = vmatmul.bf16.gmra.mxu0 %v128
  %v199 = vpop.f32.mrf.mxu0
  %v200 = vadd.f32 0.0, %v199
  %v201 = vpop.f32.mrf.mxu0
  %v202 = vadd.f32 0.0, %v201
  %203 = vmatmul.bf16.gmra.mxu0 %v131
  %v204 = vpop.f32.mrf.mxu0
  %v205 = vadd.f32 0.0, %v204
  %v206 = vpop.f32.mrf.mxu0
  %v207 = vadd.f32 0.0, %v206
  %208 = vdwg.mxu0
  %209 = vmatpush.bf16.msra.mxu0 0
  %210 = vmatpush.bf16.msra.mxu0 0
  %211 = vmatpush.bf16.msra.mxu0 0
  %212 = vmatpush.bf16.msra.mxu0 0
  %213 = vmatpush.bf16.msra.mxu0 0
  %214 = vmatpush.bf16.msra.mxu0 0
  %215 = vmatpush.bf16.msra.mxu0 %v138
  %216 = vmatpush.bf16.msra.mxu0 %v91
  %217 = vmatmul.bf16.gmra.mxu0 %v98
  %v218 = vpop.f32.mrf.mxu0
  %v219 = vadd.f32 0.0, %v218
  %v220 = vpop.f32.mrf.mxu0
  %v221 = vadd.f32 0.0, %v220
  %222 = vmatmul.bf16.gmra.mxu0 %v101
  %v223 = vpop.f32.mrf.mxu0
  %v224 = vadd.f32 0.0, %v223
  %v225 = vpop.f32.mrf.mxu0
  %v226 = vadd.f32 0.0, %v225
  %227 = vmatmul.bf16.gmra.mxu0 %v104
  %v228 = vpop.f32.mrf.mxu0
  %v229 = vadd.f32 0.0, %v228
  %v230 = vpop.f32.mrf.mxu0
  %v231 = vadd.f32 0.0, %v230
  %232 = vmatmul.bf16.gmra.mxu0 %v107
  %v233 = vpop.f32.mrf.mxu0
  %v234 = vadd.f32 0.0, %v233
  %v235 = vpop.f32.mrf.mxu0
  %v236 = vadd.f32 0.0, %v235
  %237 = vmatmul.bf16.gmra.mxu0 %v110
  %v238 = vpop.f32.mrf.mxu0
  %v239 = vadd.f32 0.0, %v238
  %v240 = vpop.f32.mrf.mxu0
  %v241 = vadd.f32 0.0, %v240
  %242 = vmatmul.bf16.gmra.mxu0 %v113
  %v243 = vpop.f32.mrf.mxu0
  %v244 = vadd.f32 0.0, %v243
  %v245 = vpop.f32.mrf.mxu0
  %v246 = vadd.f32 0.0, %v245
  %247 = vmatmul.bf16.gmra.mxu0 %v116
  %v248 = vpop.f32.mrf.mxu0
  %v249 = vadd.f32 0.0, %v248
  %v250 = vpop.f32.mrf.mxu0
  %v251 = vadd.f32 0.0, %v250
  %252 = vmatmul.bf16.gmra.mxu0 %v119
  %v253 = vpop.f32.mrf.mxu0
  %v254 = vadd.f32 0.0, %v253
  %v255 = vpop.f32.mrf.mxu0
  %v256 = vadd.f32 0.0, %v255
  %257 = vmatmul.bf16.gmra.mxu0 %v122
  %v258 = vpop.f32.mrf.mxu0
  %v259 = vadd.f32 0.0, %v258
  %v260 = vpop.f32.mrf.mxu0
  %v261 = vadd.f32 0.0, %v260
  %262 = vmatmul.bf16.gmra.mxu0 %v125
  %v263 = vpop.f32.mrf.mxu0
  %v264 = vadd.f32 0.0, %v263
  %v265 = vpop.f32.mrf.mxu0
  %v266 = vadd.f32 0.0, %v265
  %267 = vmatmul.bf16.gmra.mxu0 %v128
  %v268 = vpop.f32.mrf.mxu0
  %v269 = vadd.f32 0.0, %v268
  %v270 = vpop.f32.mrf.mxu0
  %v271 = vadd.f32 0.0, %v270
  %272 = vmatmul.bf16.gmra.mxu0 %v131
  %v273 = vpop.f32.mrf.mxu0
  %v274 = vadd.f32 0.0, %v273
  %v275 = vpop.f32.mrf.mxu0
  %v276 = vadd.f32 0.0, %v275
  %277 = vdwg.mxu0
  %v279 = vperm.slane %v61, 0
  %v280 = vperm.slane %v61, 1
  %v283 = vadd.f32 %v279, %v150
  %v284 = vadd.f32 %v280, %v219
  %v285 = vadd.f32 %v279, %v152
  %v286 = vadd.f32 %v280, %v221
  %v287 = vadd.f32 %v279, %v155
  %v288 = vadd.f32 %v280, %v224
  %v289 = vadd.f32 %v279, %v157
  %v290 = vadd.f32 %v280, %v226
  %v291 = vadd.f32 %v279, %v160
  %v292 = vadd.f32 %v280, %v229
  %v293 = vadd.f32 %v279, %v162
  %v294 = vadd.f32 %v280, %v231
  %v295 = vadd.f32 %v279, %v165
  %v296 = vadd.f32 %v280, %v234
  %v297 = vadd.f32 %v279, %v167
  %v298 = vadd.f32 %v280, %v236
  %v299 = vadd.f32 %v279, %v170
  %v300 = vadd.f32 %v280, %v239
  %v301 = vadd.f32 %v279, %v172
  %v302 = vadd.f32 %v280, %v241
  %v303 = vadd.f32 %v279, %v175
  %v304 = vadd.f32 %v280, %v244
  %v305 = vadd.f32 %v279, %v177
  %v306 = vadd.f32 %v280, %v246
  %v307 = vadd.f32 %v279, %v180
  %v308 = vadd.f32 %v280, %v249
  %v309 = vadd.f32 %v279, %v182
  %v310 = vadd.f32 %v280, %v251
  %v311 = vadd.f32 %v279, %v185
  %v312 = vadd.f32 %v280, %v254
  %v313 = vadd.f32 %v279, %v187
  %v314 = vadd.f32 %v280, %v256
  %v315 = vadd.f32 %v279, %v190
  %v316 = vadd.f32 %v280, %v259
  %v317 = vadd.f32 %v279, %v192
  %v318 = vadd.f32 %v280, %v261
  %v319 = vadd.f32 %v279, %v195
  %v320 = vadd.f32 %v280, %v264
  %v321 = vadd.f32 %v279, %v197
  %v322 = vadd.f32 %v280, %v266
  %v323 = vadd.f32 %v279, %v200
  %v324 = vadd.f32 %v280, %v269
  %v325 = vadd.f32 %v279, %v202
  %v326 = vadd.f32 %v280, %v271
  %v327 = vadd.f32 %v279, %v205
  %v328 = vadd.f32 %v280, %v274
  %v329 = vadd.f32 %v279, %v207
  %v330 = vadd.f32 %v280, %v276
  %v331 = vpack.c.bf16 %v35, %v34
  %v332 = vpack.c.bf16 %v37, %v36
  %v333 = vpack.c.bf16 %v39, %v38
  %v334 = vpack.c.bf16 %v41, %v40
  %v335 = vpack.c.bf16 %v43, %v42
  %v336 = vpack.c.bf16 %v45, %v44
  %v337 = vpack.c.bf16 %v47, %v46
  %v338 = vpack.c.bf16 %v49, %v48
  %v339 = vpack.c.bf16 %v51, %v50
  %v340 = vpack.c.bf16 %v53, %v52
  %v341 = vpack.c.bf16 %v55, %v54
  %v342 = vpack.c.bf16 %v57, %v56
  %s343 = scalar_lea.vmem %s1, 32
  %v344 = vld [vmem:[%s343] sm:$0xff]
  %v345 = vld [vmem:[%s343 + $0x8] sm:$0xff]
  %v346 = vld [vmem:[%s343 + $0x10] sm:$0xff]
  %v347 = vld [vmem:[%s343 + $0x18] sm:$0x33]
  %v352 = vunpack.c.l.b16 %v344
  %v353 = vunpack.c.h.b16 %v344
  %v354 = vunpack.c.l.b16 %v345
  %v355 = vunpack.c.h.b16 %v345
  %v356 = vunpack.c.l.b16 %v346
  %v357 = vunpack.c.h.b16 %v346
  %v358 = vunpack.c.l.b16 %v347
  %v359 = vunpack.c.h.b16 %v347
  %v360 = vpack.c.b16 %v354, %v352
  %v361 = vpack.c.b16 %v355, %v353
  %v362 = vpack.c.b16 %v358, %v356
  %v363 = vpack.c.b16 %v359, %v357
  %v367 = vsel %vm96, %v331, 0
  %v370 = vsel %vm96, %v332, 0
  %v373 = vsel %vm96, %v333, 0
  %v376 = vsel %vm96, %v334, 0
  %v379 = vsel %vm96, %v335, 0
  %v382 = vsel %vm96, %v336, 0
  %v385 = vsel %vm96, %v337, 0
  %v388 = vsel %vm96, %v338, 0
  %v391 = vsel %vm96, %v339, 0
  %v394 = vsel %vm96, %v340, 0
  %v397 = vsel %vm96, %v341, 0
  %v400 = vsel %vm96, %v342, 0
  %v403 = vsel %vm133, %v362, 0
  %v406 = vsel %vm133, %v363, 0
  %408 = vmatpush.bf16.msra.mxu0 0
  %409 = vmatpush.bf16.msra.mxu0 0
  %410 = vmatpush.bf16.msra.mxu0 0
  %411 = vmatpush.bf16.msra.mxu0 0
  %412 = vmatpush.bf16.msra.mxu0 0
  %413 = vmatpush.bf16.msra.mxu0 0
  %414 = vmatpush.bf16.msra.mxu0 %v403
  %415 = vmatpush.bf16.msra.mxu0 %v360
  %416 = vmatmul.bf16.gmra.mxu0 %v367
  %v417 = vpop.f32.mrf.mxu0
  %v418 = vadd.f32 0.0, %v417
  %v419 = vpop.f32.mrf.mxu0
  %v420 = vadd.f32 0.0, %v419
  %421 = vmatmul.bf16.gmra.mxu0 %v370
  %v422 = vpop.f32.mrf.mxu0
  %v423 = vadd.f32 0.0, %v422
  %v424 = vpop.f32.mrf.mxu0
  %v425 = vadd.f32 0.0, %v424
  %426 = vmatmul.bf16.gmra.mxu0 %v373
  %v427 = vpop.f32.mrf.mxu0
  %v428 = vadd.f32 0.0, %v427
  %v429 = vpop.f32.mrf.mxu0
  %v430 = vadd.f32 0.0, %v429
  %431 = vmatmul.bf16.gmra.mxu0 %v376
  %v432 = vpop.f32.mrf.mxu0
  %v433 = vadd.f32 0.0, %v432
  %v434 = vpop.f32.mrf.mxu0
  %v435 = vadd.f32 0.0, %v434
  %436 = vmatmul.bf16.gmra.mxu0 %v379
  %v437 = vpop.f32.mrf.mxu0
  %v438 = vadd.f32 0.0, %v437
  %v439 = vpop.f32.mrf.mxu0
  %v440 = vadd.f32 0.0, %v439
  %441 = vmatmul.bf16.gmra.mxu0 %v382
  %v442 = vpop.f32.mrf.mxu0
  %v443 = vadd.f32 0.0, %v442
  %v444 = vpop.f32.mrf.mxu0
  %v445 = vadd.f32 0.0, %v444
  %446 = vmatmul.bf16.gmra.mxu0 %v385
  %v447 = vpop.f32.mrf.mxu0
  %v448 = vadd.f32 0.0, %v447
  %v449 = vpop.f32.mrf.mxu0
  %v450 = vadd.f32 0.0, %v449
  %451 = vmatmul.bf16.gmra.mxu0 %v388
  %v452 = vpop.f32.mrf.mxu0
  %v453 = vadd.f32 0.0, %v452
  %v454 = vpop.f32.mrf.mxu0
  %v455 = vadd.f32 0.0, %v454
  %456 = vmatmul.bf16.gmra.mxu0 %v391
  %v457 = vpop.f32.mrf.mxu0
  %v458 = vadd.f32 0.0, %v457
  %v459 = vpop.f32.mrf.mxu0
  %v460 = vadd.f32 0.0, %v459
  %461 = vmatmul.bf16.gmra.mxu0 %v394
  %v462 = vpop.f32.mrf.mxu0
  %v463 = vadd.f32 0.0, %v462
  %v464 = vpop.f32.mrf.mxu0
  %v465 = vadd.f32 0.0, %v464
  %466 = vmatmul.bf16.gmra.mxu0 %v397
  %v467 = vpop.f32.mrf.mxu0
  %v468 = vadd.f32 0.0, %v467
  %v469 = vpop.f32.mrf.mxu0
  %v470 = vadd.f32 0.0, %v469
  %471 = vmatmul.bf16.gmra.mxu0 %v400
  %v472 = vpop.f32.mrf.mxu0
  %v473 = vadd.f32 0.0, %v472
  %v474 = vpop.f32.mrf.mxu0
  %v475 = vadd.f32 0.0, %v474
  %476 = vdwg.mxu0
  %477 = vmatpush.bf16.msra.mxu0 0
  %478 = vmatpush.bf16.msra.mxu0 0
  %479 = vmatpush.bf16.msra.mxu0 0
  %480 = vmatpush.bf16.msra.mxu0 0
  %481 = vmatpush.bf16.msra.mxu0 0
  %482 = vmatpush.bf16.msra.mxu0 0
  %483 = vmatpush.bf16.msra.mxu0 %v406
  %484 = vmatpush.bf16.msra.mxu0 %v361
  %485 = vmatmul.bf16.gmra.mxu0 %v367
  %v486 = vpop.f32.mrf.mxu0
  %v487 = vadd.f32 0.0, %v486
  %v488 = vpop.f32.mrf.mxu0
  %v489 = vadd.f32 0.0, %v488
  %490 = vmatmul.bf16.gmra.mxu0 %v370
  %v491 = vpop.f32.mrf.mxu0
  %v492 = vadd.f32 0.0, %v491
  %v493 = vpop.f32.mrf.mxu0
  %v494 = vadd.f32 0.0, %v493
  %495 = vmatmul.bf16.gmra.mxu0 %v373
  %v496 = vpop.f32.mrf.mxu0
  %v497 = vadd.f32 0.0, %v496
  %v498 = vpop.f32.mrf.mxu0
  %v499 = vadd.f32 0.0, %v498
  %500 = vmatmul.bf16.gmra.mxu0 %v376
  %v501 = vpop.f32.mrf.mxu0
  %v502 = vadd.f32 0.0, %v501
  %v503 = vpop.f32.mrf.mxu0
  %v504 = vadd.f32 0.0, %v503
  %505 = vmatmul.bf16.gmra.mxu0 %v379
  %v506 = vpop.f32.mrf.mxu0
  %v507 = vadd.f32 0.0, %v506
  %v508 = vpop.f32.mrf.mxu0
  %v509 = vadd.f32 0.0, %v508
  %510 = vmatmul.bf16.gmra.mxu0 %v382
  %v511 = vpop.f32.mrf.mxu0
  %v512 = vadd.f32 0.0, %v511
  %v513 = vpop.f32.mrf.mxu0
  %v514 = vadd.f32 0.0, %v513
  %515 = vmatmul.bf16.gmra.mxu0 %v385
  %v516 = vpop.f32.mrf.mxu0
  %v517 = vadd.f32 0.0, %v516
  %v518 = vpop.f32.mrf.mxu0
  %v519 = vadd.f32 0.0, %v518
  %520 = vmatmul.bf16.gmra.mxu0 %v388
  %v521 = vpop.f32.mrf.mxu0
  %v522 = vadd.f32 0.0, %v521
  %v523 = vpop.f32.mrf.mxu0
  %v524 = vadd.f32 0.0, %v523
  %525 = vmatmul.bf16.gmra.mxu0 %v391
  %v526 = vpop.f32.mrf.mxu0
  %v527 = vadd.f32 0.0, %v526
  %v528 = vpop.f32.mrf.mxu0
  %v529 = vadd.f32 0.0, %v528
  %530 = vmatmul.bf16.gmra.mxu0 %v394
  %v531 = vpop.f32.mrf.mxu0
  %v532 = vadd.f32 0.0, %v531
  %v533 = vpop.f32.mrf.mxu0
  %v534 = vadd.f32 0.0, %v533
  %535 = vmatmul.bf16.gmra.mxu0 %v397
  %v536 = vpop.f32.mrf.mxu0
  %v537 = vadd.f32 0.0, %v536
  %v538 = vpop.f32.mrf.mxu0
  %v539 = vadd.f32 0.0, %v538
  %540 = vmatmul.bf16.gmra.mxu0 %v400
  %v541 = vpop.f32.mrf.mxu0
  %v542 = vadd.f32 0.0, %v541
  %v543 = vpop.f32.mrf.mxu0
  %v544 = vadd.f32 0.0, %v543
  %545 = vdwg.mxu0
  %v546 = vadd.f32 %v283, %v418
  %v547 = vadd.f32 %v284, %v487
  %v548 = vadd.f32 %v285, %v420
  %v549 = vadd.f32 %v286, %v489
  %v550 = vadd.f32 %v287, %v423
  %v551 = vadd.f32 %v288, %v492
  %v552 = vadd.f32 %v289, %v425
  %v553 = vadd.f32 %v290, %v494
  %v554 = vadd.f32 %v291, %v428
  %v555 = vadd.f32 %v292, %v497
  %v556 = vadd.f32 %v293, %v430
  %v557 = vadd.f32 %v294, %v499
  %v558 = vadd.f32 %v295, %v433
  %v559 = vadd.f32 %v296, %v502
  %v560 = vadd.f32 %v297, %v435
  %v561 = vadd.f32 %v298, %v504
  %v562 = vadd.f32 %v299, %v438
  %v563 = vadd.f32 %v300, %v507
  %v564 = vadd.f32 %v301, %v440
  %v565 = vadd.f32 %v302, %v509
  %v566 = vadd.f32 %v303, %v443
  %v567 = vadd.f32 %v304, %v512
  %v568 = vadd.f32 %v305, %v445
  %v569 = vadd.f32 %v306, %v514
  %v570 = vadd.f32 %v307, %v448
  %v571 = vadd.f32 %v308, %v517
  %v572 = vadd.f32 %v309, %v450
  %v573 = vadd.f32 %v310, %v519
  %v574 = vadd.f32 %v311, %v453
  %v575 = vadd.f32 %v312, %v522
  %v576 = vadd.f32 %v313, %v455
  %v577 = vadd.f32 %v314, %v524
  %v578 = vadd.f32 %v315, %v458
  %v579 = vadd.f32 %v316, %v527
  %v580 = vadd.f32 %v317, %v460
  %v581 = vadd.f32 %v318, %v529
  %v582 = vadd.f32 %v319, %v463
  %v583 = vadd.f32 %v320, %v532
  %v584 = vadd.f32 %v321, %v465
  %v585 = vadd.f32 %v322, %v534
  %v586 = vadd.f32 %v323, %v468
  %v587 = vadd.f32 %v324, %v537
  %v588 = vadd.f32 %v325, %v470
  %v589 = vadd.f32 %v326, %v539
  %v590 = vadd.f32 %v327, %v473
  %v591 = vadd.f32 %v328, %v542
  %v592 = vadd.f32 %v329, %v475
  %v593 = vadd.f32 %v330, %v544
  %v594 = vpack.c.bf16 %v58, %v57
  %s595 = scalar_lea.vmem %s1, 64
  %v596 = vld [vmem:[%s595] sm:$0xff]
  %v597 = vld [vmem:[%s595 + $0x8] sm:$0xff]
  %v598 = vld [vmem:[%s595 + $0x10] sm:$0xff]
  %v599 = vld [vmem:[%s595 + $0x18] sm:$0x33]
  %v604 = vunpack.c.l.b16 %v596
  %v605 = vunpack.c.h.b16 %v596
  %v606 = vunpack.c.l.b16 %v597
  %v607 = vunpack.c.h.b16 %v597
  %v608 = vunpack.c.l.b16 %v598
  %v609 = vunpack.c.h.b16 %v598
  %v610 = vunpack.c.l.b16 %v599
  %v611 = vunpack.c.h.b16 %v599
  %v612 = vpack.c.b16 %v606, %v604
  %v613 = vpack.c.b16 %v607, %v605
  %v614 = vpack.c.b16 %v610, %v608
  %v615 = vpack.c.b16 %v611, %v609
  %v619 = vsel %vm96, %v594, 0
  %v622 = vsel %vm133, %v614, 0
  %v625 = vsel %vm133, %v615, 0
  %627 = vmatpush.bf16.msra.mxu0 0
  %628 = vmatpush.bf16.msra.mxu0 0
  %629 = vmatpush.bf16.msra.mxu0 0
  %630 = vmatpush.bf16.msra.mxu0 0
  %631 = vmatpush.bf16.msra.mxu0 0
  %632 = vmatpush.bf16.msra.mxu0 0
  %633 = vmatpush.bf16.msra.mxu0 %v622
  %634 = vmatpush.bf16.msra.mxu0 %v612
  %635 = vmatmul.bf16.gmra.mxu0 %v101
  %v636 = vpop.f32.mrf.mxu0
  %v637 = vadd.f32 0.0, %v636
  %v638 = vpop.f32.mrf.mxu0
  %v639 = vadd.f32 0.0, %v638
  %640 = vmatmul.bf16.gmra.mxu0 %v104
  %v641 = vpop.f32.mrf.mxu0
  %v642 = vadd.f32 0.0, %v641
  %v643 = vpop.f32.mrf.mxu0
  %v644 = vadd.f32 0.0, %v643
  %645 = vmatmul.bf16.gmra.mxu0 %v107
  %v646 = vpop.f32.mrf.mxu0
  %v647 = vadd.f32 0.0, %v646
  %v648 = vpop.f32.mrf.mxu0
  %v649 = vadd.f32 0.0, %v648
  %650 = vmatmul.bf16.gmra.mxu0 %v110
  %v651 = vpop.f32.mrf.mxu0
  %v652 = vadd.f32 0.0, %v651
  %v653 = vpop.f32.mrf.mxu0
  %v654 = vadd.f32 0.0, %v653
  %655 = vmatmul.bf16.gmra.mxu0 %v113
  %v656 = vpop.f32.mrf.mxu0
  %v657 = vadd.f32 0.0, %v656
  %v658 = vpop.f32.mrf.mxu0
  %v659 = vadd.f32 0.0, %v658
  %660 = vmatmul.bf16.gmra.mxu0 %v116
  %v661 = vpop.f32.mrf.mxu0
  %v662 = vadd.f32 0.0, %v661
  %v663 = vpop.f32.mrf.mxu0
  %v664 = vadd.f32 0.0, %v663
  %665 = vmatmul.bf16.gmra.mxu0 %v119
  %v666 = vpop.f32.mrf.mxu0
  %v667 = vadd.f32 0.0, %v666
  %v668 = vpop.f32.mrf.mxu0
  %v669 = vadd.f32 0.0, %v668
  %670 = vmatmul.bf16.gmra.mxu0 %v122
  %v671 = vpop.f32.mrf.mxu0
  %v672 = vadd.f32 0.0, %v671
  %v673 = vpop.f32.mrf.mxu0
  %v674 = vadd.f32 0.0, %v673
  %675 = vmatmul.bf16.gmra.mxu0 %v125
  %v676 = vpop.f32.mrf.mxu0
  %v677 = vadd.f32 0.0, %v676
  %v678 = vpop.f32.mrf.mxu0
  %v679 = vadd.f32 0.0, %v678
  %680 = vmatmul.bf16.gmra.mxu0 %v128
  %v681 = vpop.f32.mrf.mxu0
  %v682 = vadd.f32 0.0, %v681
  %v683 = vpop.f32.mrf.mxu0
  %v684 = vadd.f32 0.0, %v683
  %685 = vmatmul.bf16.gmra.mxu0 %v131
  %v686 = vpop.f32.mrf.mxu0
  %v687 = vadd.f32 0.0, %v686
  %v688 = vpop.f32.mrf.mxu0
  %v689 = vadd.f32 0.0, %v688
  %690 = vmatmul.bf16.gmra.mxu0 %v619
  %v691 = vpop.f32.mrf.mxu0
  %v692 = vadd.f32 0.0, %v691
  %v693 = vpop.f32.mrf.mxu0
  %v694 = vadd.f32 0.0, %v693
  %695 = vdwg.mxu0
  %696 = vmatpush.bf16.msra.mxu0 0
  %697 = vmatpush.bf16.msra.mxu0 0
  %698 = vmatpush.bf16.msra.mxu0 0
  %699 = vmatpush.bf16.msra.mxu0 0
  %700 = vmatpush.bf16.msra.mxu0 0
  %701 = vmatpush.bf16.msra.mxu0 0
  %702 = vmatpush.bf16.msra.mxu0 %v625
  %703 = vmatpush.bf16.msra.mxu0 %v613
  %704 = vmatmul.bf16.gmra.mxu0 %v101
  %v705 = vpop.f32.mrf.mxu0
  %v706 = vadd.f32 0.0, %v705
  %v707 = vpop.f32.mrf.mxu0
  %v708 = vadd.f32 0.0, %v707
  %709 = vmatmul.bf16.gmra.mxu0 %v104
  %v710 = vpop.f32.mrf.mxu0
  %v711 = vadd.f32 0.0, %v710
  %v712 = vpop.f32.mrf.mxu0
  %v713 = vadd.f32 0.0, %v712
  %714 = vmatmul.bf16.gmra.mxu0 %v107
  %v715 = vpop.f32.mrf.mxu0
  %v716 = vadd.f32 0.0, %v715
  %v717 = vpop.f32.mrf.mxu0
  %v718 = vadd.f32 0.0, %v717
  %719 = vmatmul.bf16.gmra.mxu0 %v110
  %v720 = vpop.f32.mrf.mxu0
  %v721 = vadd.f32 0.0, %v720
  %v722 = vpop.f32.mrf.mxu0
  %v723 = vadd.f32 0.0, %v722
  %724 = vmatmul.bf16.gmra.mxu0 %v113
  %v725 = vpop.f32.mrf.mxu0
  %v726 = vadd.f32 0.0, %v725
  %v727 = vpop.f32.mrf.mxu0
  %v728 = vadd.f32 0.0, %v727
  %729 = vmatmul.bf16.gmra.mxu0 %v116
  %v730 = vpop.f32.mrf.mxu0
  %v731 = vadd.f32 0.0, %v730
  %v732 = vpop.f32.mrf.mxu0
  %v733 = vadd.f32 0.0, %v732
  %734 = vmatmul.bf16.gmra.mxu0 %v119
  %v735 = vpop.f32.mrf.mxu0
  %v736 = vadd.f32 0.0, %v735
  %v737 = vpop.f32.mrf.mxu0
  %v738 = vadd.f32 0.0, %v737
  %739 = vmatmul.bf16.gmra.mxu0 %v122
  %v740 = vpop.f32.mrf.mxu0
  %v741 = vadd.f32 0.0, %v740
  %v742 = vpop.f32.mrf.mxu0
  %v743 = vadd.f32 0.0, %v742
  %744 = vmatmul.bf16.gmra.mxu0 %v125
  %v745 = vpop.f32.mrf.mxu0
  %v746 = vadd.f32 0.0, %v745
  %v747 = vpop.f32.mrf.mxu0
  %v748 = vadd.f32 0.0, %v747
  %749 = vmatmul.bf16.gmra.mxu0 %v128
  %v750 = vpop.f32.mrf.mxu0
  %v751 = vadd.f32 0.0, %v750
  %v752 = vpop.f32.mrf.mxu0
  %v753 = vadd.f32 0.0, %v752
  %754 = vmatmul.bf16.gmra.mxu0 %v131
  %v755 = vpop.f32.mrf.mxu0
  %v756 = vadd.f32 0.0, %v755
  %v757 = vpop.f32.mrf.mxu0
  %v758 = vadd.f32 0.0, %v757
  %759 = vmatmul.bf16.gmra.mxu0 %v619
  %v760 = vpop.f32.mrf.mxu0
  %v761 = vadd.f32 0.0, %v760
  %v762 = vpop.f32.mrf.mxu0
  %v763 = vadd.f32 0.0, %v762
  %764 = vdwg.mxu0
  %v765 = vadd.f32 %v546, %v637
  %v766 = vadd.f32 %v547, %v706
  %v767 = vadd.f32 %v548, %v639
  %v768 = vadd.f32 %v549, %v708
  %v769 = vadd.f32 %v550, %v642
  %v770 = vadd.f32 %v551, %v711
  %v771 = vadd.f32 %v552, %v644
  %v772 = vadd.f32 %v553, %v713
  %v773 = vadd.f32 %v554, %v647
  %v774 = vadd.f32 %v555, %v716
  %v775 = vadd.f32 %v556, %v649
  %v776 = vadd.f32 %v557, %v718
  %v777 = vadd.f32 %v558, %v652
  %v778 = vadd.f32 %v559, %v721
  %v779 = vadd.f32 %v560, %v654
  %v780 = vadd.f32 %v561, %v723
  %v781 = vadd.f32 %v562, %v657
  %v782 = vadd.f32 %v563, %v726
  %v783 = vadd.f32 %v564, %v659
  %v784 = vadd.f32 %v565, %v728
  %v785 = vadd.f32 %v566, %v662
  %v786 = vadd.f32 %v567, %v731
  %v787 = vadd.f32 %v568, %v664
  %v788 = vadd.f32 %v569, %v733
  %v789 = vadd.f32 %v570, %v667
  %v790 = vadd.f32 %v571, %v736
  %v791 = vadd.f32 %v572, %v669
  %v792 = vadd.f32 %v573, %v738
  %v793 = vadd.f32 %v574, %v672
  %v794 = vadd.f32 %v575, %v741
  %v795 = vadd.f32 %v576, %v674
  %v796 = vadd.f32 %v577, %v743
  %v797 = vadd.f32 %v578, %v677
  %v798 = vadd.f32 %v579, %v746
  %v799 = vadd.f32 %v580, %v679
  %v800 = vadd.f32 %v581, %v748
  %v801 = vadd.f32 %v582, %v682
  %v802 = vadd.f32 %v583, %v751
  %v803 = vadd.f32 %v584, %v684
  %v804 = vadd.f32 %v585, %v753
  %v805 = vadd.f32 %v586, %v687
  %v806 = vadd.f32 %v587, %v756
  %v807 = vadd.f32 %v588, %v689
  %v808 = vadd.f32 %v589, %v758
  %v809 = vadd.f32 %v590, %v692
  %v810 = vadd.f32 %v591, %v761
  %v811 = vadd.f32 %v592, %v694
  %v812 = vadd.f32 %v593, %v763
  %v813 = vpack.c.bf16 %v59, %v58
  %s814 = scalar_lea.vmem %s1, 96
  %v815 = vld [vmem:[%s814] sm:$0xff]
  %v816 = vld [vmem:[%s814 + $0x8] sm:$0xff]
  %v817 = vld [vmem:[%s814 + $0x10] sm:$0xff]
  %v818 = vld [vmem:[%s814 + $0x18] sm:$0x33]
  %v823 = vunpack.c.l.b16 %v815
  %v824 = vunpack.c.h.b16 %v815
  %v825 = vunpack.c.l.b16 %v816
  %v826 = vunpack.c.h.b16 %v816
  %v827 = vunpack.c.l.b16 %v817
  %v828 = vunpack.c.h.b16 %v817
  %v829 = vunpack.c.l.b16 %v818
  %v830 = vunpack.c.h.b16 %v818
  %v831 = vpack.c.b16 %v825, %v823
  %v832 = vpack.c.b16 %v826, %v824
  %v833 = vpack.c.b16 %v829, %v827
  %v834 = vpack.c.b16 %v830, %v828
  %v838 = vsel %vm96, %v813, 0
  %v841 = vsel %vm133, %v833, 0
  %v844 = vsel %vm133, %v834, 0
  %846 = vmatpush.bf16.msra.mxu0 0
  %847 = vmatpush.bf16.msra.mxu0 0
  %848 = vmatpush.bf16.msra.mxu0 0
  %849 = vmatpush.bf16.msra.mxu0 0
  %850 = vmatpush.bf16.msra.mxu0 0
  %851 = vmatpush.bf16.msra.mxu0 0
  %852 = vmatpush.bf16.msra.mxu0 %v841
  %853 = vmatpush.bf16.msra.mxu0 %v831
  %854 = vmatmul.bf16.gmra.mxu0 %v370
  %v855 = vpop.f32.mrf.mxu0
  %v856 = vadd.f32 0.0, %v855
  %v857 = vpop.f32.mrf.mxu0
  %v858 = vadd.f32 0.0, %v857
  %859 = vmatmul.bf16.gmra.mxu0 %v373
  %v860 = vpop.f32.mrf.mxu0
  %v861 = vadd.f32 0.0, %v860
  %v862 = vpop.f32.mrf.mxu0
  %v863 = vadd.f32 0.0, %v862
  %864 = vmatmul.bf16.gmra.mxu0 %v376
  %v865 = vpop.f32.mrf.mxu0
  %v866 = vadd.f32 0.0, %v865
  %v867 = vpop.f32.mrf.mxu0
  %v868 = vadd.f32 0.0, %v867
  %869 = vmatmul.bf16.gmra.mxu0 %v379
  %v870 = vpop.f32.mrf.mxu0
  %v871 = vadd.f32 0.0, %v870
  %v872 = vpop.f32.mrf.mxu0
  %v873 = vadd.f32 0.0, %v872
  %874 = vmatmul.bf16.gmra.mxu0 %v382
  %v875 = vpop.f32.mrf.mxu0
  %v876 = vadd.f32 0.0, %v875
  %v877 = vpop.f32.mrf.mxu0
  %v878 = vadd.f32 0.0, %v877
  %879 = vmatmul.bf16.gmra.mxu0 %v385
  %v880 = vpop.f32.mrf.mxu0
  %v881 = vadd.f32 0.0, %v880
  %v882 = vpop.f32.mrf.mxu0
  %v883 = vadd.f32 0.0, %v882
  %884 = vmatmul.bf16.gmra.mxu0 %v388
  %v885 = vpop.f32.mrf.mxu0
  %v886 = vadd.f32 0.0, %v885
  %v887 = vpop.f32.mrf.mxu0
  %v888 = vadd.f32 0.0, %v887
  %889 = vmatmul.bf16.gmra.mxu0 %v391
  %v890 = vpop.f32.mrf.mxu0
  %v891 = vadd.f32 0.0, %v890
  %v892 = vpop.f32.mrf.mxu0
  %v893 = vadd.f32 0.0, %v892
  %894 = vmatmul.bf16.gmra.mxu0 %v394
  %v895 = vpop.f32.mrf.mxu0
  %v896 = vadd.f32 0.0, %v895
  %v897 = vpop.f32.mrf.mxu0
  %v898 = vadd.f32 0.0, %v897
  %899 = vmatmul.bf16.gmra.mxu0 %v397
  %v900 = vpop.f32.mrf.mxu0
  %v901 = vadd.f32 0.0, %v900
  %v902 = vpop.f32.mrf.mxu0
  %v903 = vadd.f32 0.0, %v902
  %904 = vmatmul.bf16.gmra.mxu0 %v400
  %v905 = vpop.f32.mrf.mxu0
  %v906 = vadd.f32 0.0, %v905
  %v907 = vpop.f32.mrf.mxu0
  %v908 = vadd.f32 0.0, %v907
  %909 = vmatmul.bf16.gmra.mxu0 %v838
  %v910 = vpop.f32.mrf.mxu0
  %v911 = vadd.f32 0.0, %v910
  %v912 = vpop.f32.mrf.mxu0
  %v913 = vadd.f32 0.0, %v912
  %914 = vdwg.mxu0
  %915 = vmatpush.bf16.msra.mxu0 0
  %916 = vmatpush.bf16.msra.mxu0 0
  %917 = vmatpush.bf16.msra.mxu0 0
  %918 = vmatpush.bf16.msra.mxu0 0
  %919 = vmatpush.bf16.msra.mxu0 0
  %920 = vmatpush.bf16.msra.mxu0 0
  %921 = vmatpush.bf16.msra.mxu0 %v844
  %922 = vmatpush.bf16.msra.mxu0 %v832
  %923 = vmatmul.bf16.gmra.mxu0 %v370
  %v924 = vpop.f32.mrf.mxu0
  %v925 = vadd.f32 0.0, %v924
  %v926 = vpop.f32.mrf.mxu0
  %v927 = vadd.f32 0.0, %v926
  %928 = vmatmul.bf16.gmra.mxu0 %v373
  %v929 = vpop.f32.mrf.mxu0
  %v930 = vadd.f32 0.0, %v929
  %v931 = vpop.f32.mrf.mxu0
  %v932 = vadd.f32 0.0, %v931
  %933 = vmatmul.bf16.gmra.mxu0 %v376
  %v934 = vpop.f32.mrf.mxu0
  %v935 = vadd.f32 0.0, %v934
  %v936 = vpop.f32.mrf.mxu0
  %v937 = vadd.f32 0.0, %v936
  %938 = vmatmul.bf16.gmra.mxu0 %v379
  %v939 = vpop.f32.mrf.mxu0
  %v940 = vadd.f32 0.0, %v939
  %v941 = vpop.f32.mrf.mxu0
  %v942 = vadd.f32 0.0, %v941
  %943 = vmatmul.bf16.gmra.mxu0 %v382
  %v944 = vpop.f32.mrf.mxu0
  %v945 = vadd.f32 0.0, %v944
  %v946 = vpop.f32.mrf.mxu0
  %v947 = vadd.f32 0.0, %v946
  %948 = vmatmul.bf16.gmra.mxu0 %v385
  %v949 = vpop.f32.mrf.mxu0
  %v950 = vadd.f32 0.0, %v949
  %v951 = vpop.f32.mrf.mxu0
  %v952 = vadd.f32 0.0, %v951
  %953 = vmatmul.bf16.gmra.mxu0 %v388
  %v954 = vpop.f32.mrf.mxu0
  %v955 = vadd.f32 0.0, %v954
  %v956 = vpop.f32.mrf.mxu0
  %v957 = vadd.f32 0.0, %v956
  %958 = vmatmul.bf16.gmra.mxu0 %v391
  %v959 = vpop.f32.mrf.mxu0
  %v960 = vadd.f32 0.0, %v959
  %v961 = vpop.f32.mrf.mxu0
  %v962 = vadd.f32 0.0, %v961
  %963 = vmatmul.bf16.gmra.mxu0 %v394
  %v964 = vpop.f32.mrf.mxu0
  %v965 = vadd.f32 0.0, %v964
  %v966 = vpop.f32.mrf.mxu0
  %v967 = vadd.f32 0.0, %v966
  %968 = vmatmul.bf16.gmra.mxu0 %v397
  %v969 = vpop.f32.mrf.mxu0
  %v970 = vadd.f32 0.0, %v969
  %v971 = vpop.f32.mrf.mxu0
  %v972 = vadd.f32 0.0, %v971
  %973 = vmatmul.bf16.gmra.mxu0 %v400
  %v974 = vpop.f32.mrf.mxu0
  %v975 = vadd.f32 0.0, %v974
  %v976 = vpop.f32.mrf.mxu0
  %v977 = vadd.f32 0.0, %v976
  %978 = vmatmul.bf16.gmra.mxu0 %v838
  %v979 = vpop.f32.mrf.mxu0
  %v980 = vadd.f32 0.0, %v979
  %v981 = vpop.f32.mrf.mxu0
  %v982 = vadd.f32 0.0, %v981
  %983 = vdwg.mxu0
  %v984 = vadd.f32 %v765, %v856
  %v985 = vadd.f32 %v766, %v925
  %v986 = vadd.f32 %v767, %v858
  %v987 = vadd.f32 %v768, %v927
  %v988 = vadd.f32 %v769, %v861
  %v989 = vadd.f32 %v770, %v930
  %v990 = vadd.f32 %v771, %v863
  %v991 = vadd.f32 %v772, %v932
  %v992 = vadd.f32 %v773, %v866
  %v993 = vadd.f32 %v774, %v935
  %v994 = vadd.f32 %v775, %v868
  %v995 = vadd.f32 %v776, %v937
  %v996 = vadd.f32 %v777, %v871
  %v997 = vadd.f32 %v778, %v940
  %v998 = vadd.f32 %v779, %v873
  %v999 = vadd.f32 %v780, %v942
  %v1000 = vadd.f32 %v781, %v876
  %v1001 = vadd.f32 %v782, %v945
  %v1002 = vadd.f32 %v783, %v878
  %v1003 = vadd.f32 %v784, %v947
  %v1004 = vadd.f32 %v785, %v881
  %v1005 = vadd.f32 %v786, %v950
  %v1006 = vadd.f32 %v787, %v883
  %v1007 = vadd.f32 %v788, %v952
  %v1008 = vadd.f32 %v789, %v886
  %v1009 = vadd.f32 %v790, %v955
  %v1010 = vadd.f32 %v791, %v888
  %v1011 = vadd.f32 %v792, %v957
  %v1012 = vadd.f32 %v793, %v891
  %v1013 = vadd.f32 %v794, %v960
  %v1014 = vadd.f32 %v795, %v893
  %v1015 = vadd.f32 %v796, %v962
  %v1016 = vadd.f32 %v797, %v896
  %v1017 = vadd.f32 %v798, %v965
  %v1018 = vadd.f32 %v799, %v898
  %v1019 = vadd.f32 %v800, %v967
  %v1020 = vadd.f32 %v801, %v901
  %v1021 = vadd.f32 %v802, %v970
  %v1022 = vadd.f32 %v803, %v903
  %v1023 = vadd.f32 %v804, %v972
  %v1024 = vadd.f32 %v805, %v906
  %v1025 = vadd.f32 %v806, %v975
  %v1026 = vadd.f32 %v807, %v908
  %v1027 = vadd.f32 %v808, %v977
  %v1028 = vadd.f32 %v809, %v911
  %v1029 = vadd.f32 %v810, %v980
  %v1030 = vadd.f32 %v811, %v913
  %v1031 = vadd.f32 %v812, %v982
  %v1032 = vpack.c.bf16 %v60, %v59
  %s1033 = scalar_lea.vmem %s1, 128
  %v1034 = vld [vmem:[%s1033] sm:$0xff]
  %v1035 = vld [vmem:[%s1033 + $0x8] sm:$0xff]
  %v1036 = vld [vmem:[%s1033 + $0x10] sm:$0xff]
  %v1037 = vld [vmem:[%s1033 + $0x18] sm:$0x33]
  %v1042 = vunpack.c.l.b16 %v1034
  %v1043 = vunpack.c.h.b16 %v1034
  %v1044 = vunpack.c.l.b16 %v1035
  %v1045 = vunpack.c.h.b16 %v1035
  %v1046 = vunpack.c.l.b16 %v1036
  %v1047 = vunpack.c.h.b16 %v1036
  %v1048 = vunpack.c.l.b16 %v1037
  %v1049 = vunpack.c.h.b16 %v1037
  %v1050 = vpack.c.b16 %v1044, %v1042
  %v1051 = vpack.c.b16 %v1045, %v1043
  %v1052 = vpack.c.b16 %v1048, %v1046
  %v1053 = vpack.c.b16 %v1049, %v1047
  %v1057 = vsel %vm96, %v1032, 0
  %v1060 = vsel %vm133, %v1052, 0
  %v1063 = vsel %vm133, %v1053, 0
  %1065 = vmatpush.bf16.msra.mxu0 0
  %1066 = vmatpush.bf16.msra.mxu0 0
  %1067 = vmatpush.bf16.msra.mxu0 0
  %1068 = vmatpush.bf16.msra.mxu0 0
  %1069 = vmatpush.bf16.msra.mxu0 0
  %1070 = vmatpush.bf16.msra.mxu0 0
  %1071 = vmatpush.bf16.msra.mxu0 %v1060
  %1072 = vmatpush.bf16.msra.mxu0 %v1050
  %1073 = vmatmul.bf16.gmra.mxu0 %v104
  %v1074 = vpop.f32.mrf.mxu0
  %v1075 = vadd.f32 0.0, %v1074
  %v1076 = vpop.f32.mrf.mxu0
  %v1077 = vadd.f32 0.0, %v1076
  %1078 = vmatmul.bf16.gmra.mxu0 %v107
  %v1079 = vpop.f32.mrf.mxu0
  %v1080 = vadd.f32 0.0, %v1079
  %v1081 = vpop.f32.mrf.mxu0
  %v1082 = vadd.f32 0.0, %v1081
  %1083 = vmatmul.bf16.gmra.mxu0 %v110
  %v1084 = vpop.f32.mrf.mxu0
  %v1085 = vadd.f32 0.0, %v1084
  %v1086 = vpop.f32.mrf.mxu0
  %v1087 = vadd.f32 0.0, %v1086
  %1088 = vmatmul.bf16.gmra.mxu0 %v113
  %v1089 = vpop.f32.mrf.mxu0
  %v1090 = vadd.f32 0.0, %v1089
  %v1091 = vpop.f32.mrf.mxu0
  %v1092 = vadd.f32 0.0, %v1091
  %1093 = vmatmul.bf16.gmra.mxu0 %v116
  %v1094 = vpop.f32.mrf.mxu0
  %v1095 = vadd.f32 0.0, %v1094
  %v1096 = vpop.f32.mrf.mxu0
  %v1097 = vadd.f32 0.0, %v1096
  %1098 = vmatmul.bf16.gmra.mxu0 %v119
  %v1099 = vpop.f32.mrf.mxu0
  %v1100 = vadd.f32 0.0, %v1099
  %v1101 = vpop.f32.mrf.mxu0
  %v1102 = vadd.f32 0.0, %v1101
  %1103 = vmatmul.bf16.gmra.mxu0 %v122
  %v1104 = vpop.f32.mrf.mxu0
  %v1105 = vadd.f32 0.0, %v1104
  %v1106 = vpop.f32.mrf.mxu0
  %v1107 = vadd.f32 0.0, %v1106
  %1108 = vmatmul.bf16.gmra.mxu0 %v125
  %v1109 = vpop.f32.mrf.mxu0
  %v1110 = vadd.f32 0.0, %v1109
  %v1111 = vpop.f32.mrf.mxu0
  %v1112 = vadd.f32 0.0, %v1111
  %1113 = vmatmul.bf16.gmra.mxu0 %v128
  %v1114 = vpop.f32.mrf.mxu0
  %v1115 = vadd.f32 0.0, %v1114
  %v1116 = vpop.f32.mrf.mxu0
  %v1117 = vadd.f32 0.0, %v1116
  %1118 = vmatmul.bf16.gmra.mxu0 %v131
  %v1119 = vpop.f32.mrf.mxu0
  %v1120 = vadd.f32 0.0, %v1119
  %v1121 = vpop.f32.mrf.mxu0
  %v1122 = vadd.f32 0.0, %v1121
  %1123 = vmatmul.bf16.gmra.mxu0 %v619
  %v1124 = vpop.f32.mrf.mxu0
  %v1125 = vadd.f32 0.0, %v1124
  %v1126 = vpop.f32.mrf.mxu0
  %v1127 = vadd.f32 0.0, %v1126
  %1128 = vmatmul.bf16.gmra.mxu0 %v1057
  %v1129 = vpop.f32.mrf.mxu0
  %v1130 = vadd.f32 0.0, %v1129
  %v1131 = vpop.f32.mrf.mxu0
  %v1132 = vadd.f32 0.0, %v1131
  %1133 = vdwg.mxu0
  %1134 = vmatpush.bf16.msra.mxu0 0
  %1135 = vmatpush.bf16.msra.mxu0 0
  %1136 = vmatpush.bf16.msra.mxu0 0
  %1137 = vmatpush.bf16.msra.mxu0 0
  %1138 = vmatpush.bf16.msra.mxu0 0
  %1139 = vmatpush.bf16.msra.mxu0 0
  %1140 = vmatpush.bf16.msra.mxu0 %v1063
  %1141 = vmatpush.bf16.msra.mxu0 %v1051
  %1142 = vmatmul.bf16.gmra.mxu0 %v104
  %v1143 = vpop.f32.mrf.mxu0
  %v1144 = vadd.f32 0.0, %v1143
  %v1145 = vpop.f32.mrf.mxu0
  %v1146 = vadd.f32 0.0, %v1145
  %1147 = vmatmul.bf16.gmra.mxu0 %v107
  %v1148 = vpop.f32.mrf.mxu0
  %v1149 = vadd.f32 0.0, %v1148
  %v1150 = vpop.f32.mrf.mxu0
  %v1151 = vadd.f32 0.0, %v1150
  %1152 = vmatmul.bf16.gmra.mxu0 %v110
  %v1153 = vpop.f32.mrf.mxu0
  %v1154 = vadd.f32 0.0, %v1153
  %v1155 = vpop.f32.mrf.mxu0
  %v1156 = vadd.f32 0.0, %v1155
  %1157 = vmatmul.bf16.gmra.mxu0 %v113
  %v1158 = vpop.f32.mrf.mxu0
  %v1159 = vadd.f32 0.0, %v1158
  %v1160 = vpop.f32.mrf.mxu0
  %v1161 = vadd.f32 0.0, %v1160
  %1162 = vmatmul.bf16.gmra.mxu0 %v116
  %v1163 = vpop.f32.mrf.mxu0
  %v1164 = vadd.f32 0.0, %v1163
  %v1165 = vpop.f32.mrf.mxu0
  %v1166 = vadd.f32 0.0, %v1165
  %1167 = vmatmul.bf16.gmra.mxu0 %v119
  %v1168 = vpop.f32.mrf.mxu0
  %v1169 = vadd.f32 0.0, %v1168
  %v1170 = vpop.f32.mrf.mxu0
  %v1171 = vadd.f32 0.0, %v1170
  %1172 = vmatmul.bf16.gmra.mxu0 %v122
  %v1173 = vpop.f32.mrf.mxu0
  %v1174 = vadd.f32 0.0, %v1173
  %v1175 = vpop.f32.mrf.mxu0
  %v1176 = vadd.f32 0.0, %v1175
  %1177 = vmatmul.bf16.gmra.mxu0 %v125
  %v1178 = vpop.f32.mrf.mxu0
  %v1179 = vadd.f32 0.0, %v1178
  %v1180 = vpop.f32.mrf.mxu0
  %v1181 = vadd.f32 0.0, %v1180
  %1182 = vmatmul.bf16.gmra.mxu0 %v128
  %v1183 = vpop.f32.mrf.mxu0
  %v1184 = vadd.f32 0.0, %v1183
  %v1185 = vpop.f32.mrf.mxu0
  %v1186 = vadd.f32 0.0, %v1185
  %1187 = vmatmul.bf16.gmra.mxu0 %v131
  %v1188 = vpop.f32.mrf.mxu0
  %v1189 = vadd.f32 0.0, %v1188
  %v1190 = vpop.f32.mrf.mxu0
  %v1191 = vadd.f32 0.0, %v1190
  %1192 = vmatmul.bf16.gmra.mxu0 %v619
  %v1193 = vpop.f32.mrf.mxu0
  %v1194 = vadd.f32 0.0, %v1193
  %v1195 = vpop.f32.mrf.mxu0
  %v1196 = vadd.f32 0.0, %v1195
  %1197 = vmatmul.bf16.gmra.mxu0 %v1057
  %v1198 = vpop.f32.mrf.mxu0
  %v1199 = vadd.f32 0.0, %v1198
  %v1200 = vpop.f32.mrf.mxu0
  %v1201 = vadd.f32 0.0, %v1200
  %1202 = vdwg.mxu0
  %v1203 = vadd.f32 %v984, %v1075
  %v1204 = vadd.f32 %v985, %v1144
  %v1205 = vadd.f32 %v986, %v1077
  %v1206 = vadd.f32 %v987, %v1146
  %v1207 = vadd.f32 %v988, %v1080
  %v1208 = vadd.f32 %v989, %v1149
  %v1209 = vadd.f32 %v990, %v1082
  %v1210 = vadd.f32 %v991, %v1151
  %v1211 = vadd.f32 %v992, %v1085
  %v1212 = vadd.f32 %v993, %v1154
  %v1213 = vadd.f32 %v994, %v1087
  %v1214 = vadd.f32 %v995, %v1156
  %v1215 = vadd.f32 %v996, %v1090
  %v1216 = vadd.f32 %v997, %v1159
  %v1217 = vadd.f32 %v998, %v1092
  %v1218 = vadd.f32 %v999, %v1161
  %v1219 = vadd.f32 %v1000, %v1095
  %v1220 = vadd.f32 %v1001, %v1164
  %v1221 = vadd.f32 %v1002, %v1097
  %v1222 = vadd.f32 %v1003, %v1166
  %v1223 = vadd.f32 %v1004, %v1100
  %v1224 = vadd.f32 %v1005, %v1169
  %v1225 = vadd.f32 %v1006, %v1102
  %v1226 = vadd.f32 %v1007, %v1171
  %v1227 = vadd.f32 %v1008, %v1105
  %v1228 = vadd.f32 %v1009, %v1174
  %v1229 = vadd.f32 %v1010, %v1107
  %v1230 = vadd.f32 %v1011, %v1176
  %v1231 = vadd.f32 %v1012, %v1110
  %v1232 = vadd.f32 %v1013, %v1179
  %v1233 = vadd.f32 %v1014, %v1112
  %v1234 = vadd.f32 %v1015, %v1181
  %v1235 = vadd.f32 %v1016, %v1115
  %v1236 = vadd.f32 %v1017, %v1184
  %v1237 = vadd.f32 %v1018, %v1117
  %v1238 = vadd.f32 %v1019, %v1186
  %v1239 = vadd.f32 %v1020, %v1120
  %v1240 = vadd.f32 %v1021, %v1189
  %v1241 = vadd.f32 %v1022, %v1122
  %v1242 = vadd.f32 %v1023, %v1191
  %v1243 = vadd.f32 %v1024, %v1125
  %v1244 = vadd.f32 %v1025, %v1194
  %v1245 = vadd.f32 %v1026, %v1127
  %v1246 = vadd.f32 %v1027, %v1196
  %v1247 = vadd.f32 %v1028, %v1130
  %v1248 = vadd.f32 %v1029, %v1199
  %v1249 = vadd.f32 %v1030, %v1132
  %v1250 = vadd.f32 %v1031, %v1201
  %1299 = vrot.lane.b32.xlu0 %v1203, 118
  %v1300 = vpop.permute.xlu0 %1299
  %1301 = vrot.lane.b32.xlu0 %v1204, 118
  %v1302 = vpop.permute.xlu0 %1301
  %1303 = vrot.lane.b32.xlu0 %v1205, 118
  %v1304 = vpop.permute.xlu0 %1303
  %1305 = vrot.lane.b32.xlu0 %v1206, 118
  %v1306 = vpop.permute.xlu0 %1305
  %1307 = vrot.lane.b32.xlu0 %v1207, 118
  %v1308 = vpop.permute.xlu0 %1307
  %1309 = vrot.lane.b32.xlu0 %v1208, 118
  %v1310 = vpop.permute.xlu0 %1309
  %1311 = vrot.lane.b32.xlu0 %v1209, 118
  %v1312 = vpop.permute.xlu0 %1311
  %1313 = vrot.lane.b32.xlu0 %v1210, 118
  %v1314 = vpop.permute.xlu0 %1313
  %1315 = vrot.lane.b32.xlu0 %v1211, 118
  %v1316 = vpop.permute.xlu0 %1315
  %1317 = vrot.lane.b32.xlu0 %v1212, 118
  %v1318 = vpop.permute.xlu0 %1317
  %1319 = vrot.lane.b32.xlu0 %v1213, 118
  %v1320 = vpop.permute.xlu0 %1319
  %1321 = vrot.lane.b32.xlu0 %v1214, 118
  %v1322 = vpop.permute.xlu0 %1321
  %1323 = vrot.lane.b32.xlu0 %v1215, 118
  %v1324 = vpop.permute.xlu0 %1323
  %1325 = vrot.lane.b32.xlu0 %v1216, 118
  %v1326 = vpop.permute.xlu0 %1325
  %1327 = vrot.lane.b32.xlu0 %v1217, 118
  %v1328 = vpop.permute.xlu0 %1327
  %1329 = vrot.lane.b32.xlu0 %v1218, 118
  %v1330 = vpop.permute.xlu0 %1329
  %1331 = vrot.lane.b32.xlu0 %v1219, 118
  %v1332 = vpop.permute.xlu0 %1331
  %1333 = vrot.lane.b32.xlu0 %v1220, 118
  %v1334 = vpop.permute.xlu0 %1333
  %1335 = vrot.lane.b32.xlu0 %v1221, 118
  %v1336 = vpop.permute.xlu0 %1335
  %1337 = vrot.lane.b32.xlu0 %v1222, 118
  %v1338 = vpop.permute.xlu0 %1337
  %1339 = vrot.lane.b32.xlu0 %v1223, 118
  %v1340 = vpop.permute.xlu0 %1339
  %1341 = vrot.lane.b32.xlu0 %v1224, 118
  %v1342 = vpop.permute.xlu0 %1341
  %1343 = vrot.lane.b32.xlu0 %v1225, 118
  %v1344 = vpop.permute.xlu0 %1343
  %1345 = vrot.lane.b32.xlu0 %v1226, 118
  %v1346 = vpop.permute.xlu0 %1345
  %1347 = vrot.lane.b32.xlu0 %v1227, 118
  %v1348 = vpop.permute.xlu0 %1347
  %1349 = vrot.lane.b32.xlu0 %v1228, 118
  %v1350 = vpop.permute.xlu0 %1349
  %1351 = vrot.lane.b32.xlu0 %v1229, 118
  %v1352 = vpop.permute.xlu0 %1351
  %1353 = vrot.lane.b32.xlu0 %v1230, 118
  %v1354 = vpop.permute.xlu0 %1353
  %1355 = vrot.lane.b32.xlu0 %v1231, 118
  %v1356 = vpop.permute.xlu0 %1355
  %1357 = vrot.lane.b32.xlu0 %v1232, 118
  %v1358 = vpop.permute.xlu0 %1357
  %1359 = vrot.lane.b32.xlu0 %v1233, 118
  %v1360 = vpop.permute.xlu0 %1359
  %1361 = vrot.lane.b32.xlu0 %v1234, 118
  %v1362 = vpop.permute.xlu0 %1361
  %1363 = vrot.lane.b32.xlu0 %v1235, 118
  %v1364 = vpop.permute.xlu0 %1363
  %1365 = vrot.lane.b32.xlu0 %v1236, 118
  %v1366 = vpop.permute.xlu0 %1365
  %1367 = vrot.lane.b32.xlu0 %v1237, 118
  %v1368 = vpop.permute.xlu0 %1367
  %1369 = vrot.lane.b32.xlu0 %v1238, 118
  %v1370 = vpop.permute.xlu0 %1369
  %1371 = vrot.lane.b32.xlu0 %v1239, 118
  %v1372 = vpop.permute.xlu0 %1371
  %1373 = vrot.lane.b32.xlu0 %v1240, 118
  %v1374 = vpop.permute.xlu0 %1373
  %1375 = vrot.lane.b32.xlu0 %v1241, 118
  %v1376 = vpop.permute.xlu0 %1375
  %1377 = vrot.lane.b32.xlu0 %v1242, 118
  %v1378 = vpop.permute.xlu0 %1377
  %1379 = vrot.lane.b32.xlu0 %v1243, 118
  %v1380 = vpop.permute.xlu0 %1379
  %1381 = vrot.lane.b32.xlu0 %v1244, 118
  %v1382 = vpop.permute.xlu0 %1381
  %1383 = vrot.lane.b32.xlu0 %v1245, 118
  %v1384 = vpop.permute.xlu0 %1383
  %1385 = vrot.lane.b32.xlu0 %v1246, 118
  %v1386 = vpop.permute.xlu0 %1385
  %1387 = vrot.lane.b32.xlu0 %v1247, 118
  %v1388 = vpop.permute.xlu0 %1387
  %1389 = vrot.lane.b32.xlu0 %v1248, 118
  %v1390 = vpop.permute.xlu0 %1389
  %1391 = vrot.lane.b32.xlu0 %v1249, 118
  %v1392 = vpop.permute.xlu0 %1391
  %1393 = vrot.lane.b32.xlu0 %v1250, 118
  %v1394 = vpop.permute.xlu0 %1393
  %vm1395 = vcmask 965632
  %v1396 = vsel %vm1395, %v1300, %v1302
  %v1397 = vsel %vm1395, %v1304, %v1306
  %v1398 = vsel %vm1395, %v1308, %v1310
  %v1399 = vsel %vm1395, %v1312, %v1314
  %v1400 = vsel %vm1395, %v1316, %v1318
  %v1401 = vsel %vm1395, %v1320, %v1322
  %v1402 = vsel %vm1395, %v1324, %v1326
  %v1403 = vsel %vm1395, %v1328, %v1330
  %v1404 = vsel %vm1395, %v1332, %v1334
  %v1405 = vsel %vm1395, %v1336, %v1338
  %v1406 = vsel %vm1395, %v1340, %v1342
  %v1407 = vsel %vm1395, %v1344, %v1346
  %v1408 = vsel %vm1395, %v1348, %v1350
  %v1409 = vsel %vm1395, %v1352, %v1354
  %v1410 = vsel %vm1395, %v1356, %v1358
  %v1411 = vsel %vm1395, %v1360, %v1362
  %v1412 = vsel %vm1395, %v1364, %v1366
  %v1413 = vsel %vm1395, %v1368, %v1370
  %v1414 = vsel %vm1395, %v1372, %v1374
  %v1415 = vsel %vm1395, %v1376, %v1378
  %v1416 = vsel %vm1395, %v1380, %v1382
  %v1417 = vsel %vm1395, %v1384, %v1386
  %v1418 = vsel %vm1395, %v1388, %v1390
  %v1419 = vsel %vm1395, %v1392, %v1394
  %v1468 = vmax.f32 %v1203, %v1396
  %v1469 = vmax.f32 %v1204, %v1302
  %v1470 = vmax.f32 %v1205, %v1397
  %v1471 = vmax.f32 %v1206, %v1306
  %v1472 = vmax.f32 %v1207, %v1398
  %v1473 = vmax.f32 %v1208, %v1310
  %v1474 = vmax.f32 %v1209, %v1399
  %v1475 = vmax.f32 %v1210, %v1314
  %v1476 = vmax.f32 %v1211, %v1400
  %v1477 = vmax.f32 %v1212, %v1318
  %v1478 = vmax.f32 %v1213, %v1401
  %v1479 = vmax.f32 %v1214, %v1322
  %v1480 = vmax.f32 %v1215, %v1402
  %v1481 = vmax.f32 %v1216, %v1326
  %v1482 = vmax.f32 %v1217, %v1403
  %v1483 = vmax.f32 %v1218, %v1330
  %v1484 = vmax.f32 %v1219, %v1404
  %v1485 = vmax.f32 %v1220, %v1334
  %v1486 = vmax.f32 %v1221, %v1405
  %v1487 = vmax.f32 %v1222, %v1338
  %v1488 = vmax.f32 %v1223, %v1406
  %v1489 = vmax.f32 %v1224, %v1342
  %v1490 = vmax.f32 %v1225, %v1407
  %v1491 = vmax.f32 %v1226, %v1346
  %v1492 = vmax.f32 %v1227, %v1408
  %v1493 = vmax.f32 %v1228, %v1350
  %v1494 = vmax.f32 %v1229, %v1409
  %v1495 = vmax.f32 %v1230, %v1354
  %v1496 = vmax.f32 %v1231, %v1410
  %v1497 = vmax.f32 %v1232, %v1358
  %v1498 = vmax.f32 %v1233, %v1411
  %v1499 = vmax.f32 %v1234, %v1362
  %v1500 = vmax.f32 %v1235, %v1412
  %v1501 = vmax.f32 %v1236, %v1366
  %v1502 = vmax.f32 %v1237, %v1413
  %v1503 = vmax.f32 %v1238, %v1370
  %v1504 = vmax.f32 %v1239, %v1414
  %v1505 = vmax.f32 %v1240, %v1374
  %v1506 = vmax.f32 %v1241, %v1415
  %v1507 = vmax.f32 %v1242, %v1378
  %v1508 = vmax.f32 %v1243, %v1416
  %v1509 = vmax.f32 %v1244, %v1382
  %v1510 = vmax.f32 %v1245, %v1417
  %v1511 = vmax.f32 %v1246, %v1386
  %v1512 = vmax.f32 %v1247, %v1418
  %v1513 = vmax.f32 %v1248, %v1390
  %v1514 = vmax.f32 %v1249, %v1419
  %v1515 = vmax.f32 %v1250, %v1394
  %v1516 = vmax.f32 %v1468, %v1470
  %v1517 = vmax.f32 %v1469, %v1471
  %v1518 = vmax.f32 %v1472, %v1474
  %v1519 = vmax.f32 %v1473, %v1475
  %v1520 = vmax.f32 %v1476, %v1478
  %v1521 = vmax.f32 %v1477, %v1479
  %v1522 = vmax.f32 %v1480, %v1482
  %v1523 = vmax.f32 %v1481, %v1483
  %v1524 = vmax.f32 %v1484, %v1486
  %v1525 = vmax.f32 %v1485, %v1487
  %v1526 = vmax.f32 %v1488, %v1490
  %v1527 = vmax.f32 %v1489, %v1491
  %v1528 = vmax.f32 %v1492, %v1494
  %v1529 = vmax.f32 %v1493, %v1495
  %v1530 = vmax.f32 %v1496, %v1498
  %v1531 = vmax.f32 %v1497, %v1499
  %v1532 = vmax.f32 %v1500, %v1502
  %v1533 = vmax.f32 %v1501, %v1503
  %v1534 = vmax.f32 %v1504, %v1506
  %v1535 = vmax.f32 %v1505, %v1507
  %v1536 = vmax.f32 %v1508, %v1510
  %v1537 = vmax.f32 %v1509, %v1511
  %v1538 = vmax.f32 %v1512, %v1514
  %v1539 = vmax.f32 %v1513, %v1515
  %v1540 = vmax.f32 %v1516, 0.0
  %v1541 = vmax.f32 %v1517, 0.0
  %v1542 = vmax.f32 %v1518, 0.0
  %v1543 = vmax.f32 %v1519, 0.0
  %v1544 = vmax.f32 %v1520, 0.0
  %v1545 = vmax.f32 %v1521, 0.0
  %v1546 = vmax.f32 %v1522, 0.0
  %v1547 = vmax.f32 %v1523, 0.0
  %v1548 = vmax.f32 %v1524, 0.0
  %v1549 = vmax.f32 %v1525, 0.0
  %v1550 = vmax.f32 %v1526, 0.0
  %v1551 = vmax.f32 %v1527, 0.0
  %v1552 = vmax.f32 %v1528, 0.0
  %v1553 = vmax.f32 %v1529, 0.0
  %v1554 = vmax.f32 %v1530, 0.0
  %v1555 = vmax.f32 %v1531, 0.0
  %v1556 = vmax.f32 %v1532, 0.0
  %v1557 = vmax.f32 %v1533, 0.0
  %v1558 = vmax.f32 %v1534, 0.0
  %v1559 = vmax.f32 %v1535, 0.0
  %v1560 = vmax.f32 %v1536, 0.0
  %v1561 = vmax.f32 %v1537, 0.0
  %v1562 = vmax.f32 %v1538, 0.0
  %v1563 = vmax.f32 %v1539, 0.0
  %v1564 = vld [vmem:[%s4] sm:$0x3]
  %v1565 = vpack.c.bf16 %v1542, %v1540
  %v1566 = vpack.c.bf16 %v1543, %v1541
  %v1567 = vpack.c.bf16 %v1546, %v1544
  %v1568 = vpack.c.bf16 %v1547, %v1545
  %v1569 = vpack.c.bf16 %v1550, %v1548
  %v1570 = vpack.c.bf16 %v1551, %v1549
  %v1571 = vpack.c.bf16 %v1554, %v1552
  %v1572 = vpack.c.bf16 %v1555, %v1553
  %v1573 = vld [vmem:[%s3] sm:$0xff]
  %v1574 = vld [vmem:[%s3 + $0x8] sm:$0xff]
  %v1575 = vld [vmem:[%s3 + $0x10] sm:$0xff]
  %v1576 = vld [vmem:[%s3 + $0x18] sm:$0xff]
  %v1577 = vld [vmem:[%s3 + $0x20] sm:$0xff]
  %v1578 = vld [vmem:[%s3 + $0x28] sm:$0xff]
  %v1579 = vld [vmem:[%s3 + $0x30] sm:$0xff]
  %v1580 = vld [vmem:[%s3 + $0x38] sm:$0xff]
  %v1581 = vld [vmem:[%s3 + $0x40] sm:$0xff]
  %v1582 = vld [vmem:[%s3 + $0x48] sm:$0xff]
  %v1583 = vld [vmem:[%s3 + $0x50] sm:$0xff]
  %v1584 = vld [vmem:[%s3 + $0x58] sm:$0xff]
  %v1585 = vld [vmem:[%s3 + $0x60] sm:$0xff]
  %v1586 = vld [vmem:[%s3 + $0x68] sm:$0xff]
  %v1587 = vld [vmem:[%s3 + $0x70] sm:$0xff]
  %v1588 = vld [vmem:[%s3 + $0x78] sm:$0xff]
  %v1589 = vld [vmem:[%s3 + $0x80] sm:$0xff]
  %v1590 = vld [vmem:[%s3 + $0x88] sm:$0xff]
  %v1591 = vld [vmem:[%s3 + $0x90] sm:$0xff]
  %v1592 = vld [vmem:[%s3 + $0x98] sm:$0xff]
  %v1593 = vld [vmem:[%s3 + $0xa0] sm:$0xff]
  %v1594 = vld [vmem:[%s3 + $0xa8] sm:$0xff]
  %v1595 = vld [vmem:[%s3 + $0xb0] sm:$0xff]
  %v1596 = vld [vmem:[%s3 + $0xb8] sm:$0xff]
  %v1597 = vld [vmem:[%s3 + $0xc0] sm:$0xff]
  %v1598 = vld [vmem:[%s3 + $0xc8] sm:$0xff]
  %v1599 = vld [vmem:[%s3 + $0xd0] sm:$0xff]
  %v1600 = vld [vmem:[%s3 + $0xd8] sm:$0xff]
  %v1601 = vld [vmem:[%s3 + $0xe0] sm:$0x77]
  %v1631 = vunpack.c.l.b16 %v1573
  %v1632 = vunpack.c.h.b16 %v1573
  %v1633 = vunpack.c.l.b16 %v1574
  %v1634 = vunpack.c.h.b16 %v1574
  %v1635 = vunpack.c.l.b16 %v1575
  %v1636 = vunpack.c.h.b16 %v1575
  %v1637 = vunpack.c.l.b16 %v1576
  %v1638 = vunpack.c.h.b16 %v1576
  %v1639 = vunpack.c.l.b16 %v1577
  %v1640 = vunpack.c.h.b16 %v1577
  %v1641 = vunpack.c.l.b16 %v1578
  %v1642 = vunpack.c.h.b16 %v1578
  %v1643 = vunpack.c.l.b16 %v1579
  %v1644 = vunpack.c.h.b16 %v1579
  %v1645 = vunpack.c.l.b16 %v1580
  %v1646 = vunpack.c.h.b16 %v1580
  %v1647 = vunpack.c.l.b16 %v1581
  %v1648 = vunpack.c.h.b16 %v1581
  %v1649 = vunpack.c.l.b16 %v1582
  %v1650 = vunpack.c.h.b16 %v1582
  %v1651 = vunpack.c.l.b16 %v1583
  %v1652 = vunpack.c.h.b16 %v1583
  %v1653 = vunpack.c.l.b16 %v1584
  %v1654 = vunpack.c.h.b16 %v1584
  %v1655 = vunpack.c.l.b16 %v1585
  %v1656 = vunpack.c.h.b16 %v1585
  %v1657 = vunpack.c.l.b16 %v1586
  %v1658 = vunpack.c.h.b16 %v1586
  %v1659 = vunpack.c.l.b16 %v1587
  %v1660 = vunpack.c.h.b16 %v1587
  %v1661 = vunpack.c.l.b16 %v1588
  %v1662 = vunpack.c.h.b16 %v1588
  %v1663 = vunpack.c.l.b16 %v1589
  %v1664 = vunpack.c.h.b16 %v1589
  %v1665 = vunpack.c.l.b16 %v1590
  %v1666 = vunpack.c.h.b16 %v1590
  %v1667 = vunpack.c.l.b16 %v1591
  %v1668 = vunpack.c.h.b16 %v1591
  %v1669 = vunpack.c.l.b16 %v1592
  %v1670 = vunpack.c.h.b16 %v1592
  %v1671 = vunpack.c.l.b16 %v1593
  %v1672 = vunpack.c.h.b16 %v1593
  %v1673 = vunpack.c.l.b16 %v1594
  %v1674 = vunpack.c.h.b16 %v1594
  %v1675 = vunpack.c.l.b16 %v1595
  %v1676 = vunpack.c.h.b16 %v1595
  %v1677 = vunpack.c.l.b16 %v1596
  %v1678 = vunpack.c.h.b16 %v1596
  %v1679 = vunpack.c.l.b16 %v1597
  %v1680 = vunpack.c.h.b16 %v1597
  %v1681 = vunpack.c.l.b16 %v1598
  %v1682 = vunpack.c.h.b16 %v1598
  %v1683 = vunpack.c.l.b16 %v1599
  %v1684 = vunpack.c.h.b16 %v1599
  %v1685 = vunpack.c.l.b16 %v1600
  %v1686 = vunpack.c.h.b16 %v1600
  %v1687 = vunpack.c.l.b16 %v1601
  %v1688 = vunpack.c.h.b16 %v1601
  %v1689 = vpack.c.b16 %v1633, %v1631
  %v1690 = vpack.c.b16 %v1634, %v1632
  %v1691 = vpack.c.b16 %v1637, %v1635
  %v1692 = vpack.c.b16 %v1638, %v1636
  %v1693 = vpack.c.b16 %v1641, %v1639
  %v1694 = vpack.c.b16 %v1642, %v1640
  %v1695 = vpack.c.b16 %v1645, %v1643
  %v1696 = vpack.c.b16 %v1646, %v1644
  %v1697 = vpack.c.b16 %v1649, %v1647
  %v1698 = vpack.c.b16 %v1650, %v1648
  %v1699 = vpack.c.b16 %v1653, %v1651
  %v1700 = vpack.c.b16 %v1654, %v1652
  %v1701 = vpack.c.b16 %v1657, %v1655
  %v1702 = vpack.c.b16 %v1658, %v1656
  %v1703 = vpack.c.b16 %v1661, %v1659
  %v1704 = vpack.c.b16 %v1662, %v1660
  %v1705 = vpack.c.b16 %v1665, %v1663
  %v1706 = vpack.c.b16 %v1666, %v1664
  %v1707 = vpack.c.b16 %v1669, %v1667
  %v1708 = vpack.c.b16 %v1670, %v1668
  %v1709 = vpack.c.b16 %v1673, %v1671
  %v1710 = vpack.c.b16 %v1674, %v1672
  %v1711 = vpack.c.b16 %v1677, %v1675
  %v1712 = vpack.c.b16 %v1678, %v1676
  %v1713 = vpack.c.b16 %v1681, %v1679
  %v1714 = vpack.c.b16 %v1682, %v1680
  %v1715 = vpack.c.b16 %v1685, %v1683
  %v1716 = vpack.c.b16 %v1686, %v1684
  %v1717 = vpack.c.b16 %v1687, %v1687
  %v1718 = vpack.c.b16 %v1688, %v1688
  %vm1747 = vcmask 834560
  %v1749 = vsel %vm1747, %v1566, 0
  %v1752 = vsel %vm1747, %v1568, 0
  %v1755 = vsel %vm1747, %v1570, 0
  %v1758 = vsel %vm1747, %v1572, 0
  %vm1760 = vcmask 1042432
  %v1762 = vsel %vm1760, %v1717, 0
  %v1765 = vsel %vm1760, %v1718, 0
  %1767 = vmatpush.bf16.msra.mxu0 %v1703
  %1768 = vmatpush.bf16.msra.mxu0 %v1701
  %1769 = vmatpush.bf16.msra.mxu0 %v1699
  %1770 = vmatpush.bf16.msra.mxu0 %v1697
  %1771 = vmatpush.bf16.msra.mxu0 %v1695
  %1772 = vmatpush.bf16.msra.mxu0 %v1693
  %1773 = vmatpush.bf16.msra.mxu0 %v1691
  %1774 = vmatpush.bf16.msra.mxu0 %v1689
  %1775 = vmatmul.bf16.gmra.mxu0 %v1565
  %v1776 = vpop.f32.mrf.mxu0
  %v1777 = vadd.f32 0.0, %v1776
  %v1778 = vpop.f32.mrf.mxu0
  %v1779 = vadd.f32 0.0, %v1778
  %1780 = vmatmul.bf16.gmra.mxu0 %v1567
  %v1781 = vpop.f32.mrf.mxu0
  %v1782 = vadd.f32 0.0, %v1781
  %v1783 = vpop.f32.mrf.mxu0
  %v1784 = vadd.f32 0.0, %v1783
  %1785 = vmatmul.bf16.gmra.mxu0 %v1569
  %v1786 = vpop.f32.mrf.mxu0
  %v1787 = vadd.f32 0.0, %v1786
  %v1788 = vpop.f32.mrf.mxu0
  %v1789 = vadd.f32 0.0, %v1788
  %1790 = vmatmul.bf16.gmra.mxu0 %v1571
  %v1791 = vpop.f32.mrf.mxu0
  %v1792 = vadd.f32 0.0, %v1791
  %v1793 = vpop.f32.mrf.mxu0
  %v1794 = vadd.f32 0.0, %v1793
  %1795 = vdwg.mxu0
  %1796 = vmatpush.bf16.msra.mxu0 0
  %1797 = vmatpush.bf16.msra.mxu0 %v1762
  %1798 = vmatpush.bf16.msra.mxu0 %v1715
  %1799 = vmatpush.bf16.msra.mxu0 %v1713
  %1800 = vmatpush.bf16.msra.mxu0 %v1711
  %1801 = vmatpush.bf16.msra.mxu0 %v1709
  %1802 = vmatpush.bf16.msra.mxu0 %v1707
  %1803 = vmatpush.bf16.msra.mxu0 %v1705
  %1804 = vmatmul.bf16.gmra.mxu0 %v1749
  %v1805 = vpop.f32.mrf.mxu0
  %v1806 = vadd.f32 %v1777, %v1805
  %v1807 = vpop.f32.mrf.mxu0
  %v1808 = vadd.f32 %v1779, %v1807
  %1809 = vmatmul.bf16.gmra.mxu0 %v1752
  %v1810 = vpop.f32.mrf.mxu0
  %v1811 = vadd.f32 %v1782, %v1810
  %v1812 = vpop.f32.mrf.mxu0
  %v1813 = vadd.f32 %v1784, %v1812
  %1814 = vmatmul.bf16.gmra.mxu0 %v1755
  %v1815 = vpop.f32.mrf.mxu0
  %v1816 = vadd.f32 %v1787, %v1815
  %v1817 = vpop.f32.mrf.mxu0
  %v1818 = vadd.f32 %v1789, %v1817
  %1819 = vmatmul.bf16.gmra.mxu0 %v1758
  %v1820 = vpop.f32.mrf.mxu0
  %v1821 = vadd.f32 %v1792, %v1820
  %v1822 = vpop.f32.mrf.mxu0
  %v1823 = vadd.f32 %v1794, %v1822
  %1824 = vdwg.mxu0
  %1825 = vmatpush.bf16.msra.mxu0 %v1704
  %1826 = vmatpush.bf16.msra.mxu0 %v1702
  %1827 = vmatpush.bf16.msra.mxu0 %v1700
  %1828 = vmatpush.bf16.msra.mxu0 %v1698
  %1829 = vmatpush.bf16.msra.mxu0 %v1696
  %1830 = vmatpush.bf16.msra.mxu0 %v1694
  %1831 = vmatpush.bf16.msra.mxu0 %v1692
  %1832 = vmatpush.bf16.msra.mxu0 %v1690
  %1833 = vmatmul.bf16.gmra.mxu0 %v1565
  %v1834 = vpop.f32.mrf.mxu0
  %v1835 = vadd.f32 0.0, %v1834
  %v1836 = vpop.f32.mrf.mxu0
  %v1837 = vadd.f32 0.0, %v1836
  %1838 = vmatmul.bf16.gmra.mxu0 %v1567
  %v1839 = vpop.f32.mrf.mxu0
  %v1840 = vadd.f32 0.0, %v1839
  %v1841 = vpop.f32.mrf.mxu0
  %v1842 = vadd.f32 0.0, %v1841
  %1843 = vmatmul.bf16.gmra.mxu0 %v1569
  %v1844 = vpop.f32.mrf.mxu0
  %v1845 = vadd.f32 0.0, %v1844
  %v1846 = vpop.f32.mrf.mxu0
  %v1847 = vadd.f32 0.0, %v1846
  %1848 = vmatmul.bf16.gmra.mxu0 %v1571
  %v1849 = vpop.f32.mrf.mxu0
  %v1850 = vadd.f32 0.0, %v1849
  %v1851 = vpop.f32.mrf.mxu0
  %v1852 = vadd.f32 0.0, %v1851
  %1853 = vdwg.mxu0
  %1854 = vmatpush.bf16.msra.mxu0 0
  %1855 = vmatpush.bf16.msra.mxu0 %v1765
  %1856 = vmatpush.bf16.msra.mxu0 %v1716
  %1857 = vmatpush.bf16.msra.mxu0 %v1714
  %1858 = vmatpush.bf16.msra.mxu0 %v1712
  %1859 = vmatpush.bf16.msra.mxu0 %v1710
  %1860 = vmatpush.bf16.msra.mxu0 %v1708
  %1861 = vmatpush.bf16.msra.mxu0 %v1706
  %1862 = vmatmul.bf16.gmra.mxu0 %v1749
  %v1863 = vpop.f32.mrf.mxu0
  %v1864 = vadd.f32 %v1835, %v1863
  %v1865 = vpop.f32.mrf.mxu0
  %v1866 = vadd.f32 %v1837, %v1865
  %1867 = vmatmul.bf16.gmra.mxu0 %v1752
  %v1868 = vpop.f32.mrf.mxu0
  %v1869 = vadd.f32 %v1840, %v1868
  %v1870 = vpop.f32.mrf.mxu0
  %v1871 = vadd.f32 %v1842, %v1870
  %1872 = vmatmul.bf16.gmra.mxu0 %v1755
  %v1873 = vpop.f32.mrf.mxu0
  %v1874 = vadd.f32 %v1845, %v1873
  %v1875 = vpop.f32.mrf.mxu0
  %v1876 = vadd.f32 %v1847, %v1875
  %1877 = vmatmul.bf16.gmra.mxu0 %v1758
  %v1878 = vpop.f32.mrf.mxu0
  %v1879 = vadd.f32 %v1850, %v1878
  %v1880 = vpop.f32.mrf.mxu0
  %v1881 = vadd.f32 %v1852, %v1880
  %1882 = vdwg.mxu0
  %v1884 = vperm.slane %v1564, 0
  %v1885 = vperm.slane %v1564, 1
  %v1888 = vadd.f32 %v1884, %v1806
  %v1889 = vadd.f32 %v1885, %v1864
  %v1890 = vadd.f32 %v1884, %v1808
  %v1891 = vadd.f32 %v1885, %v1866
  %v1892 = vadd.f32 %v1884, %v1811
  %v1893 = vadd.f32 %v1885, %v1869
  %v1894 = vadd.f32 %v1884, %v1813
  %v1895 = vadd.f32 %v1885, %v1871
  %v1896 = vadd.f32 %v1884, %v1816
  %v1897 = vadd.f32 %v1885, %v1874
  %v1898 = vadd.f32 %v1884, %v1818
  %v1899 = vadd.f32 %v1885, %v1876
  %v1900 = vadd.f32 %v1884, %v1821
  %v1901 = vadd.f32 %v1885, %v1879
  %v1902 = vadd.f32 %v1884, %v1823
  %v1903 = vadd.f32 %v1885, %v1881
  %v1904 = vpack.c.bf16 %v1544, %v1542
  %v1905 = vpack.c.bf16 %v1545, %v1543
  %v1906 = vpack.c.bf16 %v1548, %v1546
  %v1907 = vpack.c.bf16 %v1549, %v1547
  %v1908 = vpack.c.bf16 %v1552, %v1550
  %v1909 = vpack.c.bf16 %v1553, %v1551
  %v1910 = vpack.c.bf16 %v1556, %v1554
  %v1911 = vpack.c.bf16 %v1557, %v1555
  %s1912 = scalar_lea.vmem %s3, 232
  %v1913 = vld [vmem:[%s1912] sm:$0xff]
  %v1914 = vld [vmem:[%s1912 + $0x8] sm:$0xff]
  %v1915 = vld [vmem:[%s1912 + $0x10] sm:$0xff]
  %v1916 = vld [vmem:[%s1912 + $0x18] sm:$0xff]
  %v1917 = vld [vmem:[%s1912 + $0x20] sm:$0xff]
  %v1918 = vld [vmem:[%s1912 + $0x28] sm:$0xff]
  %v1919 = vld [vmem:[%s1912 + $0x30] sm:$0xff]
  %v1920 = vld [vmem:[%s1912 + $0x38] sm:$0xff]
  %v1921 = vld [vmem:[%s1912 + $0x40] sm:$0xff]
  %v1922 = vld [vmem:[%s1912 + $0x48] sm:$0xff]
  %v1923 = vld [vmem:[%s1912 + $0x50] sm:$0xff]
  %v1924 = vld [vmem:[%s1912 + $0x58] sm:$0xff]
  %v1925 = vld [vmem:[%s1912 + $0x60] sm:$0xff]
  %v1926 = vld [vmem:[%s1912 + $0x68] sm:$0xff]
  %v1927 = vld [vmem:[%s1912 + $0x70] sm:$0xff]
  %v1928 = vld [vmem:[%s1912 + $0x78] sm:$0xff]
  %v1929 = vld [vmem:[%s1912 + $0x80] sm:$0xff]
  %v1930 = vld [vmem:[%s1912 + $0x88] sm:$0xff]
  %v1931 = vld [vmem:[%s1912 + $0x90] sm:$0xff]
  %v1932 = vld [vmem:[%s1912 + $0x98] sm:$0xff]
  %v1933 = vld [vmem:[%s1912 + $0xa0] sm:$0xff]
  %v1934 = vld [vmem:[%s1912 + $0xa8] sm:$0xff]
  %v1935 = vld [vmem:[%s1912 + $0xb0] sm:$0xff]
  %v1936 = vld [vmem:[%s1912 + $0xb8] sm:$0xff]
  %v1937 = vld [vmem:[%s1912 + $0xc0] sm:$0xff]
  %v1938 = vld [vmem:[%s1912 + $0xc8] sm:$0xff]
  %v1939 = vld [vmem:[%s1912 + $0xd0] sm:$0xff]
  %v1940 = vld [vmem:[%s1912 + $0xd8] sm:$0xff]
  %v1941 = vld [vmem:[%s1912 + $0xe0] sm:$0x77]
  %v1971 = vunpack.c.l.b16 %v1913
  %v1972 = vunpack.c.h.b16 %v1913
  %v1973 = vunpack.c.l.b16 %v1914
  %v1974 = vunpack.c.h.b16 %v1914
  %v1975 = vunpack.c.l.b16 %v1915
  %v1976 = vunpack.c.h.b16 %v1915
  %v1977 = vunpack.c.l.b16 %v1916
  %v1978 = vunpack.c.h.b16 %v1916
  %v1979 = vunpack.c.l.b16 %v1917
  %v1980 = vunpack.c.h.b16 %v1917
  %v1981 = vunpack.c.l.b16 %v1918
  %v1982 = vunpack.c.h.b16 %v1918
  %v1983 = vunpack.c.l.b16 %v1919
  %v1984 = vunpack.c.h.b16 %v1919
  %v1985 = vunpack.c.l.b16 %v1920
  %v1986 = vunpack.c.h.b16 %v1920
  %v1987 = vunpack.c.l.b16 %v1921
  %v1988 = vunpack.c.h.b16 %v1921
  %v1989 = vunpack.c.l.b16 %v1922
  %v1990 = vunpack.c.h.b16 %v1922
  %v1991 = vunpack.c.l.b16 %v1923
  %v1992 = vunpack.c.h.b16 %v1923
  %v1993 = vunpack.c.l.b16 %v1924
  %v1994 = vunpack.c.h.b16 %v1924
  %v1995 = vunpack.c.l.b16 %v1925
  %v1996 = vunpack.c.h.b16 %v1925
  %v1997 = vunpack.c.l.b16 %v1926
  %v1998 = vunpack.c.h.b16 %v1926
  %v1999 = vunpack.c.l.b16 %v1927
  %v2000 = vunpack.c.h.b16 %v1927
  %v2001 = vunpack.c.l.b16 %v1928
  %v2002 = vunpack.c.h.b16 %v1928
  %v2003 = vunpack.c.l.b16 %v1929
  %v2004 = vunpack.c.h.b16 %v1929
  %v2005 = vunpack.c.l.b16 %v1930
  %v2006 = vunpack.c.h.b16 %v1930
  %v2007 = vunpack.c.l.b16 %v1931
  %v2008 = vunpack.c.h.b16 %v1931
  %v2009 = vunpack.c.l.b16 %v1932
  %v2010 = vunpack.c.h.b16 %v1932
  %v2011 = vunpack.c.l.b16 %v1933
  %v2012 = vunpack.c.h.b16 %v1933
  %v2013 = vunpack.c.l.b16 %v1934
  %v2014 = vunpack.c.h.b16 %v1934
  %v2015 = vunpack.c.l.b16 %v1935
  %v2016 = vunpack.c.h.b16 %v1935
  %v2017 = vunpack.c.l.b16 %v1936
  %v2018 = vunpack.c.h.b16 %v1936
  %v2019 = vunpack.c.l.b16 %v1937
  %v2020 = vunpack.c.h.b16 %v1937
  %v2021 = vunpack.c.l.b16 %v1938
  %v2022 = vunpack.c.h.b16 %v1938
  %v2023 = vunpack.c.l.b16 %v1939
  %v2024 = vunpack.c.h.b16 %v1939
  %v2025 = vunpack.c.l.b16 %v1940
  %v2026 = vunpack.c.h.b16 %v1940
  %v2027 = vunpack.c.l.b16 %v1941
  %v2028 = vunpack.c.h.b16 %v1941
  %v2029 = vpack.c.b16 %v1973, %v1971
  %v2030 = vpack.c.b16 %v1974, %v1972
  %v2031 = vpack.c.b16 %v1977, %v1975
  %v2032 = vpack.c.b16 %v1978, %v1976
  %v2033 = vpack.c.b16 %v1981, %v1979
  %v2034 = vpack.c.b16 %v1982, %v1980
  %v2035 = vpack.c.b16 %v1985, %v1983
  %v2036 = vpack.c.b16 %v1986, %v1984
  %v2037 = vpack.c.b16 %v1989, %v1987
  %v2038 = vpack.c.b16 %v1990, %v1988
  %v2039 = vpack.c.b16 %v1993, %v1991
  %v2040 = vpack.c.b16 %v1994, %v1992
  %v2041 = vpack.c.b16 %v1997, %v1995
  %v2042 = vpack.c.b16 %v1998, %v1996
  %v2043 = vpack.c.b16 %v2001, %v1999
  %v2044 = vpack.c.b16 %v2002, %v2000
  %v2045 = vpack.c.b16 %v2005, %v2003
  %v2046 = vpack.c.b16 %v2006, %v2004
  %v2047 = vpack.c.b16 %v2009, %v2007
  %v2048 = vpack.c.b16 %v2010, %v2008
  %v2049 = vpack.c.b16 %v2013, %v2011
  %v2050 = vpack.c.b16 %v2014, %v2012
  %v2051 = vpack.c.b16 %v2017, %v2015
  %v2052 = vpack.c.b16 %v2018, %v2016
  %v2053 = vpack.c.b16 %v2021, %v2019
  %v2054 = vpack.c.b16 %v2022, %v2020
  %v2055 = vpack.c.b16 %v2025, %v2023
  %v2056 = vpack.c.b16 %v2026, %v2024
  %v2057 = vpack.c.b16 %v2027, %v2027
  %v2058 = vpack.c.b16 %v2028, %v2028
  %v2088 = vsel %vm1747, %v1905, 0
  %v2091 = vsel %vm1747, %v1907, 0
  %v2094 = vsel %vm1747, %v1909, 0
  %v2097 = vsel %vm1747, %v1911, 0
  %v2100 = vsel %vm1760, %v2057, 0
  %v2103 = vsel %vm1760, %v2058, 0
  %2105 = vmatpush.bf16.msra.mxu0 %v2043
  %2106 = vmatpush.bf16.msra.mxu0 %v2041
  %2107 = vmatpush.bf16.msra.mxu0 %v2039
  %2108 = vmatpush.bf16.msra.mxu0 %v2037
  %2109 = vmatpush.bf16.msra.mxu0 %v2035
  %2110 = vmatpush.bf16.msra.mxu0 %v2033
  %2111 = vmatpush.bf16.msra.mxu0 %v2031
  %2112 = vmatpush.bf16.msra.mxu0 %v2029
  %2113 = vmatmul.bf16.gmra.mxu0 %v1904
  %v2114 = vpop.f32.mrf.mxu0
  %v2115 = vadd.f32 0.0, %v2114
  %v2116 = vpop.f32.mrf.mxu0
  %v2117 = vadd.f32 0.0, %v2116
  %2118 = vmatmul.bf16.gmra.mxu0 %v1906
  %v2119 = vpop.f32.mrf.mxu0
  %v2120 = vadd.f32 0.0, %v2119
  %v2121 = vpop.f32.mrf.mxu0
  %v2122 = vadd.f32 0.0, %v2121
  %2123 = vmatmul.bf16.gmra.mxu0 %v1908
  %v2124 = vpop.f32.mrf.mxu0
  %v2125 = vadd.f32 0.0, %v2124
  %v2126 = vpop.f32.mrf.mxu0
  %v2127 = vadd.f32 0.0, %v2126
  %2128 = vmatmul.bf16.gmra.mxu0 %v1910
  %v2129 = vpop.f32.mrf.mxu0
  %v2130 = vadd.f32 0.0, %v2129
  %v2131 = vpop.f32.mrf.mxu0
  %v2132 = vadd.f32 0.0, %v2131
  %2133 = vdwg.mxu0
  %2134 = vmatpush.bf16.msra.mxu0 0
  %2135 = vmatpush.bf16.msra.mxu0 %v2100
  %2136 = vmatpush.bf16.msra.mxu0 %v2055
  %2137 = vmatpush.bf16.msra.mxu0 %v2053
  %2138 = vmatpush.bf16.msra.mxu0 %v2051
  %2139 = vmatpush.bf16.msra.mxu0 %v2049
  %2140 = vmatpush.bf16.msra.mxu0 %v2047
  %2141 = vmatpush.bf16.msra.mxu0 %v2045
  %2142 = vmatmul.bf16.gmra.mxu0 %v2088
  %v2143 = vpop.f32.mrf.mxu0
  %v2144 = vadd.f32 %v2115, %v2143
  %v2145 = vpop.f32.mrf.mxu0
  %v2146 = vadd.f32 %v2117, %v2145
  %2147 = vmatmul.bf16.gmra.mxu0 %v2091
  %v2148 = vpop.f32.mrf.mxu0
  %v2149 = vadd.f32 %v2120, %v2148
  %v2150 = vpop.f32.mrf.mxu0
  %v2151 = vadd.f32 %v2122, %v2150
  %2152 = vmatmul.bf16.gmra.mxu0 %v2094
  %v2153 = vpop.f32.mrf.mxu0
  %v2154 = vadd.f32 %v2125, %v2153
  %v2155 = vpop.f32.mrf.mxu0
  %v2156 = vadd.f32 %v2127, %v2155
  %2157 = vmatmul.bf16.gmra.mxu0 %v2097
  %v2158 = vpop.f32.mrf.mxu0
  %v2159 = vadd.f32 %v2130, %v2158
  %v2160 = vpop.f32.mrf.mxu0
  %v2161 = vadd.f32 %v2132, %v2160
  %2162 = vdwg.mxu0
  %2163 = vmatpush.bf16.msra.mxu0 %v2044
  %2164 = vmatpush.bf16.msra.mxu0 %v2042
  %2165 = vmatpush.bf16.msra.mxu0 %v2040
  %2166 = vmatpush.bf16.msra.mxu0 %v2038
  %2167 = vmatpush.bf16.msra.mxu0 %v2036
  %2168 = vmatpush.bf16.msra.mxu0 %v2034
  %2169 = vmatpush.bf16.msra.mxu0 %v2032
  %2170 = vmatpush.bf16.msra.mxu0 %v2030
  %2171 = vmatmul.bf16.gmra.mxu0 %v1904
  %v2172 = vpop.f32.mrf.mxu0
  %v2173 = vadd.f32 0.0, %v2172
  %v2174 = vpop.f32.mrf.mxu0
  %v2175 = vadd.f32 0.0, %v2174
  %2176 = vmatmul.bf16.gmra.mxu0 %v1906
  %v2177 = vpop.f32.mrf.mxu0
  %v2178 = vadd.f32 0.0, %v2177
  %v2179 = vpop.f32.mrf.mxu0
  %v2180 = vadd.f32 0.0, %v2179
  %2181 = vmatmul.bf16.gmra.mxu0 %v1908
  %v2182 = vpop.f32.mrf.mxu0
  %v2183 = vadd.f32 0.0, %v2182
  %v2184 = vpop.f32.mrf.mxu0
  %v2185 = vadd.f32 0.0, %v2184
  %2186 = vmatmul.bf16.gmra.mxu0 %v1910
  %v2187 = vpop.f32.mrf.mxu0
  %v2188 = vadd.f32 0.0, %v2187
  %v2189 = vpop.f32.mrf.mxu0
  %v2190 = vadd.f32 0.0, %v2189
  %2191 = vdwg.mxu0
  %2192 = vmatpush.bf16.msra.mxu0 0
  %2193 = vmatpush.bf16.msra.mxu0 %v2103
  %2194 = vmatpush.bf16.msra.mxu0 %v2056
  %2195 = vmatpush.bf16.msra.mxu0 %v2054
  %2196 = vmatpush.bf16.msra.mxu0 %v2052
  %2197 = vmatpush.bf16.msra.mxu0 %v2050
  %2198 = vmatpush.bf16.msra.mxu0 %v2048
  %2199 = vmatpush.bf16.msra.mxu0 %v2046
  %2200 = vmatmul.bf16.gmra.mxu0 %v2088
  %v2201 = vpop.f32.mrf.mxu0
  %v2202 = vadd.f32 %v2173, %v2201
  %v2203 = vpop.f32.mrf.mxu0
  %v2204 = vadd.f32 %v2175, %v2203
  %2205 = vmatmul.bf16.gmra.mxu0 %v2091
  %v2206 = vpop.f32.mrf.mxu0
  %v2207 = vadd.f32 %v2178, %v2206
  %v2208 = vpop.f32.mrf.mxu0
  %v2209 = vadd.f32 %v2180, %v2208
  %2210 = vmatmul.bf16.gmra.mxu0 %v2094
  %v2211 = vpop.f32.mrf.mxu0
  %v2212 = vadd.f32 %v2183, %v2211
  %v2213 = vpop.f32.mrf.mxu0
  %v2214 = vadd.f32 %v2185, %v2213
  %2215 = vmatmul.bf16.gmra.mxu0 %v2097
  %v2216 = vpop.f32.mrf.mxu0
  %v2217 = vadd.f32 %v2188, %v2216
  %v2218 = vpop.f32.mrf.mxu0
  %v2219 = vadd.f32 %v2190, %v2218
  %2220 = vdwg.mxu0
  %v2221 = vadd.f32 %v1888, %v2144
  %v2222 = vadd.f32 %v1889, %v2202
  %v2223 = vadd.f32 %v1890, %v2146
  %v2224 = vadd.f32 %v1891, %v2204
  %v2225 = vadd.f32 %v1892, %v2149
  %v2226 = vadd.f32 %v1893, %v2207
  %v2227 = vadd.f32 %v1894, %v2151
  %v2228 = vadd.f32 %v1895, %v2209
  %v2229 = vadd.f32 %v1896, %v2154
  %v2230 = vadd.f32 %v1897, %v2212
  %v2231 = vadd.f32 %v1898, %v2156
  %v2232 = vadd.f32 %v1899, %v2214
  %v2233 = vadd.f32 %v1900, %v2159
  %v2234 = vadd.f32 %v1901, %v2217
  %v2235 = vadd.f32 %v1902, %v2161
  %v2236 = vadd.f32 %v1903, %v2219
  %v2237 = vpack.c.bf16 %v1558, %v1556
  %v2238 = vpack.c.bf16 %v1559, %v1557
  %s2239 = scalar_lea.vmem %s3, 464
  %v2240 = vld [vmem:[%s2239] sm:$0xff]
  %v2241 = vld [vmem:[%s2239 + $0x8] sm:$0xff]
  %v2242 = vld [vmem:[%s2239 + $0x10] sm:$0xff]
  %v2243 = vld [vmem:[%s2239 + $0x18] sm:$0xff]
  %v2244 = vld [vmem:[%s2239 + $0x20] sm:$0xff]
  %v2245 = vld [vmem:[%s2239 + $0x28] sm:$0xff]
  %v2246 = vld [vmem:[%s2239 + $0x30] sm:$0xff]
  %v2247 = vld [vmem:[%s2239 + $0x38] sm:$0xff]
  %v2248 = vld [vmem:[%s2239 + $0x40] sm:$0xff]
  %v2249 = vld [vmem:[%s2239 + $0x48] sm:$0xff]
  %v2250 = vld [vmem:[%s2239 + $0x50] sm:$0xff]
  %v2251 = vld [vmem:[%s2239 + $0x58] sm:$0xff]
  %v2252 = vld [vmem:[%s2239 + $0x60] sm:$0xff]
  %v2253 = vld [vmem:[%s2239 + $0x68] sm:$0xff]
  %v2254 = vld [vmem:[%s2239 + $0x70] sm:$0xff]
  %v2255 = vld [vmem:[%s2239 + $0x78] sm:$0xff]
  %v2256 = vld [vmem:[%s2239 + $0x80] sm:$0xff]
  %v2257 = vld [vmem:[%s2239 + $0x88] sm:$0xff]
  %v2258 = vld [vmem:[%s2239 + $0x90] sm:$0xff]
  %v2259 = vld [vmem:[%s2239 + $0x98] sm:$0xff]
  %v2260 = vld [vmem:[%s2239 + $0xa0] sm:$0xff]
  %v2261 = vld [vmem:[%s2239 + $0xa8] sm:$0xff]
  %v2262 = vld [vmem:[%s2239 + $0xb0] sm:$0xff]
  %v2263 = vld [vmem:[%s2239 + $0xb8] sm:$0xff]
  %v2264 = vld [vmem:[%s2239 + $0xc0] sm:$0xff]
  %v2265 = vld [vmem:[%s2239 + $0xc8] sm:$0xff]
  %v2266 = vld [vmem:[%s2239 + $0xd0] sm:$0xff]
  %v2267 = vld [vmem:[%s2239 + $0xd8] sm:$0xff]
  %v2268 = vld [vmem:[%s2239 + $0xe0] sm:$0x77]
  %v2298 = vunpack.c.l.b16 %v2240
  %v2299 = vunpack.c.h.b16 %v2240
  %v2300 = vunpack.c.l.b16 %v2241
  %v2301 = vunpack.c.h.b16 %v2241
  %v2302 = vunpack.c.l.b16 %v2242
  %v2303 = vunpack.c.h.b16 %v2242
  %v2304 = vunpack.c.l.b16 %v2243
  %v2305 = vunpack.c.h.b16 %v2243
  %v2306 = vunpack.c.l.b16 %v2244
  %v2307 = vunpack.c.h.b16 %v2244
  %v2308 = vunpack.c.l.b16 %v2245
  %v2309 = vunpack.c.h.b16 %v2245
  %v2310 = vunpack.c.l.b16 %v2246
  %v2311 = vunpack.c.h.b16 %v2246
  %v2312 = vunpack.c.l.b16 %v2247
  %v2313 = vunpack.c.h.b16 %v2247
  %v2314 = vunpack.c.l.b16 %v2248
  %v2315 = vunpack.c.h.b16 %v2248
  %v2316 = vunpack.c.l.b16 %v2249
  %v2317 = vunpack.c.h.b16 %v2249
  %v2318 = vunpack.c.l.b16 %v2250
  %v2319 = vunpack.c.h.b16 %v2250
  %v2320 = vunpack.c.l.b16 %v2251
  %v2321 = vunpack.c.h.b16 %v2251
  %v2322 = vunpack.c.l.b16 %v2252
  %v2323 = vunpack.c.h.b16 %v2252
  %v2324 = vunpack.c.l.b16 %v2253
  %v2325 = vunpack.c.h.b16 %v2253
  %v2326 = vunpack.c.l.b16 %v2254
  %v2327 = vunpack.c.h.b16 %v2254
  %v2328 = vunpack.c.l.b16 %v2255
  %v2329 = vunpack.c.h.b16 %v2255
  %v2330 = vunpack.c.l.b16 %v2256
  %v2331 = vunpack.c.h.b16 %v2256
  %v2332 = vunpack.c.l.b16 %v2257
  %v2333 = vunpack.c.h.b16 %v2257
  %v2334 = vunpack.c.l.b16 %v2258
  %v2335 = vunpack.c.h.b16 %v2258
  %v2336 = vunpack.c.l.b16 %v2259
  %v2337 = vunpack.c.h.b16 %v2259
  %v2338 = vunpack.c.l.b16 %v2260
  %v2339 = vunpack.c.h.b16 %v2260
  %v2340 = vunpack.c.l.b16 %v2261
  %v2341 = vunpack.c.h.b16 %v2261
  %v2342 = vunpack.c.l.b16 %v2262
  %v2343 = vunpack.c.h.b16 %v2262
  %v2344 = vunpack.c.l.b16 %v2263
  %v2345 = vunpack.c.h.b16 %v2263
  %v2346 = vunpack.c.l.b16 %v2264
  %v2347 = vunpack.c.h.b16 %v2264
  %v2348 = vunpack.c.l.b16 %v2265
  %v2349 = vunpack.c.h.b16 %v2265
  %v2350 = vunpack.c.l.b16 %v2266
  %v2351 = vunpack.c.h.b16 %v2266
  %v2352 = vunpack.c.l.b16 %v2267
  %v2353 = vunpack.c.h.b16 %v2267
  %v2354 = vunpack.c.l.b16 %v2268
  %v2355 = vunpack.c.h.b16 %v2268
  %v2356 = vpack.c.b16 %v2300, %v2298
  %v2357 = vpack.c.b16 %v2301, %v2299
  %v2358 = vpack.c.b16 %v2304, %v2302
  %v2359 = vpack.c.b16 %v2305, %v2303
  %v2360 = vpack.c.b16 %v2308, %v2306
  %v2361 = vpack.c.b16 %v2309, %v2307
  %v2362 = vpack.c.b16 %v2312, %v2310
  %v2363 = vpack.c.b16 %v2313, %v2311
  %v2364 = vpack.c.b16 %v2316, %v2314
  %v2365 = vpack.c.b16 %v2317, %v2315
  %v2366 = vpack.c.b16 %v2320, %v2318
  %v2367 = vpack.c.b16 %v2321, %v2319
  %v2368 = vpack.c.b16 %v2324, %v2322
  %v2369 = vpack.c.b16 %v2325, %v2323
  %v2370 = vpack.c.b16 %v2328, %v2326
  %v2371 = vpack.c.b16 %v2329, %v2327
  %v2372 = vpack.c.b16 %v2332, %v2330
  %v2373 = vpack.c.b16 %v2333, %v2331
  %v2374 = vpack.c.b16 %v2336, %v2334
  %v2375 = vpack.c.b16 %v2337, %v2335
  %v2376 = vpack.c.b16 %v2340, %v2338
  %v2377 = vpack.c.b16 %v2341, %v2339
  %v2378 = vpack.c.b16 %v2344, %v2342
  %v2379 = vpack.c.b16 %v2345, %v2343
  %v2380 = vpack.c.b16 %v2348, %v2346
  %v2381 = vpack.c.b16 %v2349, %v2347
  %v2382 = vpack.c.b16 %v2352, %v2350
  %v2383 = vpack.c.b16 %v2353, %v2351
  %v2384 = vpack.c.b16 %v2354, %v2354
  %v2385 = vpack.c.b16 %v2355, %v2355
  %v2415 = vsel %vm1747, %v2238, 0
  %v2418 = vsel %vm1760, %v2384, 0
  %v2421 = vsel %vm1760, %v2385, 0
  %2423 = vmatpush.bf16.msra.mxu0 %v2370
  %2424 = vmatpush.bf16.msra.mxu0 %v2368
  %2425 = vmatpush.bf16.msra.mxu0 %v2366
  %2426 = vmatpush.bf16.msra.mxu0 %v2364
  %2427 = vmatpush.bf16.msra.mxu0 %v2362
  %2428 = vmatpush.bf16.msra.mxu0 %v2360
  %2429 = vmatpush.bf16.msra.mxu0 %v2358
  %2430 = vmatpush.bf16.msra.mxu0 %v2356
  %2431 = vmatmul.bf16.gmra.mxu0 %v1567
  %v2432 = vpop.f32.mrf.mxu0
  %v2433 = vadd.f32 0.0, %v2432
  %v2434 = vpop.f32.mrf.mxu0
  %v2435 = vadd.f32 0.0, %v2434
  %2436 = vmatmul.bf16.gmra.mxu0 %v1569
  %v2437 = vpop.f32.mrf.mxu0
  %v2438 = vadd.f32 0.0, %v2437
  %v2439 = vpop.f32.mrf.mxu0
  %v2440 = vadd.f32 0.0, %v2439
  %2441 = vmatmul.bf16.gmra.mxu0 %v1571
  %v2442 = vpop.f32.mrf.mxu0
  %v2443 = vadd.f32 0.0, %v2442
  %v2444 = vpop.f32.mrf.mxu0
  %v2445 = vadd.f32 0.0, %v2444
  %2446 = vmatmul.bf16.gmra.mxu0 %v2237
  %v2447 = vpop.f32.mrf.mxu0
  %v2448 = vadd.f32 0.0, %v2447
  %v2449 = vpop.f32.mrf.mxu0
  %v2450 = vadd.f32 0.0, %v2449
  %2451 = vdwg.mxu0
  %2452 = vmatpush.bf16.msra.mxu0 0
  %2453 = vmatpush.bf16.msra.mxu0 %v2418
  %2454 = vmatpush.bf16.msra.mxu0 %v2382
  %2455 = vmatpush.bf16.msra.mxu0 %v2380
  %2456 = vmatpush.bf16.msra.mxu0 %v2378
  %2457 = vmatpush.bf16.msra.mxu0 %v2376
  %2458 = vmatpush.bf16.msra.mxu0 %v2374
  %2459 = vmatpush.bf16.msra.mxu0 %v2372
  %2460 = vmatmul.bf16.gmra.mxu0 %v1752
  %v2461 = vpop.f32.mrf.mxu0
  %v2462 = vadd.f32 %v2433, %v2461
  %v2463 = vpop.f32.mrf.mxu0
  %v2464 = vadd.f32 %v2435, %v2463
  %2465 = vmatmul.bf16.gmra.mxu0 %v1755
  %v2466 = vpop.f32.mrf.mxu0
  %v2467 = vadd.f32 %v2438, %v2466
  %v2468 = vpop.f32.mrf.mxu0
  %v2469 = vadd.f32 %v2440, %v2468
  %2470 = vmatmul.bf16.gmra.mxu0 %v1758
  %v2471 = vpop.f32.mrf.mxu0
  %v2472 = vadd.f32 %v2443, %v2471
  %v2473 = vpop.f32.mrf.mxu0
  %v2474 = vadd.f32 %v2445, %v2473
  %2475 = vmatmul.bf16.gmra.mxu0 %v2415
  %v2476 = vpop.f32.mrf.mxu0
  %v2477 = vadd.f32 %v2448, %v2476
  %v2478 = vpop.f32.mrf.mxu0
  %v2479 = vadd.f32 %v2450, %v2478
  %2480 = vdwg.mxu0
  %2481 = vmatpush.bf16.msra.mxu0 %v2371
  %2482 = vmatpush.bf16.msra.mxu0 %v2369
  %2483 = vmatpush.bf16.msra.mxu0 %v2367
  %2484 = vmatpush.bf16.msra.mxu0 %v2365
  %2485 = vmatpush.bf16.msra.mxu0 %v2363
  %2486 = vmatpush.bf16.msra.mxu0 %v2361
  %2487 = vmatpush.bf16.msra.mxu0 %v2359
  %2488 = vmatpush.bf16.msra.mxu0 %v2357
  %2489 = vmatmul.bf16.gmra.mxu0 %v1567
  %v2490 = vpop.f32.mrf.mxu0
  %v2491 = vadd.f32 0.0, %v2490
  %v2492 = vpop.f32.mrf.mxu0
  %v2493 = vadd.f32 0.0, %v2492
  %2494 = vmatmul.bf16.gmra.mxu0 %v1569
  %v2495 = vpop.f32.mrf.mxu0
  %v2496 = vadd.f32 0.0, %v2495
  %v2497 = vpop.f32.mrf.mxu0
  %v2498 = vadd.f32 0.0, %v2497
  %2499 = vmatmul.bf16.gmra.mxu0 %v1571
  %v2500 = vpop.f32.mrf.mxu0
  %v2501 = vadd.f32 0.0, %v2500
  %v2502 = vpop.f32.mrf.mxu0
  %v2503 = vadd.f32 0.0, %v2502
  %2504 = vmatmul.bf16.gmra.mxu0 %v2237
  %v2505 = vpop.f32.mrf.mxu0
  %v2506 = vadd.f32 0.0, %v2505
  %v2507 = vpop.f32.mrf.mxu0
  %v2508 = vadd.f32 0.0, %v2507
  %2509 = vdwg.mxu0
  %2510 = vmatpush.bf16.msra.mxu0 0
  %2511 = vmatpush.bf16.msra.mxu0 %v2421
  %2512 = vmatpush.bf16.msra.mxu0 %v2383
  %2513 = vmatpush.bf16.msra.mxu0 %v2381
  %2514 = vmatpush.bf16.msra.mxu0 %v2379
  %2515 = vmatpush.bf16.msra.mxu0 %v2377
  %2516 = vmatpush.bf16.msra.mxu0 %v2375
  %2517 = vmatpush.bf16.msra.mxu0 %v2373
  %2518 = vmatmul.bf16.gmra.mxu0 %v1752
  %v2519 = vpop.f32.mrf.mxu0
  %v2520 = vadd.f32 %v2491, %v2519
  %v2521 = vpop.f32.mrf.mxu0
  %v2522 = vadd.f32 %v2493, %v2521
  %2523 = vmatmul.bf16.gmra.mxu0 %v1755
  %v2524 = vpop.f32.mrf.mxu0
  %v2525 = vadd.f32 %v2496, %v2524
  %v2526 = vpop.f32.mrf.mxu0
  %v2527 = vadd.f32 %v2498, %v2526
  %2528 = vmatmul.bf16.gmra.mxu0 %v1758
  %v2529 = vpop.f32.mrf.mxu0
  %v2530 = vadd.f32 %v2501, %v2529
  %v2531 = vpop.f32.mrf.mxu0
  %v2532 = vadd.f32 %v2503, %v2531
  %2533 = vmatmul.bf16.gmra.mxu0 %v2415
  %v2534 = vpop.f32.mrf.mxu0
  %v2535 = vadd.f32 %v2506, %v2534
  %v2536 = vpop.f32.mrf.mxu0
  %v2537 = vadd.f32 %v2508, %v2536
  %2538 = vdwg.mxu0
  %v2539 = vadd.f32 %v2221, %v2462
  %v2540 = vadd.f32 %v2222, %v2520
  %v2541 = vadd.f32 %v2223, %v2464
  %v2542 = vadd.f32 %v2224, %v2522
  %v2543 = vadd.f32 %v2225, %v2467
  %v2544 = vadd.f32 %v2226, %v2525
  %v2545 = vadd.f32 %v2227, %v2469
  %v2546 = vadd.f32 %v2228, %v2527
  %v2547 = vadd.f32 %v2229, %v2472
  %v2548 = vadd.f32 %v2230, %v2530
  %v2549 = vadd.f32 %v2231, %v2474
  %v2550 = vadd.f32 %v2232, %v2532
  %v2551 = vadd.f32 %v2233, %v2477
  %v2552 = vadd.f32 %v2234, %v2535
  %v2553 = vadd.f32 %v2235, %v2479
  %v2554 = vadd.f32 %v2236, %v2537
  %v2555 = vpack.c.bf16 %v1560, %v1558
  %v2556 = vpack.c.bf16 %v1561, %v1559
  %s2557 = scalar_lea.vmem %s3, 696
  %v2558 = vld [vmem:[%s2557] sm:$0xff]
  %v2559 = vld [vmem:[%s2557 + $0x8] sm:$0xff]
  %v2560 = vld [vmem:[%s2557 + $0x10] sm:$0xff]
  %v2561 = vld [vmem:[%s2557 + $0x18] sm:$0xff]
  %v2562 = vld [vmem:[%s2557 + $0x20] sm:$0xff]
  %v2563 = vld [vmem:[%s2557 + $0x28] sm:$0xff]
  %v2564 = vld [vmem:[%s2557 + $0x30] sm:$0xff]
  %v2565 = vld [vmem:[%s2557 + $0x38] sm:$0xff]
  %v2566 = vld [vmem:[%s2557 + $0x40] sm:$0xff]
  %v2567 = vld [vmem:[%s2557 + $0x48] sm:$0xff]
  %v2568 = vld [vmem:[%s2557 + $0x50] sm:$0xff]
  %v2569 = vld [vmem:[%s2557 + $0x58] sm:$0xff]
  %v2570 = vld [vmem:[%s2557 + $0x60] sm:$0xff]
  %v2571 = vld [vmem:[%s2557 + $0x68] sm:$0xff]
  %v2572 = vld [vmem:[%s2557 + $0x70] sm:$0xff]
  %v2573 = vld [vmem:[%s2557 + $0x78] sm:$0xff]
  %v2574 = vld [vmem:[%s2557 + $0x80] sm:$0xff]
  %v2575 = vld [vmem:[%s2557 + $0x88] sm:$0xff]
  %v2576 = vld [vmem:[%s2557 + $0x90] sm:$0xff]
  %v2577 = vld [vmem:[%s2557 + $0x98] sm:$0xff]
  %v2578 = vld [vmem:[%s2557 + $0xa0] sm:$0xff]
  %v2579 = vld [vmem:[%s2557 + $0xa8] sm:$0xff]
  %v2580 = vld [vmem:[%s2557 + $0xb0] sm:$0xff]
  %v2581 = vld [vmem:[%s2557 + $0xb8] sm:$0xff]
  %v2582 = vld [vmem:[%s2557 + $0xc0] sm:$0xff]
  %v2583 = vld [vmem:[%s2557 + $0xc8] sm:$0xff]
  %v2584 = vld [vmem:[%s2557 + $0xd0] sm:$0xff]
  %v2585 = vld [vmem:[%s2557 + $0xd8] sm:$0xff]
  %v2586 = vld [vmem:[%s2557 + $0xe0] sm:$0x77]
  %v2616 = vunpack.c.l.b16 %v2558
  %v2617 = vunpack.c.h.b16 %v2558
  %v2618 = vunpack.c.l.b16 %v2559
  %v2619 = vunpack.c.h.b16 %v2559
  %v2620 = vunpack.c.l.b16 %v2560
  %v2621 = vunpack.c.h.b16 %v2560
  %v2622 = vunpack.c.l.b16 %v2561
  %v2623 = vunpack.c.h.b16 %v2561
  %v2624 = vunpack.c.l.b16 %v2562
  %v2625 = vunpack.c.h.b16 %v2562
  %v2626 = vunpack.c.l.b16 %v2563
  %v2627 = vunpack.c.h.b16 %v2563
  %v2628 = vunpack.c.l.b16 %v2564
  %v2629 = vunpack.c.h.b16 %v2564
  %v2630 = vunpack.c.l.b16 %v2565
  %v2631 = vunpack.c.h.b16 %v2565
  %v2632 = vunpack.c.l.b16 %v2566
  %v2633 = vunpack.c.h.b16 %v2566
  %v2634 = vunpack.c.l.b16 %v2567
  %v2635 = vunpack.c.h.b16 %v2567
  %v2636 = vunpack.c.l.b16 %v2568
  %v2637 = vunpack.c.h.b16 %v2568
  %v2638 = vunpack.c.l.b16 %v2569
  %v2639 = vunpack.c.h.b16 %v2569
  %v2640 = vunpack.c.l.b16 %v2570
  %v2641 = vunpack.c.h.b16 %v2570
  %v2642 = vunpack.c.l.b16 %v2571
  %v2643 = vunpack.c.h.b16 %v2571
  %v2644 = vunpack.c.l.b16 %v2572
  %v2645 = vunpack.c.h.b16 %v2572
  %v2646 = vunpack.c.l.b16 %v2573
  %v2647 = vunpack.c.h.b16 %v2573
  %v2648 = vunpack.c.l.b16 %v2574
  %v2649 = vunpack.c.h.b16 %v2574
  %v2650 = vunpack.c.l.b16 %v2575
  %v2651 = vunpack.c.h.b16 %v2575
  %v2652 = vunpack.c.l.b16 %v2576
  %v2653 = vunpack.c.h.b16 %v2576
  %v2654 = vunpack.c.l.b16 %v2577
  %v2655 = vunpack.c.h.b16 %v2577
  %v2656 = vunpack.c.l.b16 %v2578
  %v2657 = vunpack.c.h.b16 %v2578
  %v2658 = vunpack.c.l.b16 %v2579
  %v2659 = vunpack.c.h.b16 %v2579
  %v2660 = vunpack.c.l.b16 %v2580
  %v2661 = vunpack.c.h.b16 %v2580
  %v2662 = vunpack.c.l.b16 %v2581
  %v2663 = vunpack.c.h.b16 %v2581
  %v2664 = vunpack.c.l.b16 %v2582
  %v2665 = vunpack.c.h.b16 %v2582
  %v2666 = vunpack.c.l.b16 %v2583
  %v2667 = vunpack.c.h.b16 %v2583
  %v2668 = vunpack.c.l.b16 %v2584
  %v2669 = vunpack.c.h.b16 %v2584
  %v2670 = vunpack.c.l.b16 %v2585
  %v2671 = vunpack.c.h.b16 %v2585
  %v2672 = vunpack.c.l.b16 %v2586
  %v2673 = vunpack.c.h.b16 %v2586
  %v2674 = vpack.c.b16 %v2618, %v2616
  %v2675 = vpack.c.b16 %v2619, %v2617
  %v2676 = vpack.c.b16 %v2622, %v2620
  %v2677 = vpack.c.b16 %v2623, %v2621
  %v2678 = vpack.c.b16 %v2626, %v2624
  %v2679 = vpack.c.b16 %v2627, %v2625
  %v2680 = vpack.c.b16 %v2630, %v2628
  %v2681 = vpack.c.b16 %v2631, %v2629
  %v2682 = vpack.c.b16 %v2634, %v2632
  %v2683 = vpack.c.b16 %v2635, %v2633
  %v2684 = vpack.c.b16 %v2638, %v2636
  %v2685 = vpack.c.b16 %v2639, %v2637
  %v2686 = vpack.c.b16 %v2642, %v2640
  %v2687 = vpack.c.b16 %v2643, %v2641
  %v2688 = vpack.c.b16 %v2646, %v2644
  %v2689 = vpack.c.b16 %v2647, %v2645
  %v2690 = vpack.c.b16 %v2650, %v2648
  %v2691 = vpack.c.b16 %v2651, %v2649
  %v2692 = vpack.c.b16 %v2654, %v2652
  %v2693 = vpack.c.b16 %v2655, %v2653
  %v2694 = vpack.c.b16 %v2658, %v2656
  %v2695 = vpack.c.b16 %v2659, %v2657
  %v2696 = vpack.c.b16 %v2662, %v2660
  %v2697 = vpack.c.b16 %v2663, %v2661
  %v2698 = vpack.c.b16 %v2666, %v2664
  %v2699 = vpack.c.b16 %v2667, %v2665
  %v2700 = vpack.c.b16 %v2670, %v2668
  %v2701 = vpack.c.b16 %v2671, %v2669
  %v2702 = vpack.c.b16 %v2672, %v2672
  %v2703 = vpack.c.b16 %v2673, %v2673
  %v2733 = vsel %vm1747, %v2556, 0
  %v2736 = vsel %vm1760, %v2702, 0
  %v2739 = vsel %vm1760, %v2703, 0
  %2741 = vmatpush.bf16.msra.mxu0 %v2688
  %2742 = vmatpush.bf16.msra.mxu0 %v2686
  %2743 = vmatpush.bf16.msra.mxu0 %v2684
  %2744 = vmatpush.bf16.msra.mxu0 %v2682
  %2745 = vmatpush.bf16.msra.mxu0 %v2680
  %2746 = vmatpush.bf16.msra.mxu0 %v2678
  %2747 = vmatpush.bf16.msra.mxu0 %v2676
  %2748 = vmatpush.bf16.msra.mxu0 %v2674
  %2749 = vmatmul.bf16.gmra.mxu0 %v1906
  %v2750 = vpop.f32.mrf.mxu0
  %v2751 = vadd.f32 0.0, %v2750
  %v2752 = vpop.f32.mrf.mxu0
  %v2753 = vadd.f32 0.0, %v2752
  %2754 = vmatmul.bf16.gmra.mxu0 %v1908
  %v2755 = vpop.f32.mrf.mxu0
  %v2756 = vadd.f32 0.0, %v2755
  %v2757 = vpop.f32.mrf.mxu0
  %v2758 = vadd.f32 0.0, %v2757
  %2759 = vmatmul.bf16.gmra.mxu0 %v1910
  %v2760 = vpop.f32.mrf.mxu0
  %v2761 = vadd.f32 0.0, %v2760
  %v2762 = vpop.f32.mrf.mxu0
  %v2763 = vadd.f32 0.0, %v2762
  %2764 = vmatmul.bf16.gmra.mxu0 %v2555
  %v2765 = vpop.f32.mrf.mxu0
  %v2766 = vadd.f32 0.0, %v2765
  %v2767 = vpop.f32.mrf.mxu0
  %v2768 = vadd.f32 0.0, %v2767
  %2769 = vdwg.mxu0
  %2770 = vmatpush.bf16.msra.mxu0 0
  %2771 = vmatpush.bf16.msra.mxu0 %v2736
  %2772 = vmatpush.bf16.msra.mxu0 %v2700
  %2773 = vmatpush.bf16.msra.mxu0 %v2698
  %2774 = vmatpush.bf16.msra.mxu0 %v2696
  %2775 = vmatpush.bf16.msra.mxu0 %v2694
  %2776 = vmatpush.bf16.msra.mxu0 %v2692
  %2777 = vmatpush.bf16.msra.mxu0 %v2690
  %2778 = vmatmul.bf16.gmra.mxu0 %v2091
  %v2779 = vpop.f32.mrf.mxu0
  %v2780 = vadd.f32 %v2751, %v2779
  %v2781 = vpop.f32.mrf.mxu0
  %v2782 = vadd.f32 %v2753, %v2781
  %2783 = vmatmul.bf16.gmra.mxu0 %v2094
  %v2784 = vpop.f32.mrf.mxu0
  %v2785 = vadd.f32 %v2756, %v2784
  %v2786 = vpop.f32.mrf.mxu0
  %v2787 = vadd.f32 %v2758, %v2786
  %2788 = vmatmul.bf16.gmra.mxu0 %v2097
  %v2789 = vpop.f32.mrf.mxu0
  %v2790 = vadd.f32 %v2761, %v2789
  %v2791 = vpop.f32.mrf.mxu0
  %v2792 = vadd.f32 %v2763, %v2791
  %2793 = vmatmul.bf16.gmra.mxu0 %v2733
  %v2794 = vpop.f32.mrf.mxu0
  %v2795 = vadd.f32 %v2766, %v2794
  %v2796 = vpop.f32.mrf.mxu0
  %v2797 = vadd.f32 %v2768, %v2796
  %2798 = vdwg.mxu0
  %2799 = vmatpush.bf16.msra.mxu0 %v2689
  %2800 = vmatpush.bf16.msra.mxu0 %v2687
  %2801 = vmatpush.bf16.msra.mxu0 %v2685
  %2802 = vmatpush.bf16.msra.mxu0 %v2683
  %2803 = vmatpush.bf16.msra.mxu0 %v2681
  %2804 = vmatpush.bf16.msra.mxu0 %v2679
  %2805 = vmatpush.bf16.msra.mxu0 %v2677
  %2806 = vmatpush.bf16.msra.mxu0 %v2675
  %2807 = vmatmul.bf16.gmra.mxu0 %v1906
  %v2808 = vpop.f32.mrf.mxu0
  %v2809 = vadd.f32 0.0, %v2808
  %v2810 = vpop.f32.mrf.mxu0
  %v2811 = vadd.f32 0.0, %v2810
  %2812 = vmatmul.bf16.gmra.mxu0 %v1908
  %v2813 = vpop.f32.mrf.mxu0
  %v2814 = vadd.f32 0.0, %v2813
  %v2815 = vpop.f32.mrf.mxu0
  %v2816 = vadd.f32 0.0, %v2815
  %2817 = vmatmul.bf16.gmra.mxu0 %v1910
  %v2818 = vpop.f32.mrf.mxu0
  %v2819 = vadd.f32 0.0, %v2818
  %v2820 = vpop.f32.mrf.mxu0
  %v2821 = vadd.f32 0.0, %v2820
  %2822 = vmatmul.bf16.gmra.mxu0 %v2555
  %v2823 = vpop.f32.mrf.mxu0
  %v2824 = vadd.f32 0.0, %v2823
  %v2825 = vpop.f32.mrf.mxu0
  %v2826 = vadd.f32 0.0, %v2825
  %2827 = vdwg.mxu0
  %2828 = vmatpush.bf16.msra.mxu0 0
  %2829 = vmatpush.bf16.msra.mxu0 %v2739
  %2830 = vmatpush.bf16.msra.mxu0 %v2701
  %2831 = vmatpush.bf16.msra.mxu0 %v2699
  %2832 = vmatpush.bf16.msra.mxu0 %v2697
  %2833 = vmatpush.bf16.msra.mxu0 %v2695
  %2834 = vmatpush.bf16.msra.mxu0 %v2693
  %2835 = vmatpush.bf16.msra.mxu0 %v2691
  %2836 = vmatmul.bf16.gmra.mxu0 %v2091
  %v2837 = vpop.f32.mrf.mxu0
  %v2838 = vadd.f32 %v2809, %v2837
  %v2839 = vpop.f32.mrf.mxu0
  %v2840 = vadd.f32 %v2811, %v2839
  %2841 = vmatmul.bf16.gmra.mxu0 %v2094
  %v2842 = vpop.f32.mrf.mxu0
  %v2843 = vadd.f32 %v2814, %v2842
  %v2844 = vpop.f32.mrf.mxu0
  %v2845 = vadd.f32 %v2816, %v2844
  %2846 = vmatmul.bf16.gmra.mxu0 %v2097
  %v2847 = vpop.f32.mrf.mxu0
  %v2848 = vadd.f32 %v2819, %v2847
  %v2849 = vpop.f32.mrf.mxu0
  %v2850 = vadd.f32 %v2821, %v2849
  %2851 = vmatmul.bf16.gmra.mxu0 %v2733
  %v2852 = vpop.f32.mrf.mxu0
  %v2853 = vadd.f32 %v2824, %v2852
  %v2854 = vpop.f32.mrf.mxu0
  %v2855 = vadd.f32 %v2826, %v2854
  %2856 = vdwg.mxu0
  %v2857 = vadd.f32 %v2539, %v2780
  %v2858 = vadd.f32 %v2540, %v2838
  %v2859 = vadd.f32 %v2541, %v2782
  %v2860 = vadd.f32 %v2542, %v2840
  %v2861 = vadd.f32 %v2543, %v2785
  %v2862 = vadd.f32 %v2544, %v2843
  %v2863 = vadd.f32 %v2545, %v2787
  %v2864 = vadd.f32 %v2546, %v2845
  %v2865 = vadd.f32 %v2547, %v2790
  %v2866 = vadd.f32 %v2548, %v2848
  %v2867 = vadd.f32 %v2549, %v2792
  %v2868 = vadd.f32 %v2550, %v2850
  %v2869 = vadd.f32 %v2551, %v2795
  %v2870 = vadd.f32 %v2552, %v2853
  %v2871 = vadd.f32 %v2553, %v2797
  %v2872 = vadd.f32 %v2554, %v2855
  %v2873 = vpack.c.bf16 %v1562, %v1560
  %v2874 = vpack.c.bf16 %v1563, %v1561
  %s2875 = scalar_lea.vmem %s3, 928
  %v2876 = vld [vmem:[%s2875] sm:$0xff]
  %v2877 = vld [vmem:[%s2875 + $0x8] sm:$0xff]
  %v2878 = vld [vmem:[%s2875 + $0x10] sm:$0xff]
  %v2879 = vld [vmem:[%s2875 + $0x18] sm:$0xff]
  %v2880 = vld [vmem:[%s2875 + $0x20] sm:$0xff]
  %v2881 = vld [vmem:[%s2875 + $0x28] sm:$0xff]
  %v2882 = vld [vmem:[%s2875 + $0x30] sm:$0xff]
  %v2883 = vld [vmem:[%s2875 + $0x38] sm:$0xff]
  %v2884 = vld [vmem:[%s2875 + $0x40] sm:$0xff]
  %v2885 = vld [vmem:[%s2875 + $0x48] sm:$0xff]
  %v2886 = vld [vmem:[%s2875 + $0x50] sm:$0xff]
  %v2887 = vld [vmem:[%s2875 + $0x58] sm:$0xff]
  %v2888 = vld [vmem:[%s2875 + $0x60] sm:$0xff]
  %v2889 = vld [vmem:[%s2875 + $0x68] sm:$0xff]
  %v2890 = vld [vmem:[%s2875 + $0x70] sm:$0xff]
  %v2891 = vld [vmem:[%s2875 + $0x78] sm:$0xff]
  %v2892 = vld [vmem:[%s2875 + $0x80] sm:$0xff]
  %v2893 = vld [vmem:[%s2875 + $0x88] sm:$0xff]
  %v2894 = vld [vmem:[%s2875 + $0x90] sm:$0xff]
  %v2895 = vld [vmem:[%s2875 + $0x98] sm:$0xff]
  %v2896 = vld [vmem:[%s2875 + $0xa0] sm:$0xff]
  %v2897 = vld [vmem:[%s2875 + $0xa8] sm:$0xff]
  %v2898 = vld [vmem:[%s2875 + $0xb0] sm:$0xff]
  %v2899 = vld [vmem:[%s2875 + $0xb8] sm:$0xff]
  %v2900 = vld [vmem:[%s2875 + $0xc0] sm:$0xff]
  %v2901 = vld [vmem:[%s2875 + $0xc8] sm:$0xff]
  %v2902 = vld [vmem:[%s2875 + $0xd0] sm:$0xff]
  %v2903 = vld [vmem:[%s2875 + $0xd8] sm:$0xff]
  %v2904 = vld [vmem:[%s2875 + $0xe0] sm:$0x77]
  %v2934 = vunpack.c.l.b16 %v2876
  %v2935 = vunpack.c.h.b16 %v2876
  %v2936 = vunpack.c.l.b16 %v2877
  %v2937 = vunpack.c.h.b16 %v2877
  %v2938 = vunpack.c.l.b16 %v2878
  %v2939 = vunpack.c.h.b16 %v2878
  %v2940 = vunpack.c.l.b16 %v2879
  %v2941 = vunpack.c.h.b16 %v2879
  %v2942 = vunpack.c.l.b16 %v2880
  %v2943 = vunpack.c.h.b16 %v2880
  %v2944 = vunpack.c.l.b16 %v2881
  %v2945 = vunpack.c.h.b16 %v2881
  %v2946 = vunpack.c.l.b16 %v2882
  %v2947 = vunpack.c.h.b16 %v2882
  %v2948 = vunpack.c.l.b16 %v2883
  %v2949 = vunpack.c.h.b16 %v2883
  %v2950 = vunpack.c.l.b16 %v2884
  %v2951 = vunpack.c.h.b16 %v2884
  %v2952 = vunpack.c.l.b16 %v2885
  %v2953 = vunpack.c.h.b16 %v2885
  %v2954 = vunpack.c.l.b16 %v2886
  %v2955 = vunpack.c.h.b16 %v2886
  %v2956 = vunpack.c.l.b16 %v2887
  %v2957 = vunpack.c.h.b16 %v2887
  %v2958 = vunpack.c.l.b16 %v2888
  %v2959 = vunpack.c.h.b16 %v2888
  %v2960 = vunpack.c.l.b16 %v2889
  %v2961 = vunpack.c.h.b16 %v2889
  %v2962 = vunpack.c.l.b16 %v2890
  %v2963 = vunpack.c.h.b16 %v2890
  %v2964 = vunpack.c.l.b16 %v2891
  %v2965 = vunpack.c.h.b16 %v2891
  %v2966 = vunpack.c.l.b16 %v2892
  %v2967 = vunpack.c.h.b16 %v2892
  %v2968 = vunpack.c.l.b16 %v2893
  %v2969 = vunpack.c.h.b16 %v2893
  %v2970 = vunpack.c.l.b16 %v2894
  %v2971 = vunpack.c.h.b16 %v2894
  %v2972 = vunpack.c.l.b16 %v2895
  %v2973 = vunpack.c.h.b16 %v2895
  %v2974 = vunpack.c.l.b16 %v2896
  %v2975 = vunpack.c.h.b16 %v2896
  %v2976 = vunpack.c.l.b16 %v2897
  %v2977 = vunpack.c.h.b16 %v2897
  %v2978 = vunpack.c.l.b16 %v2898
  %v2979 = vunpack.c.h.b16 %v2898
  %v2980 = vunpack.c.l.b16 %v2899
  %v2981 = vunpack.c.h.b16 %v2899
  %v2982 = vunpack.c.l.b16 %v2900
  %v2983 = vunpack.c.h.b16 %v2900
  %v2984 = vunpack.c.l.b16 %v2901
  %v2985 = vunpack.c.h.b16 %v2901
  %v2986 = vunpack.c.l.b16 %v2902
  %v2987 = vunpack.c.h.b16 %v2902
  %v2988 = vunpack.c.l.b16 %v2903
  %v2989 = vunpack.c.h.b16 %v2903
  %v2990 = vunpack.c.l.b16 %v2904
  %v2991 = vunpack.c.h.b16 %v2904
  %v2992 = vpack.c.b16 %v2936, %v2934
  %v2993 = vpack.c.b16 %v2937, %v2935
  %v2994 = vpack.c.b16 %v2940, %v2938
  %v2995 = vpack.c.b16 %v2941, %v2939
  %v2996 = vpack.c.b16 %v2944, %v2942
  %v2997 = vpack.c.b16 %v2945, %v2943
  %v2998 = vpack.c.b16 %v2948, %v2946
  %v2999 = vpack.c.b16 %v2949, %v2947
  %v3000 = vpack.c.b16 %v2952, %v2950
  %v3001 = vpack.c.b16 %v2953, %v2951
  %v3002 = vpack.c.b16 %v2956, %v2954
  %v3003 = vpack.c.b16 %v2957, %v2955
  %v3004 = vpack.c.b16 %v2960, %v2958
  %v3005 = vpack.c.b16 %v2961, %v2959
  %v3006 = vpack.c.b16 %v2964, %v2962
  %v3007 = vpack.c.b16 %v2965, %v2963
  %v3008 = vpack.c.b16 %v2968, %v2966
  %v3009 = vpack.c.b16 %v2969, %v2967
  %v3010 = vpack.c.b16 %v2972, %v2970
  %v3011 = vpack.c.b16 %v2973, %v2971
  %v3012 = vpack.c.b16 %v2976, %v2974
  %v3013 = vpack.c.b16 %v2977, %v2975
  %v3014 = vpack.c.b16 %v2980, %v2978
  %v3015 = vpack.c.b16 %v2981, %v2979
  %v3016 = vpack.c.b16 %v2984, %v2982
  %v3017 = vpack.c.b16 %v2985, %v2983
  %v3018 = vpack.c.b16 %v2988, %v2986
  %v3019 = vpack.c.b16 %v2989, %v2987
  %v3020 = vpack.c.b16 %v2990, %v2990
  %v3021 = vpack.c.b16 %v2991, %v2991
  %v3051 = vsel %vm1747, %v2874, 0
  %v3054 = vsel %vm1760, %v3020, 0
  %v3057 = vsel %vm1760, %v3021, 0
  %3059 = vmatpush.bf16.msra.mxu0 %v3006
  %3060 = vmatpush.bf16.msra.mxu0 %v3004
  %3061 = vmatpush.bf16.msra.mxu0 %v3002
  %3062 = vmatpush.bf16.msra.mxu0 %v3000
  %3063 = vmatpush.bf16.msra.mxu0 %v2998
  %3064 = vmatpush.bf16.msra.mxu0 %v2996
  %3065 = vmatpush.bf16.msra.mxu0 %v2994
  %3066 = vmatpush.bf16.msra.mxu0 %v2992
  %3067 = vmatmul.bf16.gmra.mxu0 %v1569
  %v3068 = vpop.f32.mrf.mxu0
  %v3069 = vadd.f32 0.0, %v3068
  %v3070 = vpop.f32.mrf.mxu0
  %v3071 = vadd.f32 0.0, %v3070
  %3072 = vmatmul.bf16.gmra.mxu0 %v1571
  %v3073 = vpop.f32.mrf.mxu0
  %v3074 = vadd.f32 0.0, %v3073
  %v3075 = vpop.f32.mrf.mxu0
  %v3076 = vadd.f32 0.0, %v3075
  %3077 = vmatmul.bf16.gmra.mxu0 %v2237
  %v3078 = vpop.f32.mrf.mxu0
  %v3079 = vadd.f32 0.0, %v3078
  %v3080 = vpop.f32.mrf.mxu0
  %v3081 = vadd.f32 0.0, %v3080
  %3082 = vmatmul.bf16.gmra.mxu0 %v2873
  %v3083 = vpop.f32.mrf.mxu0
  %v3084 = vadd.f32 0.0, %v3083
  %v3085 = vpop.f32.mrf.mxu0
  %v3086 = vadd.f32 0.0, %v3085
  %3087 = vdwg.mxu0
  %3088 = vmatpush.bf16.msra.mxu0 0
  %3089 = vmatpush.bf16.msra.mxu0 %v3054
  %3090 = vmatpush.bf16.msra.mxu0 %v3018
  %3091 = vmatpush.bf16.msra.mxu0 %v3016
  %3092 = vmatpush.bf16.msra.mxu0 %v3014
  %3093 = vmatpush.bf16.msra.mxu0 %v3012
  %3094 = vmatpush.bf16.msra.mxu0 %v3010
  %3095 = vmatpush.bf16.msra.mxu0 %v3008
  %3096 = vmatmul.bf16.gmra.mxu0 %v1755
  %v3097 = vpop.f32.mrf.mxu0
  %v3098 = vadd.f32 %v3069, %v3097
  %v3099 = vpop.f32.mrf.mxu0
  %v3100 = vadd.f32 %v3071, %v3099
  %3101 = vmatmul.bf16.gmra.mxu0 %v1758
  %v3102 = vpop.f32.mrf.mxu0
  %v3103 = vadd.f32 %v3074, %v3102
  %v3104 = vpop.f32.mrf.mxu0
  %v3105 = vadd.f32 %v3076, %v3104
  %3106 = vmatmul.bf16.gmra.mxu0 %v2415
  %v3107 = vpop.f32.mrf.mxu0
  %v3108 = vadd.f32 %v3079, %v3107
  %v3109 = vpop.f32.mrf.mxu0
  %v3110 = vadd.f32 %v3081, %v3109
  %3111 = vmatmul.bf16.gmra.mxu0 %v3051
  %v3112 = vpop.f32.mrf.mxu0
  %v3113 = vadd.f32 %v3084, %v3112
  %v3114 = vpop.f32.mrf.mxu0
  %v3115 = vadd.f32 %v3086, %v3114
  %3116 = vdwg.mxu0
  %3117 = vmatpush.bf16.msra.mxu0 %v3007
  %3118 = vmatpush.bf16.msra.mxu0 %v3005
  %3119 = vmatpush.bf16.msra.mxu0 %v3003
  %3120 = vmatpush.bf16.msra.mxu0 %v3001
  %3121 = vmatpush.bf16.msra.mxu0 %v2999
  %3122 = vmatpush.bf16.msra.mxu0 %v2997
  %3123 = vmatpush.bf16.msra.mxu0 %v2995
  %3124 = vmatpush.bf16.msra.mxu0 %v2993
  %3125 = vmatmul.bf16.gmra.mxu0 %v1569
  %v3126 = vpop.f32.mrf.mxu0
  %v3127 = vadd.f32 0.0, %v3126
  %v3128 = vpop.f32.mrf.mxu0
  %v3129 = vadd.f32 0.0, %v3128
  %3130 = vmatmul.bf16.gmra.mxu0 %v1571
  %v3131 = vpop.f32.mrf.mxu0
  %v3132 = vadd.f32 0.0, %v3131
  %v3133 = vpop.f32.mrf.mxu0
  %v3134 = vadd.f32 0.0, %v3133
  %3135 = vmatmul.bf16.gmra.mxu0 %v2237
  %v3136 = vpop.f32.mrf.mxu0
  %v3137 = vadd.f32 0.0, %v3136
  %v3138 = vpop.f32.mrf.mxu0
  %v3139 = vadd.f32 0.0, %v3138
  %3140 = vmatmul.bf16.gmra.mxu0 %v2873
  %v3141 = vpop.f32.mrf.mxu0
  %v3142 = vadd.f32 0.0, %v3141
  %v3143 = vpop.f32.mrf.mxu0
  %v3144 = vadd.f32 0.0, %v3143
  %3145 = vdwg.mxu0
  %3146 = vmatpush.bf16.msra.mxu0 0
  %3147 = vmatpush.bf16.msra.mxu0 %v3057
  %3148 = vmatpush.bf16.msra.mxu0 %v3019
  %3149 = vmatpush.bf16.msra.mxu0 %v3017
  %3150 = vmatpush.bf16.msra.mxu0 %v3015
  %3151 = vmatpush.bf16.msra.mxu0 %v3013
  %3152 = vmatpush.bf16.msra.mxu0 %v3011
  %3153 = vmatpush.bf16.msra.mxu0 %v3009
  %3154 = vmatmul.bf16.gmra.mxu0 %v1755
  %v3155 = vpop.f32.mrf.mxu0
  %v3156 = vadd.f32 %v3127, %v3155
  %v3157 = vpop.f32.mrf.mxu0
  %v3158 = vadd.f32 %v3129, %v3157
  %3159 = vmatmul.bf16.gmra.mxu0 %v1758
  %v3160 = vpop.f32.mrf.mxu0
  %v3161 = vadd.f32 %v3132, %v3160
  %v3162 = vpop.f32.mrf.mxu0
  %v3163 = vadd.f32 %v3134, %v3162
  %3164 = vmatmul.bf16.gmra.mxu0 %v2415
  %v3165 = vpop.f32.mrf.mxu0
  %v3166 = vadd.f32 %v3137, %v3165
  %v3167 = vpop.f32.mrf.mxu0
  %v3168 = vadd.f32 %v3139, %v3167
  %3169 = vmatmul.bf16.gmra.mxu0 %v3051
  %v3170 = vpop.f32.mrf.mxu0
  %v3171 = vadd.f32 %v3142, %v3170
  %v3172 = vpop.f32.mrf.mxu0
  %v3173 = vadd.f32 %v3144, %v3172
  %3174 = vdwg.mxu0
  %v3175 = vadd.f32 %v2857, %v3098
  %v3176 = vadd.f32 %v2858, %v3156
  %v3177 = vadd.f32 %v2859, %v3100
  %v3178 = vadd.f32 %v2860, %v3158
  %v3179 = vadd.f32 %v2861, %v3103
  %v3180 = vadd.f32 %v2862, %v3161
  %v3181 = vadd.f32 %v2863, %v3105
  %v3182 = vadd.f32 %v2864, %v3163
  %v3183 = vadd.f32 %v2865, %v3108
  %v3184 = vadd.f32 %v2866, %v3166
  %v3185 = vadd.f32 %v2867, %v3110
  %v3186 = vadd.f32 %v2868, %v3168
  %v3187 = vadd.f32 %v2869, %v3113
  %v3188 = vadd.f32 %v2870, %v3171
  %v3189 = vadd.f32 %v2871, %v3115
  %v3190 = vadd.f32 %v2872, %v3173
  %3207 = vrot.lane.b32.xlu0 %v3175, 108
  %v3208 = vpop.permute.xlu0 %3207
  %3209 = vrot.lane.b32.xlu0 %v3176, 108
  %v3210 = vpop.permute.xlu0 %3209
  %3211 = vrot.lane.b32.xlu0 %v3177, 108
  %v3212 = vpop.permute.xlu0 %3211
  %3213 = vrot.lane.b32.xlu0 %v3178, 108
  %v3214 = vpop.permute.xlu0 %3213
  %3215 = vrot.lane.b32.xlu0 %v3179, 108
  %v3216 = vpop.permute.xlu0 %3215
  %3217 = vrot.lane.b32.xlu0 %v3180, 108
  %v3218 = vpop.permute.xlu0 %3217
  %3219 = vrot.lane.b32.xlu0 %v3181, 108
  %v3220 = vpop.permute.xlu0 %3219
  %3221 = vrot.lane.b32.xlu0 %v3182, 108
  %v3222 = vpop.permute.xlu0 %3221
  %3223 = vrot.lane.b32.xlu0 %v3183, 108
  %v3224 = vpop.permute.xlu0 %3223
  %3225 = vrot.lane.b32.xlu0 %v3184, 108
  %v3226 = vpop.permute.xlu0 %3225
  %3227 = vrot.lane.b32.xlu0 %v3185, 108
  %v3228 = vpop.permute.xlu0 %3227
  %3229 = vrot.lane.b32.xlu0 %v3186, 108
  %v3230 = vpop.permute.xlu0 %3229
  %3231 = vrot.lane.b32.xlu0 %v3187, 108
  %v3232 = vpop.permute.xlu0 %3231
  %3233 = vrot.lane.b32.xlu0 %v3188, 108
  %v3234 = vpop.permute.xlu0 %3233
  %3235 = vrot.lane.b32.xlu0 %v3189, 108
  %v3236 = vpop.permute.xlu0 %3235
  %3237 = vrot.lane.b32.xlu0 %v3190, 108
  %v3238 = vpop.permute.xlu0 %3237
  %vm3239 = vcmask 883712
  %v3240 = vsel %vm3239, %v3208, %v3210
  %v3241 = vsel %vm3239, %v3212, %v3214
  %v3242 = vsel %vm3239, %v3216, %v3218
  %v3243 = vsel %vm3239, %v3220, %v3222
  %v3244 = vsel %vm3239, %v3224, %v3226
  %v3245 = vsel %vm3239, %v3228, %v3230
  %v3246 = vsel %vm3239, %v3232, %v3234
  %v3247 = vsel %vm3239, %v3236, %v3238
  %v3264 = vmax.f32 %v3175, %v3240
  %v3265 = vmax.f32 %v3176, %v3210
  %v3266 = vmax.f32 %v3177, %v3241
  %v3267 = vmax.f32 %v3178, %v3214
  %v3268 = vmax.f32 %v3179, %v3242
  %v3269 = vmax.f32 %v3180, %v3218
  %v3270 = vmax.f32 %v3181, %v3243
  %v3271 = vmax.f32 %v3182, %v3222
  %v3272 = vmax.f32 %v3183, %v3244
  %v3273 = vmax.f32 %v3184, %v3226
  %v3274 = vmax.f32 %v3185, %v3245
  %v3275 = vmax.f32 %v3186, %v3230
  %v3276 = vmax.f32 %v3187, %v3246
  %v3277 = vmax.f32 %v3188, %v3234
  %v3278 = vmax.f32 %v3189, %v3247
  %v3279 = vmax.f32 %v3190, %v3238
  %v3280 = vmax.f32 %v3264, %v3266
  %v3281 = vmax.f32 %v3265, %v3267
  %v3282 = vmax.f32 %v3268, %v3270
  %v3283 = vmax.f32 %v3269, %v3271
  %v3284 = vmax.f32 %v3272, %v3274
  %v3285 = vmax.f32 %v3273, %v3275
  %v3286 = vmax.f32 %v3276, %v3278
  %v3287 = vmax.f32 %v3277, %v3279
  %v3288 = vmax.f32 %v3280, 0.0
  %v3289 = vmax.f32 %v3281, 0.0
  %v3290 = vmax.f32 %v3282, 0.0
  %v3291 = vmax.f32 %v3283, 0.0
  %v3292 = vmax.f32 %v3284, 0.0
  %v3293 = vmax.f32 %v3285, 0.0
  %v3294 = vmax.f32 %v3286, 0.0
  %v3295 = vmax.f32 %v3287, 0.0
  %v3296 = vld [vmem:[%s6] sm:$0x1]
  %v3297 = vld [vmem:[%s5] sm:$0xff]
  %v3298 = vld [vmem:[%s5 + $0x8] sm:$0xff]
  %v3299 = vld [vmem:[%s5 + $0x10] sm:$0xff]
  %v3300 = vld [vmem:[%s5 + $0x18] sm:$0xff]
  %v3301 = vld [vmem:[%s5 + $0x20] sm:$0xff]
  %v3302 = vld [vmem:[%s5 + $0x28] sm:$0xff]
  %v3303 = vld [vmem:[%s5 + $0x30] sm:$0xff]
  %v3304 = vld [vmem:[%s5 + $0x38] sm:$0xff]
  %v3305 = vld [vmem:[%s5 + $0x40] sm:$0xff]
  %v3306 = vld [vmem:[%s5 + $0x48] sm:$0xff]
  %v3307 = vld [vmem:[%s5 + $0x50] sm:$0xff]
  %v3308 = vld [vmem:[%s5 + $0x58] sm:$0xff]
  %v3309 = vld [vmem:[%s5 + $0x60] sm:$0xff]
  %v3310 = vld [vmem:[%s5 + $0x68] sm:$0xff]
  %v3311 = vld [vmem:[%s5 + $0x70] sm:$0xff]
  %v3312 = vld [vmem:[%s5 + $0x78] sm:$0xff]
  %v3313 = vld [vmem:[%s5 + $0x80] sm:$0xff]
  %v3314 = vld [vmem:[%s5 + $0x88] sm:$0xf]
  %vm3315 = vcmask 97280
  %v3317 = vsel %vm3315, %v3289, 0
  %vm3319 = vcmask 1043456
  %v3321 = vsel %vm3319, %v3314, 0
  %3323 = vmatpush.msra.mxu0 %v3312
  %3324 = vmatpush.msra.mxu0 %v3311
  %3325 = vmatpush.msra.mxu0 %v3310
  %3326 = vmatpush.msra.mxu0 %v3309
  %3327 = vmatpush.msra.mxu0 %v3308
  %3328 = vmatpush.msra.mxu0 %v3307
  %3329 = vmatpush.msra.mxu0 %v3306
  %3330 = vmatpush.msra.mxu0 %v3305
  %3331 = vmatpush.msra.mxu0 %v3304
  %3332 = vmatpush.msra.mxu0 %v3303
  %3333 = vmatpush.msra.mxu0 %v3302
  %3334 = vmatpush.msra.mxu0 %v3301
  %3335 = vmatpush.msra.mxu0 %v3300
  %3336 = vmatpush.msra.mxu0 %v3299
  %3337 = vmatpush.msra.mxu0 %v3298
  %3338 = vmatpush.msra.mxu0 %v3297
  %3339 = vmatmul.f32.gmra.mxu0 %v3288
  %v3340 = vpop.f32.mrf.mxu0
  %v3341 = vadd.f32 0.0, %v3340
  %3342 = vdwg.mxu0
  %3343 = vmatpush.msra.mxu0 0.0
  %3344 = vmatpush.msra.mxu0 0.0
  %3345 = vmatpush.msra.mxu0 0.0
  %3346 = vmatpush.msra.mxu0 0.0
  %3347 = vmatpush.msra.mxu0 0.0
  %3348 = vmatpush.msra.mxu0 0.0
  %3349 = vmatpush.msra.mxu0 0.0
  %3350 = vmatpush.msra.mxu0 0.0
  %3351 = vmatpush.msra.mxu0 0.0
  %3352 = vmatpush.msra.mxu0 0.0
  %3353 = vmatpush.msra.mxu0 0.0
  %3354 = vmatpush.msra.mxu0 0.0
  %3355 = vmatpush.msra.mxu0 0.0
  %3356 = vmatpush.msra.mxu0 0.0
  %3357 = vmatpush.msra.mxu0 %v3321
  %3358 = vmatpush.msra.mxu0 %v3313
  %3359 = vmatmul.f32.gmra.mxu0 %v3317
  %v3360 = vpop.f32.mrf.mxu0
  %v3361 = vadd.f32 %v3341, %v3360
  %3362 = vdwg.mxu0
  %v3364 = vperm.slane %v3296, 0
  %v3366 = vadd.f32 %v3364, %v3361
  %s3367 = scalar_lea.vmem %s5, 144
  %v3368 = vld [vmem:[%s3367] sm:$0xff]
  %v3369 = vld [vmem:[%s3367 + $0x8] sm:$0xff]
  %v3370 = vld [vmem:[%s3367 + $0x10] sm:$0xff]
  %v3371 = vld [vmem:[%s3367 + $0x18] sm:$0xff]
  %v3372 = vld [vmem:[%s3367 + $0x20] sm:$0xff]
  %v3373 = vld [vmem:[%s3367 + $0x28] sm:$0xff]
  %v3374 = vld [vmem:[%s3367 + $0x30] sm:$0xff]
  %v3375 = vld [vmem:[%s3367 + $0x38] sm:$0xff]
  %v3376 = vld [vmem:[%s3367 + $0x40] sm:$0xff]
  %v3377 = vld [vmem:[%s3367 + $0x48] sm:$0xff]
  %v3378 = vld [vmem:[%s3367 + $0x50] sm:$0xff]
  %v3379 = vld [vmem:[%s3367 + $0x58] sm:$0xff]
  %v3380 = vld [vmem:[%s3367 + $0x60] sm:$0xff]
  %v3381 = vld [vmem:[%s3367 + $0x68] sm:$0xff]
  %v3382 = vld [vmem:[%s3367 + $0x70] sm:$0xff]
  %v3383 = vld [vmem:[%s3367 + $0x78] sm:$0xff]
  %v3384 = vld [vmem:[%s3367 + $0x80] sm:$0xff]
  %v3385 = vld [vmem:[%s3367 + $0x88] sm:$0xf]
  %v3387 = vsel %vm3315, %v3291, 0
  %v3390 = vsel %vm3319, %v3385, 0
  %3392 = vmatpush.msra.mxu0 %v3383
  %3393 = vmatpush.msra.mxu0 %v3382
  %3394 = vmatpush.msra.mxu0 %v3381
  %3395 = vmatpush.msra.mxu0 %v3380
  %3396 = vmatpush.msra.mxu0 %v3379
  %3397 = vmatpush.msra.mxu0 %v3378
  %3398 = vmatpush.msra.mxu0 %v3377
  %3399 = vmatpush.msra.mxu0 %v3376
  %3400 = vmatpush.msra.mxu0 %v3375
  %3401 = vmatpush.msra.mxu0 %v3374
  %3402 = vmatpush.msra.mxu0 %v3373
  %3403 = vmatpush.msra.mxu0 %v3372
  %3404 = vmatpush.msra.mxu0 %v3371
  %3405 = vmatpush.msra.mxu0 %v3370
  %3406 = vmatpush.msra.mxu0 %v3369
  %3407 = vmatpush.msra.mxu0 %v3368
  %3408 = vmatmul.f32.gmra.mxu0 %v3290
  %v3409 = vpop.f32.mrf.mxu0
  %v3410 = vadd.f32 0.0, %v3409
  %3411 = vdwg.mxu0
  %3412 = vmatpush.msra.mxu0 0.0
  %3413 = vmatpush.msra.mxu0 0.0
  %3414 = vmatpush.msra.mxu0 0.0
  %3415 = vmatpush.msra.mxu0 0.0
  %3416 = vmatpush.msra.mxu0 0.0
  %3417 = vmatpush.msra.mxu0 0.0
  %3418 = vmatpush.msra.mxu0 0.0
  %3419 = vmatpush.msra.mxu0 0.0
  %3420 = vmatpush.msra.mxu0 0.0
  %3421 = vmatpush.msra.mxu0 0.0
  %3422 = vmatpush.msra.mxu0 0.0
  %3423 = vmatpush.msra.mxu0 0.0
  %3424 = vmatpush.msra.mxu0 0.0
  %3425 = vmatpush.msra.mxu0 0.0
  %3426 = vmatpush.msra.mxu0 %v3390
  %3427 = vmatpush.msra.mxu0 %v3384
  %3428 = vmatmul.f32.gmra.mxu0 %v3387
  %v3429 = vpop.f32.mrf.mxu0
  %v3430 = vadd.f32 %v3410, %v3429
  %3431 = vdwg.mxu0
  %v3432 = vadd.f32 %v3366, %v3430
  %s3433 = scalar_lea.vmem %s5, 288
  %v3434 = vld [vmem:[%s3433] sm:$0xff]
  %v3435 = vld [vmem:[%s3433 + $0x8] sm:$0xff]
  %v3436 = vld [vmem:[%s3433 + $0x10] sm:$0xff]
  %v3437 = vld [vmem:[%s3433 + $0x18] sm:$0xff]
  %v3438 = vld [vmem:[%s3433 + $0x20] sm:$0xff]
  %v3439 = vld [vmem:[%s3433 + $0x28] sm:$0xff]
  %v3440 = vld [vmem:[%s3433 + $0x30] sm:$0xff]
  %v3441 = vld [vmem:[%s3433 + $0x38] sm:$0xff]
  %v3442 = vld [vmem:[%s3433 + $0x40] sm:$0xff]
  %v3443 = vld [vmem:[%s3433 + $0x48] sm:$0xff]
  %v3444 = vld [vmem:[%s3433 + $0x50] sm:$0xff]
  %v3445 = vld [vmem:[%s3433 + $0x58] sm:$0xff]
  %v3446 = vld [vmem:[%s3433 + $0x60] sm:$0xff]
  %v3447 = vld [vmem:[%s3433 + $0x68] sm:$0xff]
  %v3448 = vld [vmem:[%s3433 + $0x70] sm:$0xff]
  %v3449 = vld [vmem:[%s3433 + $0x78] sm:$0xff]
  %v3450 = vld [vmem:[%s3433 + $0x80] sm:$0xff]
  %v3451 = vld [vmem:[%s3433 + $0x88] sm:$0xf]
  %v3453 = vsel %vm3315, %v3293, 0
  %v3456 = vsel %vm3319, %v3451, 0
  %3458 = vmatpush.msra.mxu0 %v3449
  %3459 = vmatpush.msra.mxu0 %v3448
  %3460 = vmatpush.msra.mxu0 %v3447
  %3461 = vmatpush.msra.mxu0 %v3446
  %3462 = vmatpush.msra.mxu0 %v3445
  %3463 = vmatpush.msra.mxu0 %v3444
  %3464 = vmatpush.msra.mxu0 %v3443
  %3465 = vmatpush.msra.mxu0 %v3442
  %3466 = vmatpush.msra.mxu0 %v3441
  %3467 = vmatpush.msra.mxu0 %v3440
  %3468 = vmatpush.msra.mxu0 %v3439
  %3469 = vmatpush.msra.mxu0 %v3438
  %3470 = vmatpush.msra.mxu0 %v3437
  %3471 = vmatpush.msra.mxu0 %v3436
  %3472 = vmatpush.msra.mxu0 %v3435
  %3473 = vmatpush.msra.mxu0 %v3434
  %3474 = vmatmul.f32.gmra.mxu0 %v3292
  %v3475 = vpop.f32.mrf.mxu0
  %v3476 = vadd.f32 0.0, %v3475
  %3477 = vdwg.mxu0
  %3478 = vmatpush.msra.mxu0 0.0
  %3479 = vmatpush.msra.mxu0 0.0
  %3480 = vmatpush.msra.mxu0 0.0
  %3481 = vmatpush.msra.mxu0 0.0
  %3482 = vmatpush.msra.mxu0 0.0
  %3483 = vmatpush.msra.mxu0 0.0
  %3484 = vmatpush.msra.mxu0 0.0
  %3485 = vmatpush.msra.mxu0 0.0
  %3486 = vmatpush.msra.mxu0 0.0
  %3487 = vmatpush.msra.mxu0 0.0
  %3488 = vmatpush.msra.mxu0 0.0
  %3489 = vmatpush.msra.mxu0 0.0
  %3490 = vmatpush.msra.mxu0 0.0
  %3491 = vmatpush.msra.mxu0 0.0
  %3492 = vmatpush.msra.mxu0 %v3456
  %3493 = vmatpush.msra.mxu0 %v3450
  %3494 = vmatmul.f32.gmra.mxu0 %v3453
  %v3495 = vpop.f32.mrf.mxu0
  %v3496 = vadd.f32 %v3476, %v3495
  %3497 = vdwg.mxu0
  %v3498 = vadd.f32 %v3432, %v3496
  %s3499 = scalar_lea.vmem %s5, 432
  %v3500 = vld [vmem:[%s3499] sm:$0xff]
  %v3501 = vld [vmem:[%s3499 + $0x8] sm:$0xff]
  %v3502 = vld [vmem:[%s3499 + $0x10] sm:$0xff]
  %v3503 = vld [vmem:[%s3499 + $0x18] sm:$0xff]
  %v3504 = vld [vmem:[%s3499 + $0x20] sm:$0xff]
  %v3505 = vld [vmem:[%s3499 + $0x28] sm:$0xff]
  %v3506 = vld [vmem:[%s3499 + $0x30] sm:$0xff]
  %v3507 = vld [vmem:[%s3499 + $0x38] sm:$0xff]
  %v3508 = vld [vmem:[%s3499 + $0x40] sm:$0xff]
  %v3509 = vld [vmem:[%s3499 + $0x48] sm:$0xff]
  %v3510 = vld [vmem:[%s3499 + $0x50] sm:$0xff]
  %v3511 = vld [vmem:[%s3499 + $0x58] sm:$0xff]
  %v3512 = vld [vmem:[%s3499 + $0x60] sm:$0xff]
  %v3513 = vld [vmem:[%s3499 + $0x68] sm:$0xff]
  %v3514 = vld [vmem:[%s3499 + $0x70] sm:$0xff]
  %v3515 = vld [vmem:[%s3499 + $0x78] sm:$0xff]
  %v3516 = vld [vmem:[%s3499 + $0x80] sm:$0xff]
  %v3517 = vld [vmem:[%s3499 + $0x88] sm:$0xf]
  %v3519 = vsel %vm3315, %v3295, 0
  %v3522 = vsel %vm3319, %v3517, 0
  %3524 = vmatpush.msra.mxu0 %v3515
  %3525 = vmatpush.msra.mxu0 %v3514
  %3526 = vmatpush.msra.mxu0 %v3513
  %3527 = vmatpush.msra.mxu0 %v3512
  %3528 = vmatpush.msra.mxu0 %v3511
  %3529 = vmatpush.msra.mxu0 %v3510
  %3530 = vmatpush.msra.mxu0 %v3509
  %3531 = vmatpush.msra.mxu0 %v3508
  %3532 = vmatpush.msra.mxu0 %v3507
  %3533 = vmatpush.msra.mxu0 %v3506
  %3534 = vmatpush.msra.mxu0 %v3505
  %3535 = vmatpush.msra.mxu0 %v3504
  %3536 = vmatpush.msra.mxu0 %v3503
  %3537 = vmatpush.msra.mxu0 %v3502
  %3538 = vmatpush.msra.mxu0 %v3501
  %3539 = vmatpush.msra.mxu0 %v3500
  %3540 = vmatmul.f32.gmra.mxu0 %v3294
  %v3541 = vpop.f32.mrf.mxu0
  %v3542 = vadd.f32 0.0, %v3541
  %3543 = vdwg.mxu0
  %3544 = vmatpush.msra.mxu0 0.0
  %3545 = vmatpush.msra.mxu0 0.0
  %3546 = vmatpush.msra.mxu0 0.0
  %3547 = vmatpush.msra.mxu0 0.0
  %3548 = vmatpush.msra.mxu0 0.0
  %3549 = vmatpush.msra.mxu0 0.0
  %3550 = vmatpush.msra.mxu0 0.0
  %3551 = vmatpush.msra.mxu0 0.0
  %3552 = vmatpush.msra.mxu0 0.0
  %3553 = vmatpush.msra.mxu0 0.0
  %3554 = vmatpush.msra.mxu0 0.0
  %3555 = vmatpush.msra.mxu0 0.0
  %3556 = vmatpush.msra.mxu0 0.0
  %3557 = vmatpush.msra.mxu0 0.0
  %3558 = vmatpush.msra.mxu0 %v3522
  %3559 = vmatpush.msra.mxu0 %v3516
  %3560 = vmatmul.f32.gmra.mxu0 %v3519
  %v3561 = vpop.f32.mrf.mxu0
  %v3562 = vadd.f32 %v3542, %v3561
  %3563 = vdwg.mxu0
  %v3564 = vadd.f32 %v3498, %v3562
  %v3565 = vmax.f32 %v3564, 0.0
  %v3566 = vld [vmem:[%s7] sm:$0xff]
  %v3567 = vld [vmem:[%s7 + $0x8] sm:$0xff]
  %v3568 = vld [vmem:[%s7 + $0x10] sm:$0xff]
  %v3569 = vld [vmem:[%s7 + $0x18] sm:$0xff]
  %v3570 = vld [vmem:[%s7 + $0x20] sm:$0xff]
  %v3571 = vld [vmem:[%s7 + $0x28] sm:$0xff]
  %v3572 = vld [vmem:[%s7 + $0x30] sm:$0x3]
  %v3573 = vld [vmem:[%s8] sm:$0x1]
  %v3575 = vperm.slane %v3573, 0
  %vm3577 = vcmask 408576
  %v3579 = vsel %vm3577, %v3565, 0
  %vm3581 = vcmask 1041408
  %v3583 = vsel %vm3581, %v3572, 0
  %3585 = vmatpush.msra.mxu0 0.0
  %3586 = vmatpush.msra.mxu0 0.0
  %3587 = vmatpush.msra.mxu0 0.0
  %3588 = vmatpush.msra.mxu0 0.0
  %3589 = vmatpush.msra.mxu0 0.0
  %3590 = vmatpush.msra.mxu0 0.0
  %3591 = vmatpush.msra.mxu0 0.0
  %3592 = vmatpush.msra.mxu0 0.0
  %3593 = vmatpush.msra.mxu0 0.0
  %3594 = vmatpush.msra.mxu0 %v3583
  %3595 = vmatpush.msra.mxu0 %v3571
  %3596 = vmatpush.msra.mxu0 %v3570
  %3597 = vmatpush.msra.mxu0 %v3569
  %3598 = vmatpush.msra.mxu0 %v3568
  %3599 = vmatpush.msra.mxu0 %v3567
  %3600 = vmatpush.msra.mxu0 %v3566
  %3601 = vmatmul.f32.gmra.mxu0 %v3579
  %v3602 = vpop.f32.mrf.mxu0
  %v3603 = vadd.f32 %v3575, %v3602
  %3604 = vdwg.mxu0
  %vm3605 = vcmask 80896
  %v3606 = vsel %vm3605, %v3603, -inf
  %3607 = vmax.xlane.f32.xlu0 %v3606
  %v3608 = vpop.xlane.xlu0 %3607
  %v3609 = vsub.f32 %v3603, %v3608
  %v3610 = vmul.f32 %v3609, 1.442695
  %v3611 = vpow.pop %v3610
  %v3612 = vsel %vm3605, %v3611, 0.0
  %3613 = vadd.xlane.f32.xlu0 %v3612
  %v3614 = vpop.xlane.xlu0 %3613
  %v3615 = vlog2.pop %v3614
  %v3616 = vmul.f32 %v3615, 0.6931472
  %v3617 = vadd.f32 %v3616, %v3608
  %v3618 = vsub.f32 %v3603, %v3617
  %3619 = vst.msk [vmem:[%s9] sm:$0xff] %vm3605, %v3618
  // Predicated region
  $region38: #{net_forward.1} parent=0 // pred_check
    _
  $region39: #{net_forward.1} parent=0 // pred_check_branch
    %3621 = sbr.rel (0) target = $region41
  $region40: #{net_forward.1} parent=0 // pred_region
    _
  $region41: #{net_forward.1} parent=0 // pred_fallthru
    _
  // Predicated region
  $region42: #{net_forward.1} parent=0 // pred_check
    _
  $region43: #{net_forward.1} parent=0 // pred_check_branch
    %3623 = sbr.rel (0) target = $region45
  $region44: #{net_forward.1} parent=0 // pred_region
    _
  $region45: #{net_forward.1} parent=0 // pred_fallthru
    _

</llo_original>
